<compile_context>
chip_gen: v5e
topology: v5e:2x2
jax: 0.10.0
libtpu: 0.0.40
codegen_flags: <defaults>
</compile_context>

<pallas_src>
from functools import partial

import jax
import jax.numpy as jnp
from jax.experimental import pallas as pl
from jax.experimental.pallas import tpu as pltpu


def _group_lstm_kernel(ax_ref, ah_ref, x_ref, h_ref, c_ref, wx_ref, wh_ref,
                       h_out_ref, c_out_ref, *, num_schemas, hidden, compute_dtype):
    """One grid step = one tile of TM flattened (batch*unit) rows.

    ax_ref / ah_ref : VMEM (TM, S)        per-row schema weighting (x2h / h2h)
    x_ref           : VMEM (TM, din)      input rows
    h_ref, c_ref    : VMEM (TM, H)        previous hidden / cell rows
    wx_ref          : VMEM (S, din, 4H)   x2h schema pool, pre-transposed (W_s^T)
    wh_ref          : VMEM (S, H, 4H)     h2h schema pool, pre-transposed
    h_out_ref       : VMEM (TM, H)        new hidden state
    c_out_ref       : VMEM (TM, H)        new cell state
    """
    x = x_ref[...].astype(compute_dtype)
    h = h_ref[...].astype(compute_dtype)
    ax = ax_ref[...]
    ah = ah_ref[...]

    tm = x.shape[0]
    preact = jnp.zeros((tm, 4 * hidden), jnp.float32)
    # Linear-in-alpha mixing: sum_s alpha[u,s] * (row @ W_s^T).  Static unroll,
    # S big MXU matmuls + cheap VPU weighted sums.
    for s in range(num_schemas):
        zx = jnp.dot(x, wx_ref[s].astype(compute_dtype),
                     preferred_element_type=jnp.float32)
        zh = jnp.dot(h, wh_ref[s].astype(compute_dtype),
                     preferred_element_type=jnp.float32)
        preact = preact + ax[:, s:s + 1] * zx + ah[:, s:s + 1] * zh

    # Fused LSTM gate math (EUP/VPU, overlaps with the MXU work of other tiles).
    i_t = jax.nn.sigmoid(preact[:, :hidden])
    f_t = jax.nn.sigmoid(preact[:, hidden:2 * hidden])
    o_t = jax.nn.sigmoid(preact[:, 2 * hidden:3 * hidden])
    g_t = jnp.tanh(preact[:, 3 * hidden:])

    c_new = c_ref[...].astype(jnp.float32) * f_t + i_t * g_t
    h_out_ref[...] = (o_t * jnp.tanh(c_new)).astype(h_out_ref.dtype)
    c_out_ref[...] = c_new.astype(c_out_ref.dtype)


def _pick_row_tile(m):
    for cand in (512, 256, 128, 64, 32, 16, 8):
        if m % cand == 0:
            return cand
    return m  # full extent (always legal)


def group_lstm_cell(x, hid_state, wx_pool, wh_pool, alpha_x, alpha_h,
                    *, compute_dtype=jnp.float32, tm=None):
    """Fused GroupLSTMCell_sharedParameters forward.

    x        : (bs, num_units, input_size)
    hid_state: (h, c), each (bs, num_units, hidden_size)
    wx_pool  : (S, 4*hidden, input_size)   x2h schema pool (PyTorch (dout,din) per schema)
    wh_pool  : (S, 4*hidden, hidden)       h2h schema pool
    alpha_x  : (num_units, S)              x2h schema weighting
    alpha_h  : (num_units, S)              h2h schema weighting
    returns  : (h_t, c_t), each (bs, num_units, hidden_size)
    """
    h, c = hid_state
    bs, num_units, din = x.shape
    hidden = h.shape[-1]
    num_schemas = wx_pool.shape[0]
    assert wx_pool.shape == (num_schemas, 4 * hidden, din)
    assert wh_pool.shape == (num_schemas, 4 * hidden, hidden)

    m = bs * num_units
    # Free, contiguous flattens (no transposes of activations around the kernel).
    x_f = x.reshape(m, din)
    h_f = h.reshape(m, hidden)
    c_f = c.reshape(m, hidden)

    # Row r = b*num_units + u uses alpha[u]  ->  tile over the batch dimension.
    ax = jnp.tile(alpha_x, (bs, 1)).astype(jnp.float32)   # (M, S)
    ah = jnp.tile(alpha_h, (bs, 1)).astype(jnp.float32)   # (M, S)

    # One-time parameter prep: the bmm weight in the PyTorch code is W_s^T.
    wx_t = jnp.transpose(wx_pool, (0, 2, 1))              # (S, din, 4H)
    wh_t = jnp.transpose(wh_pool, (0, 2, 1))              # (S, H,   4H)

    if tm is None:
        tm = _pick_row_tile(m)
    grid = (m // tm,)

    kernel = partial(_group_lstm_kernel, num_schemas=num_schemas,
                     hidden=hidden, compute_dtype=compute_dtype)

    h_out, c_out = pl.pallas_call(
        kernel,
        out_shape=(jax.ShapeDtypeStruct((m, hidden), x.dtype),
                   jax.ShapeDtypeStruct((m, hidden), x.dtype)),
        grid_spec=pltpu.PrefetchScalarGridSpec(
            num_scalar_prefetch=0,
            grid=grid,
            in_specs=[
                pl.BlockSpec((tm, num_schemas), lambda i: (i, 0)),        # alpha_x rows
                pl.BlockSpec((tm, num_schemas), lambda i: (i, 0)),        # alpha_h rows
                pl.BlockSpec((tm, din), lambda i: (i, 0)),                # x rows
                pl.BlockSpec((tm, hidden), lambda i: (i, 0)),             # h rows
                pl.BlockSpec((tm, hidden), lambda i: (i, 0)),             # c rows
                pl.BlockSpec((num_schemas, din, 4 * hidden),              # x2h pool (resident)
                             lambda i: (0, 0, 0)),
                pl.BlockSpec((num_schemas, hidden, 4 * hidden),           # h2h pool (resident)
                             lambda i: (0, 0, 0)),
            ],
            out_specs=[
                pl.BlockSpec((tm, hidden), lambda i: (i, 0)),             # h_t rows
                pl.BlockSpec((tm, hidden), lambda i: (i, 0)),             # c_t rows
            ],
        ),
        compiler_params=pltpu.CompilerParams(
            # Disjoint output tiles per grid step -> shardable across v7x's 2 TCs.
            dimension_semantics=("parallel",),
        ),
    )(ax, ah, x_f, h_f, c_f, wx_t, wh_t)

    return h_out.reshape(bs, num_units, hidden), c_out.reshape(bs, num_units, hidden)


def make_params(key, din, dout, num_units, num_schemas, number_active):
    """Deterministic synthetic parameters mimicking SharedParameters: a pool of
    num_schemas (dout, din) matrices and a (num_units, num_schemas) weighting
    with only `number_active` nonzero, normalized entries per unit."""
    k_w, k_a = jax.random.split(key)
    schema_weights = 0.01 * jax.random.normal(k_w, (num_schemas, dout, din), jnp.float32)
    logits = jax.random.normal(k_a, (num_units, num_schemas), jnp.float32)
    thresh = jnp.sort(logits, axis=-1)[:, num_schemas - number_active][:, None]
    mask = logits >= thresh
    masked = jnp.where(mask, logits, -jnp.inf)
    schema_weighting = jax.nn.softmax(masked, axis=-1)
    # TODO(synk): SharedParameters source not provided; top-k + softmax weighting is a
    #             deterministic stand-in for reset_schema_weighting's exact scheme.
    return schema_weights, schema_weighting


def reference_cell(x, h, c, wx_pool, wh_pool, alpha_x, alpha_h):
    """Pure-JAX reference of the exact PyTorch GroupLSTMCell forward."""
    hidden = h.shape[-1]
    wx_u = jnp.einsum("us,sod->uod", alpha_x, wx_pool)     # (U, 4H, din)
    wh_u = jnp.einsum("us,soh->uoh", alpha_h, wh_pool)     # (U, 4H, H)
    preact = (jnp.einsum("bud,uod->buo", x, wx_u)
              + jnp.einsum("buh,uoh->buo", h, wh_u))       # (bs, U, 4H)
    gates = jax.nn.sigmoid(preact[:, :, :3 * hidden])
    g_t = jnp.tanh(preact[:, :, 3 * hidden:])
    i_t = gates[:, :, :hidden]
    f_t = gates[:, :, hidden:2 * hidden]
    o_t = gates[:, :, 2 * hidden:3 * hidden]
    c_t = c * f_t + i_t * g_t
    h_t = o_t * jnp.tanh(c_t)
    return h_t, c_t


if __name__ == "__main__":
    # Small, lane-dense shapes consistent with the module's forward.
    bs, num_lstms = 8, 16
    input_size, hidden_size = 128, 128
    num_schemas, number_active = 3, 2

    key = jax.random.PRNGKey(0)
    kx, kh, kc, kpx, kph = jax.random.split(key, 5)
    x = jax.random.normal(kx, (bs, num_lstms, input_size), jnp.float32)
    h0 = jax.random.normal(kh, (bs, num_lstms, hidden_size), jnp.float32)
    c0 = jax.random.normal(kc, (bs, num_lstms, hidden_size), jnp.float32)

    wx_pool, alpha_x = make_params(kpx, input_size, 4 * hidden_size,
                                   num_lstms, num_schemas, number_active)
    wh_pool, alpha_h = make_params(kph, hidden_size, 4 * hidden_size,
                                   num_lstms, num_schemas, number_active)

    h_t, c_t = group_lstm_cell(x, (h0, c0), wx_pool, wh_pool, alpha_x, alpha_h)
    h_t = jax.block_until_ready(h_t)
    c_t = jax.block_until_ready(c_t)

    h_ref, c_ref = reference_cell(x, h0, c0, wx_pool, wh_pool, alpha_x, alpha_h)

    assert h_t.shape == (bs, num_lstms, hidden_size), h_t.shape
    assert c_t.shape == (bs, num_lstms, hidden_size), c_t.shape
    assert jnp.allclose(h_t, h_ref, atol=1e-4, rtol=1e-4), float(jnp.max(jnp.abs(h_t - h_ref)))
    assert jnp.allclose(c_t, c_ref, atol=1e-4, rtol=1e-4), float(jnp.max(jnp.abs(c_t - c_ref)))
    print("KERNEL_OK")
</pallas_src>

<mosaic_0001>
module attributes {stable_mosaic.version = 11 : i64} {
  func.func @_group_lstm_kernel(%arg0: i32, %arg1: memref<128x3xf32, #tpu.memory_space<vmem>>, %arg2: memref<128x3xf32, #tpu.memory_space<vmem>>, %arg3: memref<128x128xf32, #tpu.memory_space<vmem>>, %arg4: memref<128x128xf32, #tpu.memory_space<vmem>>, %arg5: memref<128x128xf32, #tpu.memory_space<vmem>>, %arg6: memref<3x128x512xf32, #tpu.memory_space<vmem>>, %arg7: memref<3x128x512xf32, #tpu.memory_space<vmem>>, %arg8: memref<128x128xf32, #tpu.memory_space<vmem>>, %arg9: memref<128x128xf32, #tpu.memory_space<vmem>>) attributes {dimension_semantics = [#tpu.dimension_semantics<parallel>], iteration_bounds = array<i64: 1>, scalar_prefetch = 0 : i64, scratch_operands = 0 : i64, tpu.core_type = #tpu.core_type<tc>, window_params = [{transform_indices = @transform_0, window_bounds = array<i64: 128, 3>}, {transform_indices = @transform_1, window_bounds = array<i64: 128, 3>}, {transform_indices = @transform_2, window_bounds = array<i64: 128, 128>}, {transform_indices = @transform_3, window_bounds = array<i64: 128, 128>}, {transform_indices = @transform_4, window_bounds = array<i64: 128, 128>}, {pipeline_mode = #tpu.pipeline_mode<synchronous>, transform_indices = @transform_5, window_bounds = array<i64: 3, 128, 512>}, {pipeline_mode = #tpu.pipeline_mode<synchronous>, transform_indices = @transform_6, window_bounds = array<i64: 3, 128, 512>}, {transform_indices = @transform_7, window_bounds = array<i64: 128, 128>}, {transform_indices = @transform_8, window_bounds = array<i64: 128, 128>}]} {
    %c0 = arith.constant 0 : index
    %c0_0 = arith.constant 0 : index
    %0 = vector.load %arg3[%c0, %c0_0] : memref<128x128xf32, #tpu.memory_space<vmem>>, vector<128x128xf32>
    %c0_1 = arith.constant 0 : index
    %c0_2 = arith.constant 0 : index
    %1 = vector.load %arg4[%c0_1, %c0_2] : memref<128x128xf32, #tpu.memory_space<vmem>>, vector<128x128xf32>
    %c0_3 = arith.constant 0 : index
    %c0_4 = arith.constant 0 : index
    %2 = vector.load %arg1[%c0_3, %c0_4] : memref<128x3xf32, #tpu.memory_space<vmem>>, vector<128x3xf32>
    %c0_5 = arith.constant 0 : index
    %c0_6 = arith.constant 0 : index
    %3 = vector.load %arg2[%c0_5, %c0_6] : memref<128x3xf32, #tpu.memory_space<vmem>>, vector<128x3xf32>
    %cst = arith.constant 0.000000e+00 : f32
    %4 = vector.broadcast %cst : f32 to vector<128x512xf32>
    %c0_7 = arith.constant 0 : index
    %c0_8 = arith.constant 0 : index
    %c0_9 = arith.constant 0 : index
    %5 = vector.load %arg6[%c0_7, %c0_8, %c0_9] : memref<3x128x512xf32, #tpu.memory_space<vmem>>, vector<1x128x512xf32>
    %6 = vector.shape_cast %5 : vector<1x128x512xf32> to vector<128x512xf32>
    %cst_10 = arith.constant dense<0.000000e+00> : vector<128x512xf32>
    %7 = tpu.matmul %0, %6, %cst_10 {dimension_numbers = #tpu.dot_dimension_numbers<[1], [0], [0], [1], [0, 0, 1, 1], [], []>} : vector<128x128xf32>, vector<128x512xf32>, vector<128x512xf32> -> vector<128x512xf32>
    %c0_11 = arith.constant 0 : index
    %c0_12 = arith.constant 0 : index
    %c0_13 = arith.constant 0 : index
    %8 = vector.load %arg7[%c0_11, %c0_12, %c0_13] : memref<3x128x512xf32, #tpu.memory_space<vmem>>, vector<1x128x512xf32>
    %9 = vector.shape_cast %8 : vector<1x128x512xf32> to vector<128x512xf32>
    %cst_14 = arith.constant dense<0.000000e+00> : vector<128x512xf32>
    %10 = tpu.matmul %1, %9, %cst_14 {dimension_numbers = #tpu.dot_dimension_numbers<[1], [0], [0], [1], [0, 0, 1, 1], [], []>} : vector<128x128xf32>, vector<128x512xf32>, vector<128x512xf32> -> vector<128x512xf32>
    %11 = vector.extract_strided_slice %2 {offsets = [0, 0], sizes = [128, 1], strides = [1, 1]} : vector<128x3xf32> to vector<128x1xf32>
    %12 = vector.broadcast %11 : vector<128x1xf32> to vector<128x512xf32>
    %13 = arith.mulf %12, %7 : vector<128x512xf32>
    %14 = arith.addf %4, %13 : vector<128x512xf32>
    %15 = vector.extract_strided_slice %3 {offsets = [0, 0], sizes = [128, 1], strides = [1, 1]} : vector<128x3xf32> to vector<128x1xf32>
    %16 = vector.broadcast %15 : vector<128x1xf32> to vector<128x512xf32>
    %17 = arith.mulf %16, %10 : vector<128x512xf32>
    %18 = arith.addf %14, %17 : vector<128x512xf32>
    %c1 = arith.constant 1 : index
    %c0_15 = arith.constant 0 : index
    %c0_16 = arith.constant 0 : index
    %19 = vector.load %arg6[%c1, %c0_15, %c0_16] : memref<3x128x512xf32, #tpu.memory_space<vmem>>, vector<1x128x512xf32>
    %20 = vector.shape_cast %19 : vector<1x128x512xf32> to vector<128x512xf32>
    %cst_17 = arith.constant dense<0.000000e+00> : vector<128x512xf32>
    %21 = tpu.matmul %0, %20, %cst_17 {dimension_numbers = #tpu.dot_dimension_numbers<[1], [0], [0], [1], [0, 0, 1, 1], [], []>} : vector<128x128xf32>, vector<128x512xf32>, vector<128x512xf32> -> vector<128x512xf32>
    %c1_18 = arith.constant 1 : index
    %c0_19 = arith.constant 0 : index
    %c0_20 = arith.constant 0 : index
    %22 = vector.load %arg7[%c1_18, %c0_19, %c0_20] : memref<3x128x512xf32, #tpu.memory_space<vmem>>, vector<1x128x512xf32>
    %23 = vector.shape_cast %22 : vector<1x128x512xf32> to vector<128x512xf32>
    %cst_21 = arith.constant dense<0.000000e+00> : vector<128x512xf32>
    %24 = tpu.matmul %1, %23, %cst_21 {dimension_numbers = #tpu.dot_dimension_numbers<[1], [0], [0], [1], [0, 0, 1, 1], [], []>} : vector<128x128xf32>, vector<128x512xf32>, vector<128x512xf32> -> vector<128x512xf32>
    %25 = vector.extract_strided_slice %2 {offsets = [0, 1], sizes = [128, 1], strides = [1, 1]} : vector<128x3xf32> to vector<128x1xf32>
    %26 = vector.broadcast %25 : vector<128x1xf32> to vector<128x512xf32>
    %27 = arith.mulf %26, %21 : vector<128x512xf32>
    %28 = arith.addf %18, %27 : vector<128x512xf32>
    %29 = vector.extract_strided_slice %3 {offsets = [0, 1], sizes = [128, 1], strides = [1, 1]} : vector<128x3xf32> to vector<128x1xf32>
    %30 = vector.broadcast %29 : vector<128x1xf32> to vector<128x512xf32>
    %31 = arith.mulf %30, %24 : vector<128x512xf32>
    %32 = arith.addf %28, %31 : vector<128x512xf32>
    %c2 = arith.constant 2 : index
    %c0_22 = arith.constant 0 : index
    %c0_23 = arith.constant 0 : index
    %33 = vector.load %arg6[%c2, %c0_22, %c0_23] : memref<3x128x512xf32, #tpu.memory_space<vmem>>, vector<1x128x512xf32>
    %34 = vector.shape_cast %33 : vector<1x128x512xf32> to vector<128x512xf32>
    %cst_24 = arith.constant dense<0.000000e+00> : vector<128x512xf32>
    %35 = tpu.matmul %0, %34, %cst_24 {dimension_numbers = #tpu.dot_dimension_numbers<[1], [0], [0], [1], [0, 0, 1, 1], [], []>} : vector<128x128xf32>, vector<128x512xf32>, vector<128x512xf32> -> vector<128x512xf32>
    %c2_25 = arith.constant 2 : index
    %c0_26 = arith.constant 0 : index
    %c0_27 = arith.constant 0 : index
    %36 = vector.load %arg7[%c2_25, %c0_26, %c0_27] : memref<3x128x512xf32, #tpu.memory_space<vmem>>, vector<1x128x512xf32>
    %37 = vector.shape_cast %36 : vector<1x128x512xf32> to vector<128x512xf32>
    %cst_28 = arith.constant dense<0.000000e+00> : vector<128x512xf32>
    %38 = tpu.matmul %1, %37, %cst_28 {dimension_numbers = #tpu.dot_dimension_numbers<[1], [0], [0], [1], [0, 0, 1, 1], [], []>} : vector<128x128xf32>, vector<128x512xf32>, vector<128x512xf32> -> vector<128x512xf32>
    %39 = vector.extract_strided_slice %2 {offsets = [0, 2], sizes = [128, 1], strides = [1, 1]} : vector<128x3xf32> to vector<128x1xf32>
    %40 = vector.broadcast %39 : vector<128x1xf32> to vector<128x512xf32>
    %41 = arith.mulf %40, %35 : vector<128x512xf32>
    %42 = arith.addf %32, %41 : vector<128x512xf32>
    %43 = vector.extract_strided_slice %3 {offsets = [0, 2], sizes = [128, 1], strides = [1, 1]} : vector<128x3xf32> to vector<128x1xf32>
    %44 = vector.broadcast %43 : vector<128x1xf32> to vector<128x512xf32>
    %45 = arith.mulf %44, %38 : vector<128x512xf32>
    %46 = arith.addf %42, %45 : vector<128x512xf32>
    %47 = vector.extract_strided_slice %46 {offsets = [0, 0], sizes = [128, 128], strides = [1, 1]} : vector<128x512xf32> to vector<128x128xf32>
    %48 = arith.negf %47 : vector<128x128xf32>
    %49 = math.exp %48 : vector<128x128xf32>
    %cst_29 = arith.constant 1.000000e+00 : f32
    %50 = vector.broadcast %cst_29 : f32 to vector<128x128xf32>
    %51 = arith.addf %50, %49 : vector<128x128xf32>
    %52 = arith.divf %50, %51 : vector<128x128xf32>
    %53 = vector.extract_strided_slice %46 {offsets = [0, 128], sizes = [128, 128], strides = [1, 1]} : vector<128x512xf32> to vector<128x128xf32>
    %54 = arith.negf %53 : vector<128x128xf32>
    %55 = math.exp %54 : vector<128x128xf32>
    %cst_30 = arith.constant 1.000000e+00 : f32
    %56 = vector.broadcast %cst_30 : f32 to vector<128x128xf32>
    %57 = arith.addf %56, %55 : vector<128x128xf32>
    %58 = arith.divf %56, %57 : vector<128x128xf32>
    %59 = vector.extract_strided_slice %46 {offsets = [0, 256], sizes = [128, 128], strides = [1, 1]} : vector<128x512xf32> to vector<128x128xf32>
    %60 = arith.negf %59 : vector<128x128xf32>
    %61 = math.exp %60 : vector<128x128xf32>
    %cst_31 = arith.constant 1.000000e+00 : f32
    %62 = vector.broadcast %cst_31 : f32 to vector<128x128xf32>
    %63 = arith.addf %62, %61 : vector<128x128xf32>
    %64 = arith.divf %62, %63 : vector<128x128xf32>
    %65 = vector.extract_strided_slice %46 {offsets = [0, 384], sizes = [128, 128], strides = [1, 1]} : vector<128x512xf32> to vector<128x128xf32>
    %66 = math.tanh %65 : vector<128x128xf32>
    %c0_32 = arith.constant 0 : index
    %c0_33 = arith.constant 0 : index
    %67 = vector.load %arg5[%c0_32, %c0_33] : memref<128x128xf32, #tpu.memory_space<vmem>>, vector<128x128xf32>
    %68 = arith.mulf %67, %58 : vector<128x128xf32>
    %69 = arith.mulf %52, %66 : vector<128x128xf32>
    %70 = arith.addf %68, %69 : vector<128x128xf32>
    %71 = math.tanh %70 : vector<128x128xf32>
    %72 = arith.mulf %64, %71 : vector<128x128xf32>
    %c0_34 = arith.constant 0 : index
    %c0_35 = arith.constant 0 : index
    %73 = vector.load %arg8[%c0_34, %c0_35] : memref<128x128xf32, #tpu.memory_space<vmem>>, vector<128x128xf32>
    tpu.vector_store %arg8[%c0_34, %c0_35], %72 {strides = array<i32>} : memref<128x128xf32, #tpu.memory_space<vmem>>, vector<128x128xf32>,
    %c0_36 = arith.constant 0 : index
    %c0_37 = arith.constant 0 : index
    %74 = vector.load %arg9[%c0_36, %c0_37] : memref<128x128xf32, #tpu.memory_space<vmem>>, vector<128x128xf32>
    tpu.vector_store %arg9[%c0_36, %c0_37], %70 {strides = array<i32>} : memref<128x128xf32, #tpu.memory_space<vmem>>, vector<128x128xf32>,
    return
  }
  func.func @transform_0(%arg0: i32) -> (i32, i32) {
    %c0_i32 = arith.constant 0 : i32
    %c0_i32_0 = arith.constant 0 : i32
    return %arg0, %c0_i32 : i32, i32
  }
  func.func @transform_1(%arg0: i32) -> (i32, i32) {
    %c0_i32 = arith.constant 0 : i32
    %c0_i32_0 = arith.constant 0 : i32
    return %arg0, %c0_i32 : i32, i32
  }
  func.func @transform_2(%arg0: i32) -> (i32, i32) {
    %c0_i32 = arith.constant 0 : i32
    %c0_i32_0 = arith.constant 0 : i32
    return %arg0, %c0_i32 : i32, i32
  }
  func.func @transform_3(%arg0: i32) -> (i32, i32) {
    %c0_i32 = arith.constant 0 : i32
    %c0_i32_0 = arith.constant 0 : i32
    return %arg0, %c0_i32 : i32, i32
  }
  func.func @transform_4(%arg0: i32) -> (i32, i32) {
    %c0_i32 = arith.constant 0 : i32
    %c0_i32_0 = arith.constant 0 : i32
    return %arg0, %c0_i32 : i32, i32
  }
  func.func @transform_5(%arg0: i32) -> (i32, i32, i32) {
    %c0_i32 = arith.constant 0 : i32
    %c0_i32_0 = arith.constant 0 : i32
    %c0_i32_1 = arith.constant 0 : i32
    %c0_i32_2 = arith.constant 0 : i32
    return %c0_i32, %c0_i32_0, %c0_i32_1 : i32, i32, i32
  }
  func.func @transform_6(%arg0: i32) -> (i32, i32, i32) {
    %c0_i32 = arith.constant 0 : i32
    %c0_i32_0 = arith.constant 0 : i32
    %c0_i32_1 = arith.constant 0 : i32
    %c0_i32_2 = arith.constant 0 : i32
    return %c0_i32, %c0_i32_0, %c0_i32_1 : i32, i32, i32
  }
  func.func @transform_7(%arg0: i32) -> (i32, i32) {
    %c0_i32 = arith.constant 0 : i32
    %c0_i32_0 = arith.constant 0 : i32
    return %arg0, %c0_i32 : i32, i32
  }
  func.func @transform_8(%arg0: i32) -> (i32, i32) {
    %c0_i32 = arith.constant 0 : i32
    %c0_i32_0 = arith.constant 0 : i32
    return %arg0, %c0_i32 : i32, i32
  }
}

</mosaic_0001>

<llo_original>
// kernel: tpu_custom_call.1
$region0: #{tpu_custom_call.1}
  #allocation0 [shape = 'u32[]', space=smem, size = 0x4, offset = 0x4, fixed_abs, tag = 'smem constant byte address 0x4 - core index']
  #allocation1 [shape = 'u32[72,128]{1,0:T(1,128)}', space=vmem, size = 0x9000, scoped, tag = 'internal scratch']
  %s0 = inlined_call_operand.vmem [shape: f32[128,3], index: 0, kind: input, shape index: {}]
  %s1 = inlined_call_operand.vmem [shape: f32[128,3], index: 1, kind: input, shape index: {}]
  %s2 = inlined_call_operand.vmem [shape: f32[128,128], index: 2, kind: input, shape index: {}]
  %s3 = inlined_call_operand.vmem [shape: f32[128,128], index: 3, kind: input, shape index: {}]
  %s4 = inlined_call_operand.hbm [shape: f32[128,128], index: 4, kind: input, shape index: {}]
  %s5 = inlined_call_operand.hbm [shape: f32[3,128,512], index: 5, kind: input, shape index: {}]
  %s6 = inlined_call_operand.hbm [shape: f32[3,128,512], index: 6, kind: input, shape index: {}]
  %s7 = inlined_call_operand.hbm [shape: f32[128,128], index: 7, kind: output, shape index: {0}]
  %s8 = inlined_call_operand.hbm [shape: f32[128,128], index: 8, kind: output, shape index: {1}]
  %9 = xla_tuple %s7, %s8
  %s10 = sld [smem:[#allocation0]]
  $region58: #{tpu_custom_call.1} parent=0
    _
  %s12 = ssub.s32 1, %s10
  %s13 = scalar_select 0, %s12, %s10
  $region1: #{tpu_custom_call.1} parent=0
    #allocation2 [shape = 'u8[65536]{0}', space=vmem, size = 0x10000, scoped, tag = 'input window, operand 4, single buffered']
    #allocation3 [shape = 's32[1]{0}', space=sflag, size = 0x4, scoped, tag = 'scoped memory for tpu_custom_call.1']
    #allocation4 [shape = 's32[1]{0}', space=sflag, size = 0x4, scoped, tag = 'scoped memory for tpu_custom_call.1']
    #allocation5 [shape = 'u8[786432]{0}', space=vmem, size = 0xc0000, scoped, tag = 'input window, operand 5, single buffered']
    #allocation6 [shape = 's32[1]{0}', space=sflag, size = 0x4, scoped, tag = 'scoped memory for tpu_custom_call.1']
    #allocation7 [shape = 'u8[786432]{0}', space=vmem, size = 0xc0000, scoped, tag = 'input window, operand 6, single buffered']
    #allocation8 [shape = 'u8[65536]{0}', space=vmem, size = 0x10000, scoped, tag = 'output window, operand 0, single buffered']
    #allocation9 [shape = 'u8[65536]{0}', space=vmem, size = 0x10000, scoped, tag = 'output window, operand 1, single buffered']
    #allocation10 [shape = 's32[1]{0}', space=sflag, size = 0x4, scoped, tag = 'scoped memory for tpu_custom_call.1']
    %14 = vsyncpa [#allocation3], 0
    %15 = vsyncpa [#allocation6], 0
    %16 = vsyncpa [#allocation4], 0
    %17 = vsyncpa [#allocation10], 0
    // Predicated region
    $region2: #{tpu_custom_call.1} parent=1 // pred_check
      _
    $region3: #{tpu_custom_call.1} parent=1 // pred_check_branch
      %19 = sbr.rel (0) target = $region5
    $region4: #{tpu_custom_call.1} parent=1 // pred_region
      _
    $region5: #{tpu_custom_call.1} parent=1 // pred_fallthru
      _
    // Predicated region
    $region6: #{tpu_custom_call.1} parent=1 // pred_check
      _
    $region7: #{tpu_custom_call.1} parent=1 // pred_check_branch
      %21 = sbr.rel (0) target = $region9
    $region8: #{tpu_custom_call.1} parent=1 // pred_region
      _
    $region9: #{tpu_custom_call.1} parent=1 // pred_fallthru
      _
    // Predicated region
    $region10: #{tpu_custom_call.1} parent=1 // pred_check
      _
    $region11: #{tpu_custom_call.1} parent=1 // pred_check_branch
      %23 = sbr.rel (0) target = $region13
    $region12: #{tpu_custom_call.1} parent=1 // pred_region
      _
    $region13: #{tpu_custom_call.1} parent=1 // pred_fallthru
      _
    // Predicated region
    $region14: #{tpu_custom_call.1} parent=1 // pred_check
      _
    $region15: #{tpu_custom_call.1} parent=1 // pred_check_branch
      %25 = sbr.rel (0) target = $region17
    $region16: #{tpu_custom_call.1} parent=1 // pred_region
      _
    $region17: #{tpu_custom_call.1} parent=1 // pred_fallthru
      _
    // Predicated region
    $region18: #{tpu_custom_call.1} parent=1 // pred_check
      _
    $region19: #{tpu_custom_call.1} parent=1 // pred_check_branch
      %27 = sbr.rel (0) target = $region21
    $region20: #{tpu_custom_call.1} parent=1 // pred_region
      %29 = vsyncadd [#allocation3], 0
      %s30 = sshll.u32 %s4, 4
      %s31 = int_to_ptr.hbm [resolvable:$true] %s30
      %s32 = sshll.u32 [#allocation2], 4
      %s33 = int_to_ptr.vmem [resolvable:$true] %s32
      %38 = dma.hbm_to_vmem [thread:$0]  %s31, 2048, %s33, [#allocation3], 128, 128, 8
    $region21: #{tpu_custom_call.1} parent=1 // pred_fallthru
      _
    // Predicated region
    $region22: #{tpu_custom_call.1} parent=1 // pred_check
      _
    $region23: #{tpu_custom_call.1} parent=1 // pred_check_branch
      %40 = sbr.rel (0) target = $region25
    $region24: #{tpu_custom_call.1} parent=1 // pred_region
      %42 = vsyncadd [#allocation6], 0
      %s43 = sshll.u32 %s5, 4
      %s44 = int_to_ptr.hbm [resolvable:$true] %s43
      %s45 = sshll.u32 [#allocation5], 4
      %s46 = int_to_ptr.vmem [resolvable:$true] %s45
      %51 = dma.hbm_to_vmem [thread:$0]  %s44, 24576, %s46, [#allocation6], 512, 512, 32
    $region25: #{tpu_custom_call.1} parent=1 // pred_fallthru
      _
    // Predicated region
    $region26: #{tpu_custom_call.1} parent=1 // pred_check
      _
    $region27: #{tpu_custom_call.1} parent=1 // pred_check_branch
      %53 = sbr.rel (0) target = $region29
    $region28: #{tpu_custom_call.1} parent=1 // pred_region
      %55 = vsyncadd [#allocation6], 0
      %s56 = sshll.u32 %s6, 4
      %s57 = int_to_ptr.hbm [resolvable:$true] %s56
      %s58 = sshll.u32 [#allocation7], 4
      %s59 = int_to_ptr.vmem [resolvable:$true] %s58
      %64 = dma.hbm_to_vmem [thread:$0]  %s57, 24576, %s59, [#allocation6], 512, 512, 32
    $region29: #{tpu_custom_call.1} parent=1 // pred_fallthru
      _
    // Predicated region
    $region30: #{tpu_custom_call.1} parent=1 // pred_check
      _
    $region31: #{tpu_custom_call.1} parent=1 // pred_check_branch
      %66 = sbr.rel (0) target = $region33
    $region32: #{tpu_custom_call.1} parent=1 // pred_region
      %68 = dma.done [#allocation3], 2048
    $region33: #{tpu_custom_call.1} parent=1 // pred_fallthru
      _
    // Predicated region
    $region34: #{tpu_custom_call.1} parent=1 // pred_check
      _
    $region35: #{tpu_custom_call.1} parent=1 // pred_check_branch
      %70 = sbr.rel (0) target = $region37
    $region36: #{tpu_custom_call.1} parent=1 // pred_region
      %72 = dma.done [#allocation6], 24576
    $region37: #{tpu_custom_call.1} parent=1 // pred_fallthru
      _
    // Predicated region
    $region38: #{tpu_custom_call.1} parent=1 // pred_check
      _
    $region39: #{tpu_custom_call.1} parent=1 // pred_check_branch
      %74 = sbr.rel (0) target = $region41
    $region40: #{tpu_custom_call.1} parent=1 // pred_region
      %76 = dma.done [#allocation6], 24576
    $region41: #{tpu_custom_call.1} parent=1 // pred_fallthru
      _
    %v77 = vld [vmem:[%s2] sm:$0xff]
    %v78 = vld [vmem:[%s2 + $0x8] sm:$0xff]
    %v79 = vld [vmem:[%s2 + $0x10] sm:$0xff]
    %v80 = vld [vmem:[%s2 + $0x18] sm:$0xff]
    %v81 = vld [vmem:[%s2 + $0x20] sm:$0xff]
    %v82 = vld [vmem:[%s2 + $0x28] sm:$0xff]
    %v83 = vld [vmem:[%s2 + $0x30] sm:$0xff]
    %v84 = vld [vmem:[%s2 + $0x38] sm:$0xff]
    %v85 = vld [vmem:[%s2 + $0x40] sm:$0xff]
    %v86 = vld [vmem:[%s2 + $0x48] sm:$0xff]
    %v87 = vld [vmem:[%s2 + $0x50] sm:$0xff]
    %v88 = vld [vmem:[%s2 + $0x58] sm:$0xff]
    %v89 = vld [vmem:[%s2 + $0x60] sm:$0xff]
    %v90 = vld [vmem:[%s2 + $0x68] sm:$0xff]
    %v91 = vld [vmem:[%s2 + $0x70] sm:$0xff]
    %v92 = vld [vmem:[%s2 + $0x78] sm:$0xff]
    %v93 = vld [vmem:[%s3] sm:$0xff]
    %v94 = vld [vmem:[%s3 + $0x8] sm:$0xff]
    %v95 = vld [vmem:[%s3 + $0x10] sm:$0xff]
    %v96 = vld [vmem:[%s3 + $0x18] sm:$0xff]
    %v97 = vld [vmem:[%s3 + $0x20] sm:$0xff]
    %v98 = vld [vmem:[%s3 + $0x28] sm:$0xff]
    %v99 = vld [vmem:[%s3 + $0x30] sm:$0xff]
    %v100 = vld [vmem:[%s3 + $0x38] sm:$0xff]
    %v101 = vld [vmem:[%s3 + $0x40] sm:$0xff]
    %v102 = vld [vmem:[%s3 + $0x48] sm:$0xff]
    %v103 = vld [vmem:[%s3 + $0x50] sm:$0xff]
    %v104 = vld [vmem:[%s3 + $0x58] sm:$0xff]
    %v105 = vld [vmem:[%s3 + $0x60] sm:$0xff]
    %v106 = vld [vmem:[%s3 + $0x68] sm:$0xff]
    %v107 = vld [vmem:[%s3 + $0x70] sm:$0xff]
    %v108 = vld [vmem:[%s3 + $0x78] sm:$0xff]
    %v109 = vld [vmem:[%s0] sm:$0xff]
    %v110 = vld [vmem:[%s0 + $0x8] sm:$0xff]
    %v111 = vld [vmem:[%s0 + $0x10] sm:$0xff]
    %v112 = vld [vmem:[%s0 + $0x18] sm:$0xff]
    %v113 = vld [vmem:[%s0 + $0x20] sm:$0xff]
    %v114 = vld [vmem:[%s0 + $0x28] sm:$0xff]
    %v115 = vld [vmem:[%s0 + $0x30] sm:$0xff]
    %v116 = vld [vmem:[%s0 + $0x38] sm:$0xff]
    %v117 = vld [vmem:[%s0 + $0x40] sm:$0xff]
    %v118 = vld [vmem:[%s0 + $0x48] sm:$0xff]
    %v119 = vld [vmem:[%s0 + $0x50] sm:$0xff]
    %v120 = vld [vmem:[%s0 + $0x58] sm:$0xff]
    %v121 = vld [vmem:[%s0 + $0x60] sm:$0xff]
    %v122 = vld [vmem:[%s0 + $0x68] sm:$0xff]
    %v123 = vld [vmem:[%s0 + $0x70] sm:$0xff]
    %v124 = vld [vmem:[%s0 + $0x78] sm:$0xff]
    %v125 = vld [vmem:[%s1] sm:$0xff]
    %v126 = vld [vmem:[%s1 + $0x8] sm:$0xff]
    %v127 = vld [vmem:[%s1 + $0x10] sm:$0xff]
    %v128 = vld [vmem:[%s1 + $0x18] sm:$0xff]
    %v129 = vld [vmem:[%s1 + $0x20] sm:$0xff]
    %v130 = vld [vmem:[%s1 + $0x28] sm:$0xff]
    %v131 = vld [vmem:[%s1 + $0x30] sm:$0xff]
    %v132 = vld [vmem:[%s1 + $0x38] sm:$0xff]
    %v133 = vld [vmem:[%s1 + $0x40] sm:$0xff]
    %v134 = vld [vmem:[%s1 + $0x48] sm:$0xff]
    %v135 = vld [vmem:[%s1 + $0x50] sm:$0xff]
    %v136 = vld [vmem:[%s1 + $0x58] sm:$0xff]
    %v137 = vld [vmem:[%s1 + $0x60] sm:$0xff]
    %v138 = vld [vmem:[%s1 + $0x68] sm:$0xff]
    %v139 = vld [vmem:[%s1 + $0x70] sm:$0xff]
    %v140 = vld [vmem:[%s1 + $0x78] sm:$0xff]
    %v141 = vld [vmem:[#allocation5] sm:$0xff]
    %v142 = vld [vmem:[#allocation5 + $0x8] sm:$0xff]
    %v143 = vld [vmem:[#allocation5 + $0x10] sm:$0xff]
    %v144 = vld [vmem:[#allocation5 + $0x18] sm:$0xff]
    %v145 = vld [vmem:[#allocation5 + $0x20] sm:$0xff]
    %v146 = vld [vmem:[#allocation5 + $0x28] sm:$0xff]
    %v147 = vld [vmem:[#allocation5 + $0x30] sm:$0xff]
    %v148 = vld [vmem:[#allocation5 + $0x38] sm:$0xff]
    %v149 = vld [vmem:[#allocation5 + $0x40] sm:$0xff]
    %v150 = vld [vmem:[#allocation5 + $0x48] sm:$0xff]
    %v151 = vld [vmem:[#allocation5 + $0x50] sm:$0xff]
    %v152 = vld [vmem:[#allocation5 + $0x58] sm:$0xff]
    %v153 = vld [vmem:[#allocation5 + $0x60] sm:$0xff]
    %v154 = vld [vmem:[#allocation5 + $0x68] sm:$0xff]
    %v155 = vld [vmem:[#allocation5 + $0x70] sm:$0xff]
    %v156 = vld [vmem:[#allocation5 + $0x78] sm:$0xff]
    %v157 = vld [vmem:[#allocation5 + $0x80] sm:$0xff]
    %v158 = vld [vmem:[#allocation5 + $0x88] sm:$0xff]
    %v159 = vld [vmem:[#allocation5 + $0x90] sm:$0xff]
    %v160 = vld [vmem:[#allocation5 + $0x98] sm:$0xff]
    %v161 = vld [vmem:[#allocation5 + $0xa0] sm:$0xff]
    %v162 = vld [vmem:[#allocation5 + $0xa8] sm:$0xff]
    %v163 = vld [vmem:[#allocation5 + $0xb0] sm:$0xff]
    %v164 = vld [vmem:[#allocation5 + $0xb8] sm:$0xff]
    %v165 = vld [vmem:[#allocation5 + $0xc0] sm:$0xff]
    %v166 = vld [vmem:[#allocation5 + $0xc8] sm:$0xff]
    %v167 = vld [vmem:[#allocation5 + $0xd0] sm:$0xff]
    %v168 = vld [vmem:[#allocation5 + $0xd8] sm:$0xff]
    %v169 = vld [vmem:[#allocation5 + $0xe0] sm:$0xff]
    %v170 = vld [vmem:[#allocation5 + $0xe8] sm:$0xff]
    %v171 = vld [vmem:[#allocation5 + $0xf0] sm:$0xff]
    %v172 = vld [vmem:[#allocation5 + $0xf8] sm:$0xff]
    %v173 = vld [vmem:[#allocation5 + $0x100] sm:$0xff]
    %v174 = vld [vmem:[#allocation5 + $0x108] sm:$0xff]
    %v175 = vld [vmem:[#allocation5 + $0x110] sm:$0xff]
    %v176 = vld [vmem:[#allocation5 + $0x118] sm:$0xff]
    %v177 = vld [vmem:[#allocation5 + $0x120] sm:$0xff]
    %v178 = vld [vmem:[#allocation5 + $0x128] sm:$0xff]
    %v179 = vld [vmem:[#allocation5 + $0x130] sm:$0xff]
    %v180 = vld [vmem:[#allocation5 + $0x138] sm:$0xff]
    %v181 = vld [vmem:[#allocation5 + $0x140] sm:$0xff]
    %v182 = vld [vmem:[#allocation5 + $0x148] sm:$0xff]
    %v183 = vld [vmem:[#allocation5 + $0x150] sm:$0xff]
    %v184 = vld [vmem:[#allocation5 + $0x158] sm:$0xff]
    %v185 = vld [vmem:[#allocation5 + $0x160] sm:$0xff]
    %v186 = vld [vmem:[#allocation5 + $0x168] sm:$0xff]
    %v187 = vld [vmem:[#allocation5 + $0x170] sm:$0xff]
    %v188 = vld [vmem:[#allocation5 + $0x178] sm:$0xff]
    %v189 = vld [vmem:[#allocation5 + $0x180] sm:$0xff]
    %v190 = vld [vmem:[#allocation5 + $0x188] sm:$0xff]
    %v191 = vld [vmem:[#allocation5 + $0x190] sm:$0xff]
    %v192 = vld [vmem:[#allocation5 + $0x198] sm:$0xff]
    %v193 = vld [vmem:[#allocation5 + $0x1a0] sm:$0xff]
    %v194 = vld [vmem:[#allocation5 + $0x1a8] sm:$0xff]
    %v195 = vld [vmem:[#allocation5 + $0x1b0] sm:$0xff]
    %v196 = vld [vmem:[#allocation5 + $0x1b8] sm:$0xff]
    %v197 = vld [vmem:[#allocation5 + $0x1c0] sm:$0xff]
    %v198 = vld [vmem:[#allocation5 + $0x1c8] sm:$0xff]
    %v199 = vld [vmem:[#allocation5 + $0x1d0] sm:$0xff]
    %v200 = vld [vmem:[#allocation5 + $0x1d8] sm:$0xff]
    %v201 = vld [vmem:[#allocation5 + $0x1e0] sm:$0xff]
    %v202 = vld [vmem:[#allocation5 + $0x1e8] sm:$0xff]
    %v203 = vld [vmem:[#allocation5 + $0x1f0] sm:$0xff]
    %v204 = vld [vmem:[#allocation5 + $0x1f8] sm:$0xff]
    %205 = vmatpush.msra.mxu0 %v201
    %206 = vmatpush.msra.mxu0 %v197
    %207 = vmatpush.msra.mxu0 %v193
    %208 = vmatpush.msra.mxu0 %v189
    %209 = vmatpush.msra.mxu0 %v185
    %210 = vmatpush.msra.mxu0 %v181
    %211 = vmatpush.msra.mxu0 %v177
    %212 = vmatpush.msra.mxu0 %v173
    %213 = vmatpush.msra.mxu0 %v169
    %214 = vmatpush.msra.mxu0 %v165
    %215 = vmatpush.msra.mxu0 %v161
    %216 = vmatpush.msra.mxu0 %v157
    %217 = vmatpush.msra.mxu0 %v153
    %218 = vmatpush.msra.mxu0 %v149
    %219 = vmatpush.msra.mxu0 %v145
    %220 = vmatpush.msra.mxu0 %v141
    %221 = vmatmul.f32.gmra.mxu0 %v77
    %v222 = vpop.f32.mrf.mxu0
    %v223 = vadd.f32 0.0, %v222
    %224 = vmatmul.f32.gmra.mxu0 %v78
    %v225 = vpop.f32.mrf.mxu0
    %v226 = vadd.f32 0.0, %v225
    %227 = vmatmul.f32.gmra.mxu0 %v79
    %v228 = vpop.f32.mrf.mxu0
    %v229 = vadd.f32 0.0, %v228
    %230 = vmatmul.f32.gmra.mxu0 %v80
    %v231 = vpop.f32.mrf.mxu0
    %v232 = vadd.f32 0.0, %v231
    %233 = vmatmul.f32.gmra.mxu0 %v81
    %v234 = vpop.f32.mrf.mxu0
    %v235 = vadd.f32 0.0, %v234
    %236 = vmatmul.f32.gmra.mxu0 %v82
    %v237 = vpop.f32.mrf.mxu0
    %v238 = vadd.f32 0.0, %v237
    %239 = vmatmul.f32.gmra.mxu0 %v83
    %v240 = vpop.f32.mrf.mxu0
    %v241 = vadd.f32 0.0, %v240
    %242 = vmatmul.f32.gmra.mxu0 %v84
    %v243 = vpop.f32.mrf.mxu0
    %v244 = vadd.f32 0.0, %v243
    %245 = vmatmul.f32.gmra.mxu0 %v85
    %v246 = vpop.f32.mrf.mxu0
    %v247 = vadd.f32 0.0, %v246
    %248 = vmatmul.f32.gmra.mxu0 %v86
    %v249 = vpop.f32.mrf.mxu0
    %v250 = vadd.f32 0.0, %v249
    %251 = vmatmul.f32.gmra.mxu0 %v87
    %v252 = vpop.f32.mrf.mxu0
    %v253 = vadd.f32 0.0, %v252
    %254 = vmatmul.f32.gmra.mxu0 %v88
    %v255 = vpop.f32.mrf.mxu0
    %v256 = vadd.f32 0.0, %v255
    %257 = vmatmul.f32.gmra.mxu0 %v89
    %v258 = vpop.f32.mrf.mxu0
    %v259 = vadd.f32 0.0, %v258
    %260 = vmatmul.f32.gmra.mxu0 %v90
    %v261 = vpop.f32.mrf.mxu0
    %v262 = vadd.f32 0.0, %v261
    %263 = vmatmul.f32.gmra.mxu0 %v91
    %v264 = vpop.f32.mrf.mxu0
    %v265 = vadd.f32 0.0, %v264
    %266 = vmatmul.f32.gmra.mxu0 %v92
    %v267 = vpop.f32.mrf.mxu0
    %v268 = vadd.f32 0.0, %v267
    %269 = vdwg.mxu0
    %270 = vmatpush.msra.mxu0 %v202
    %271 = vmatpush.msra.mxu0 %v198
    %272 = vmatpush.msra.mxu0 %v194
    %273 = vmatpush.msra.mxu0 %v190
    %274 = vmatpush.msra.mxu0 %v186
    %275 = vmatpush.msra.mxu0 %v182
    %276 = vmatpush.msra.mxu0 %v178
    %277 = vmatpush.msra.mxu0 %v174
    %278 = vmatpush.msra.mxu0 %v170
    %279 = vmatpush.msra.mxu0 %v166
    %280 = vmatpush.msra.mxu0 %v162
    %281 = vmatpush.msra.mxu0 %v158
    %282 = vmatpush.msra.mxu0 %v154
    %283 = vmatpush.msra.mxu0 %v150
    %284 = vmatpush.msra.mxu0 %v146
    %285 = vmatpush.msra.mxu0 %v142
    %286 = vmatmul.f32.gmra.mxu0 %v77
    %v287 = vpop.f32.mrf.mxu0
    %v288 = vadd.f32 0.0, %v287
    %289 = vmatmul.f32.gmra.mxu0 %v78
    %v290 = vpop.f32.mrf.mxu0
    %v291 = vadd.f32 0.0, %v290
    %292 = vmatmul.f32.gmra.mxu0 %v79
    %v293 = vpop.f32.mrf.mxu0
    %v294 = vadd.f32 0.0, %v293
    %295 = vmatmul.f32.gmra.mxu0 %v80
    %v296 = vpop.f32.mrf.mxu0
    %v297 = vadd.f32 0.0, %v296
    %298 = vmatmul.f32.gmra.mxu0 %v81
    %v299 = vpop.f32.mrf.mxu0
    %v300 = vadd.f32 0.0, %v299
    %301 = vmatmul.f32.gmra.mxu0 %v82
    %v302 = vpop.f32.mrf.mxu0
    %v303 = vadd.f32 0.0, %v302
    %304 = vmatmul.f32.gmra.mxu0 %v83
    %v305 = vpop.f32.mrf.mxu0
    %v306 = vadd.f32 0.0, %v305
    %307 = vmatmul.f32.gmra.mxu0 %v84
    %v308 = vpop.f32.mrf.mxu0
    %v309 = vadd.f32 0.0, %v308
    %310 = vmatmul.f32.gmra.mxu0 %v85
    %v311 = vpop.f32.mrf.mxu0
    %v312 = vadd.f32 0.0, %v311
    %313 = vmatmul.f32.gmra.mxu0 %v86
    %v314 = vpop.f32.mrf.mxu0
    %v315 = vadd.f32 0.0, %v314
    %316 = vmatmul.f32.gmra.mxu0 %v87
    %v317 = vpop.f32.mrf.mxu0
    %v318 = vadd.f32 0.0, %v317
    %319 = vmatmul.f32.gmra.mxu0 %v88
    %v320 = vpop.f32.mrf.mxu0
    %v321 = vadd.f32 0.0, %v320
    %322 = vmatmul.f32.gmra.mxu0 %v89
    %v323 = vpop.f32.mrf.mxu0
    %v324 = vadd.f32 0.0, %v323
    %325 = vmatmul.f32.gmra.mxu0 %v90
    %v326 = vpop.f32.mrf.mxu0
    %v327 = vadd.f32 0.0, %v326
    %328 = vmatmul.f32.gmra.mxu0 %v91
    %v329 = vpop.f32.mrf.mxu0
    %v330 = vadd.f32 0.0, %v329
    %331 = vmatmul.f32.gmra.mxu0 %v92
    %v332 = vpop.f32.mrf.mxu0
    %v333 = vadd.f32 0.0, %v332
    %334 = vdwg.mxu0
    %335 = vmatpush.msra.mxu0 %v203
    %336 = vmatpush.msra.mxu0 %v199
    %337 = vmatpush.msra.mxu0 %v195
    %338 = vmatpush.msra.mxu0 %v191
    %339 = vmatpush.msra.mxu0 %v187
    %340 = vmatpush.msra.mxu0 %v183
    %341 = vmatpush.msra.mxu0 %v179
    %342 = vmatpush.msra.mxu0 %v175
    %343 = vmatpush.msra.mxu0 %v171
    %344 = vmatpush.msra.mxu0 %v167
    %345 = vmatpush.msra.mxu0 %v163
    %346 = vmatpush.msra.mxu0 %v159
    %347 = vmatpush.msra.mxu0 %v155
    %348 = vmatpush.msra.mxu0 %v151
    %349 = vmatpush.msra.mxu0 %v147
    %350 = vmatpush.msra.mxu0 %v143
    %351 = vmatmul.f32.gmra.mxu0 %v77
    %v352 = vpop.f32.mrf.mxu0
    %v353 = vadd.f32 0.0, %v352
    %354 = vmatmul.f32.gmra.mxu0 %v78
    %v355 = vpop.f32.mrf.mxu0
    %v356 = vadd.f32 0.0, %v355
    %357 = vmatmul.f32.gmra.mxu0 %v79
    %v358 = vpop.f32.mrf.mxu0
    %v359 = vadd.f32 0.0, %v358
    %360 = vmatmul.f32.gmra.mxu0 %v80
    %v361 = vpop.f32.mrf.mxu0
    %v362 = vadd.f32 0.0, %v361
    %363 = vmatmul.f32.gmra.mxu0 %v81
    %v364 = vpop.f32.mrf.mxu0
    %v365 = vadd.f32 0.0, %v364
    %366 = vmatmul.f32.gmra.mxu0 %v82
    %v367 = vpop.f32.mrf.mxu0
    %v368 = vadd.f32 0.0, %v367
    %369 = vmatmul.f32.gmra.mxu0 %v83
    %v370 = vpop.f32.mrf.mxu0
    %v371 = vadd.f32 0.0, %v370
    %372 = vmatmul.f32.gmra.mxu0 %v84
    %v373 = vpop.f32.mrf.mxu0
    %v374 = vadd.f32 0.0, %v373
    %375 = vmatmul.f32.gmra.mxu0 %v85
    %v376 = vpop.f32.mrf.mxu0
    %v377 = vadd.f32 0.0, %v376
    %378 = vmatmul.f32.gmra.mxu0 %v86
    %v379 = vpop.f32.mrf.mxu0
    %v380 = vadd.f32 0.0, %v379
    %381 = vmatmul.f32.gmra.mxu0 %v87
    %v382 = vpop.f32.mrf.mxu0
    %v383 = vadd.f32 0.0, %v382
    %384 = vmatmul.f32.gmra.mxu0 %v88
    %v385 = vpop.f32.mrf.mxu0
    %v386 = vadd.f32 0.0, %v385
    %387 = vmatmul.f32.gmra.mxu0 %v89
    %v388 = vpop.f32.mrf.mxu0
    %v389 = vadd.f32 0.0, %v388
    %390 = vmatmul.f32.gmra.mxu0 %v90
    %v391 = vpop.f32.mrf.mxu0
    %v392 = vadd.f32 0.0, %v391
    %393 = vmatmul.f32.gmra.mxu0 %v91
    %v394 = vpop.f32.mrf.mxu0
    %v395 = vadd.f32 0.0, %v394
    %396 = vmatmul.f32.gmra.mxu0 %v92
    %v397 = vpop.f32.mrf.mxu0
    %v398 = vadd.f32 0.0, %v397
    %399 = vdwg.mxu0
    %400 = vmatpush.msra.mxu0 %v204
    %401 = vmatpush.msra.mxu0 %v200
    %402 = vmatpush.msra.mxu0 %v196
    %403 = vmatpush.msra.mxu0 %v192
    %404 = vmatpush.msra.mxu0 %v188
    %405 = vmatpush.msra.mxu0 %v184
    %406 = vmatpush.msra.mxu0 %v180
    %407 = vmatpush.msra.mxu0 %v176
    %408 = vmatpush.msra.mxu0 %v172
    %409 = vmatpush.msra.mxu0 %v168
    %410 = vmatpush.msra.mxu0 %v164
    %411 = vmatpush.msra.mxu0 %v160
    %412 = vmatpush.msra.mxu0 %v156
    %413 = vmatpush.msra.mxu0 %v152
    %414 = vmatpush.msra.mxu0 %v148
    %415 = vmatpush.msra.mxu0 %v144
    %416 = vmatmul.f32.gmra.mxu0 %v77
    %v417 = vpop.f32.mrf.mxu0
    %v418 = vadd.f32 0.0, %v417
    %419 = vmatmul.f32.gmra.mxu0 %v78
    %v420 = vpop.f32.mrf.mxu0
    %v421 = vadd.f32 0.0, %v420
    %422 = vmatmul.f32.gmra.mxu0 %v79
    %v423 = vpop.f32.mrf.mxu0
    %v424 = vadd.f32 0.0, %v423
    %425 = vmatmul.f32.gmra.mxu0 %v80
    %v426 = vpop.f32.mrf.mxu0
    %v427 = vadd.f32 0.0, %v426
    %428 = vmatmul.f32.gmra.mxu0 %v81
    %v429 = vpop.f32.mrf.mxu0
    %v430 = vadd.f32 0.0, %v429
    %431 = vmatmul.f32.gmra.mxu0 %v82
    %v432 = vpop.f32.mrf.mxu0
    %v433 = vadd.f32 0.0, %v432
    %434 = vmatmul.f32.gmra.mxu0 %v83
    %v435 = vpop.f32.mrf.mxu0
    %v436 = vadd.f32 0.0, %v435
    %437 = vmatmul.f32.gmra.mxu0 %v84
    %v438 = vpop.f32.mrf.mxu0
    %v439 = vadd.f32 0.0, %v438
    %440 = vmatmul.f32.gmra.mxu0 %v85
    %v441 = vpop.f32.mrf.mxu0
    %v442 = vadd.f32 0.0, %v441
    %443 = vmatmul.f32.gmra.mxu0 %v86
    %v444 = vpop.f32.mrf.mxu0
    %v445 = vadd.f32 0.0, %v444
    %446 = vmatmul.f32.gmra.mxu0 %v87
    %v447 = vpop.f32.mrf.mxu0
    %v448 = vadd.f32 0.0, %v447
    %449 = vmatmul.f32.gmra.mxu0 %v88
    %v450 = vpop.f32.mrf.mxu0
    %v451 = vadd.f32 0.0, %v450
    %452 = vmatmul.f32.gmra.mxu0 %v89
    %v453 = vpop.f32.mrf.mxu0
    %v454 = vadd.f32 0.0, %v453
    %455 = vmatmul.f32.gmra.mxu0 %v90
    %v456 = vpop.f32.mrf.mxu0
    %v457 = vadd.f32 0.0, %v456
    %458 = vmatmul.f32.gmra.mxu0 %v91
    %v459 = vpop.f32.mrf.mxu0
    %v460 = vadd.f32 0.0, %v459
    %461 = vmatmul.f32.gmra.mxu0 %v92
    %v462 = vpop.f32.mrf.mxu0
    %v463 = vadd.f32 0.0, %v462
    %464 = vdwg.mxu0
    %v465 = vld [vmem:[#allocation7] sm:$0xff]
    %v466 = vld [vmem:[#allocation7 + $0x8] sm:$0xff]
    %v467 = vld [vmem:[#allocation7 + $0x10] sm:$0xff]
    %v468 = vld [vmem:[#allocation7 + $0x18] sm:$0xff]
    %v469 = vld [vmem:[#allocation7 + $0x20] sm:$0xff]
    %v470 = vld [vmem:[#allocation7 + $0x28] sm:$0xff]
    %v471 = vld [vmem:[#allocation7 + $0x30] sm:$0xff]
    %v472 = vld [vmem:[#allocation7 + $0x38] sm:$0xff]
    %v473 = vld [vmem:[#allocation7 + $0x40] sm:$0xff]
    %v474 = vld [vmem:[#allocation7 + $0x48] sm:$0xff]
    %v475 = vld [vmem:[#allocation7 + $0x50] sm:$0xff]
    %v476 = vld [vmem:[#allocation7 + $0x58] sm:$0xff]
    %v477 = vld [vmem:[#allocation7 + $0x60] sm:$0xff]
    %v478 = vld [vmem:[#allocation7 + $0x68] sm:$0xff]
    %v479 = vld [vmem:[#allocation7 + $0x70] sm:$0xff]
    %v480 = vld [vmem:[#allocation7 + $0x78] sm:$0xff]
    %v481 = vld [vmem:[#allocation7 + $0x80] sm:$0xff]
    %v482 = vld [vmem:[#allocation7 + $0x88] sm:$0xff]
    %v483 = vld [vmem:[#allocation7 + $0x90] sm:$0xff]
    %v484 = vld [vmem:[#allocation7 + $0x98] sm:$0xff]
    %v485 = vld [vmem:[#allocation7 + $0xa0] sm:$0xff]
    %v486 = vld [vmem:[#allocation7 + $0xa8] sm:$0xff]
    %v487 = vld [vmem:[#allocation7 + $0xb0] sm:$0xff]
    %v488 = vld [vmem:[#allocation7 + $0xb8] sm:$0xff]
    %v489 = vld [vmem:[#allocation7 + $0xc0] sm:$0xff]
    %v490 = vld [vmem:[#allocation7 + $0xc8] sm:$0xff]
    %v491 = vld [vmem:[#allocation7 + $0xd0] sm:$0xff]
    %v492 = vld [vmem:[#allocation7 + $0xd8] sm:$0xff]
    %v493 = vld [vmem:[#allocation7 + $0xe0] sm:$0xff]
    %v494 = vld [vmem:[#allocation7 + $0xe8] sm:$0xff]
    %v495 = vld [vmem:[#allocation7 + $0xf0] sm:$0xff]
    %v496 = vld [vmem:[#allocation7 + $0xf8] sm:$0xff]
    %v497 = vld [vmem:[#allocation7 + $0x100] sm:$0xff]
    %v498 = vld [vmem:[#allocation7 + $0x108] sm:$0xff]
    %v499 = vld [vmem:[#allocation7 + $0x110] sm:$0xff]
    %v500 = vld [vmem:[#allocation7 + $0x118] sm:$0xff]
    %v501 = vld [vmem:[#allocation7 + $0x120] sm:$0xff]
    %v502 = vld [vmem:[#allocation7 + $0x128] sm:$0xff]
    %v503 = vld [vmem:[#allocation7 + $0x130] sm:$0xff]
    %v504 = vld [vmem:[#allocation7 + $0x138] sm:$0xff]
    %v505 = vld [vmem:[#allocation7 + $0x140] sm:$0xff]
    %v506 = vld [vmem:[#allocation7 + $0x148] sm:$0xff]
    %v507 = vld [vmem:[#allocation7 + $0x150] sm:$0xff]
    %v508 = vld [vmem:[#allocation7 + $0x158] sm:$0xff]
    %v509 = vld [vmem:[#allocation7 + $0x160] sm:$0xff]
    %v510 = vld [vmem:[#allocation7 + $0x168] sm:$0xff]
    %v511 = vld [vmem:[#allocation7 + $0x170] sm:$0xff]
    %v512 = vld [vmem:[#allocation7 + $0x178] sm:$0xff]
    %v513 = vld [vmem:[#allocation7 + $0x180] sm:$0xff]
    %v514 = vld [vmem:[#allocation7 + $0x188] sm:$0xff]
    %v515 = vld [vmem:[#allocation7 + $0x190] sm:$0xff]
    %v516 = vld [vmem:[#allocation7 + $0x198] sm:$0xff]
    %v517 = vld [vmem:[#allocation7 + $0x1a0] sm:$0xff]
    %v518 = vld [vmem:[#allocation7 + $0x1a8] sm:$0xff]
    %v519 = vld [vmem:[#allocation7 + $0x1b0] sm:$0xff]
    %v520 = vld [vmem:[#allocation7 + $0x1b8] sm:$0xff]
    %v521 = vld [vmem:[#allocation7 + $0x1c0] sm:$0xff]
    %v522 = vld [vmem:[#allocation7 + $0x1c8] sm:$0xff]
    %v523 = vld [vmem:[#allocation7 + $0x1d0] sm:$0xff]
    %v524 = vld [vmem:[#allocation7 + $0x1d8] sm:$0xff]
    %v525 = vld [vmem:[#allocation7 + $0x1e0] sm:$0xff]
    %v526 = vld [vmem:[#allocation7 + $0x1e8] sm:$0xff]
    %v527 = vld [vmem:[#allocation7 + $0x1f0] sm:$0xff]
    %v528 = vld [vmem:[#allocation7 + $0x1f8] sm:$0xff]
    %529 = vmatpush.msra.mxu0 %v525
    %530 = vmatpush.msra.mxu0 %v521
    %531 = vmatpush.msra.mxu0 %v517
    %532 = vmatpush.msra.mxu0 %v513
    %533 = vmatpush.msra.mxu0 %v509
    %534 = vmatpush.msra.mxu0 %v505
    %535 = vmatpush.msra.mxu0 %v501
    %536 = vmatpush.msra.mxu0 %v497
    %537 = vmatpush.msra.mxu0 %v493
    %538 = vmatpush.msra.mxu0 %v489
    %539 = vmatpush.msra.mxu0 %v485
    %540 = vmatpush.msra.mxu0 %v481
    %541 = vmatpush.msra.mxu0 %v477
    %542 = vmatpush.msra.mxu0 %v473
    %543 = vmatpush.msra.mxu0 %v469
    %544 = vmatpush.msra.mxu0 %v465
    %545 = vmatmul.f32.gmra.mxu0 %v93
    %v546 = vpop.f32.mrf.mxu0
    %v547 = vadd.f32 0.0, %v546
    %548 = vmatmul.f32.gmra.mxu0 %v94
    %v549 = vpop.f32.mrf.mxu0
    %v550 = vadd.f32 0.0, %v549
    %551 = vmatmul.f32.gmra.mxu0 %v95
    %v552 = vpop.f32.mrf.mxu0
    %v553 = vadd.f32 0.0, %v552
    %554 = vmatmul.f32.gmra.mxu0 %v96
    %v555 = vpop.f32.mrf.mxu0
    %v556 = vadd.f32 0.0, %v555
    %557 = vmatmul.f32.gmra.mxu0 %v97
    %v558 = vpop.f32.mrf.mxu0
    %v559 = vadd.f32 0.0, %v558
    %560 = vmatmul.f32.gmra.mxu0 %v98
    %v561 = vpop.f32.mrf.mxu0
    %v562 = vadd.f32 0.0, %v561
    %563 = vmatmul.f32.gmra.mxu0 %v99
    %v564 = vpop.f32.mrf.mxu0
    %v565 = vadd.f32 0.0, %v564
    %566 = vmatmul.f32.gmra.mxu0 %v100
    %v567 = vpop.f32.mrf.mxu0
    %v568 = vadd.f32 0.0, %v567
    %569 = vmatmul.f32.gmra.mxu0 %v101
    %v570 = vpop.f32.mrf.mxu0
    %v571 = vadd.f32 0.0, %v570
    %572 = vmatmul.f32.gmra.mxu0 %v102
    %v573 = vpop.f32.mrf.mxu0
    %v574 = vadd.f32 0.0, %v573
    %575 = vmatmul.f32.gmra.mxu0 %v103
    %v576 = vpop.f32.mrf.mxu0
    %v577 = vadd.f32 0.0, %v576
    %578 = vmatmul.f32.gmra.mxu0 %v104
    %v579 = vpop.f32.mrf.mxu0
    %v580 = vadd.f32 0.0, %v579
    %581 = vmatmul.f32.gmra.mxu0 %v105
    %v582 = vpop.f32.mrf.mxu0
    %v583 = vadd.f32 0.0, %v582
    %584 = vmatmul.f32.gmra.mxu0 %v106
    %v585 = vpop.f32.mrf.mxu0
    %v586 = vadd.f32 0.0, %v585
    %587 = vmatmul.f32.gmra.mxu0 %v107
    %v588 = vpop.f32.mrf.mxu0
    %v589 = vadd.f32 0.0, %v588
    %590 = vmatmul.f32.gmra.mxu0 %v108
    %v591 = vpop.f32.mrf.mxu0
    %v592 = vadd.f32 0.0, %v591
    %593 = vdwg.mxu0
    %594 = vmatpush.msra.mxu0 %v526
    %595 = vmatpush.msra.mxu0 %v522
    %596 = vmatpush.msra.mxu0 %v518
    %597 = vmatpush.msra.mxu0 %v514
    %598 = vmatpush.msra.mxu0 %v510
    %599 = vmatpush.msra.mxu0 %v506
    %600 = vmatpush.msra.mxu0 %v502
    %601 = vmatpush.msra.mxu0 %v498
    %602 = vmatpush.msra.mxu0 %v494
    %603 = vmatpush.msra.mxu0 %v490
    %604 = vmatpush.msra.mxu0 %v486
    %605 = vmatpush.msra.mxu0 %v482
    %606 = vmatpush.msra.mxu0 %v478
    %607 = vmatpush.msra.mxu0 %v474
    %608 = vmatpush.msra.mxu0 %v470
    %609 = vmatpush.msra.mxu0 %v466
    %610 = vmatmul.f32.gmra.mxu0 %v93
    %v611 = vpop.f32.mrf.mxu0
    %v612 = vadd.f32 0.0, %v611
    %613 = vmatmul.f32.gmra.mxu0 %v94
    %v614 = vpop.f32.mrf.mxu0
    %v615 = vadd.f32 0.0, %v614
    %616 = vmatmul.f32.gmra.mxu0 %v95
    %v617 = vpop.f32.mrf.mxu0
    %v618 = vadd.f32 0.0, %v617
    %619 = vmatmul.f32.gmra.mxu0 %v96
    %v620 = vpop.f32.mrf.mxu0
    %v621 = vadd.f32 0.0, %v620
    %622 = vmatmul.f32.gmra.mxu0 %v97
    %v623 = vpop.f32.mrf.mxu0
    %v624 = vadd.f32 0.0, %v623
    %625 = vmatmul.f32.gmra.mxu0 %v98
    %v626 = vpop.f32.mrf.mxu0
    %v627 = vadd.f32 0.0, %v626
    %628 = vmatmul.f32.gmra.mxu0 %v99
    %v629 = vpop.f32.mrf.mxu0
    %v630 = vadd.f32 0.0, %v629
    %631 = vmatmul.f32.gmra.mxu0 %v100
    %v632 = vpop.f32.mrf.mxu0
    %v633 = vadd.f32 0.0, %v632
    %634 = vmatmul.f32.gmra.mxu0 %v101
    %v635 = vpop.f32.mrf.mxu0
    %v636 = vadd.f32 0.0, %v635
    %637 = vmatmul.f32.gmra.mxu0 %v102
    %v638 = vpop.f32.mrf.mxu0
    %v639 = vadd.f32 0.0, %v638
    %640 = vmatmul.f32.gmra.mxu0 %v103
    %v641 = vpop.f32.mrf.mxu0
    %v642 = vadd.f32 0.0, %v641
    %643 = vmatmul.f32.gmra.mxu0 %v104
    %v644 = vpop.f32.mrf.mxu0
    %v645 = vadd.f32 0.0, %v644
    %646 = vmatmul.f32.gmra.mxu0 %v105
    %v647 = vpop.f32.mrf.mxu0
    %v648 = vadd.f32 0.0, %v647
    %649 = vmatmul.f32.gmra.mxu0 %v106
    %v650 = vpop.f32.mrf.mxu0
    %v651 = vadd.f32 0.0, %v650
    %652 = vmatmul.f32.gmra.mxu0 %v107
    %v653 = vpop.f32.mrf.mxu0
    %v654 = vadd.f32 0.0, %v653
    %655 = vmatmul.f32.gmra.mxu0 %v108
    %v656 = vpop.f32.mrf.mxu0
    %v657 = vadd.f32 0.0, %v656
    %658 = vdwg.mxu0
    %659 = vmatpush.msra.mxu0 %v527
    %660 = vmatpush.msra.mxu0 %v523
    %661 = vmatpush.msra.mxu0 %v519
    %662 = vmatpush.msra.mxu0 %v515
    %663 = vmatpush.msra.mxu0 %v511
    %664 = vmatpush.msra.mxu0 %v507
    %665 = vmatpush.msra.mxu0 %v503
    %666 = vmatpush.msra.mxu0 %v499
    %667 = vmatpush.msra.mxu0 %v495
    %668 = vmatpush.msra.mxu0 %v491
    %669 = vmatpush.msra.mxu0 %v487
    %670 = vmatpush.msra.mxu0 %v483
    %671 = vmatpush.msra.mxu0 %v479
    %672 = vmatpush.msra.mxu0 %v475
    %673 = vmatpush.msra.mxu0 %v471
    %674 = vmatpush.msra.mxu0 %v467
    %675 = vmatmul.f32.gmra.mxu0 %v93
    %v676 = vpop.f32.mrf.mxu0
    %v677 = vadd.f32 0.0, %v676
    %678 = vmatmul.f32.gmra.mxu0 %v94
    %v679 = vpop.f32.mrf.mxu0
    %v680 = vadd.f32 0.0, %v679
    %681 = vmatmul.f32.gmra.mxu0 %v95
    %v682 = vpop.f32.mrf.mxu0
    %v683 = vadd.f32 0.0, %v682
    %684 = vmatmul.f32.gmra.mxu0 %v96
    %v685 = vpop.f32.mrf.mxu0
    %v686 = vadd.f32 0.0, %v685
    %687 = vmatmul.f32.gmra.mxu0 %v97
    %v688 = vpop.f32.mrf.mxu0
    %v689 = vadd.f32 0.0, %v688
    %690 = vmatmul.f32.gmra.mxu0 %v98
    %v691 = vpop.f32.mrf.mxu0
    %v692 = vadd.f32 0.0, %v691
    %693 = vmatmul.f32.gmra.mxu0 %v99
    %v694 = vpop.f32.mrf.mxu0
    %v695 = vadd.f32 0.0, %v694
    %696 = vmatmul.f32.gmra.mxu0 %v100
    %v697 = vpop.f32.mrf.mxu0
    %v698 = vadd.f32 0.0, %v697
    %699 = vmatmul.f32.gmra.mxu0 %v101
    %v700 = vpop.f32.mrf.mxu0
    %v701 = vadd.f32 0.0, %v700
    %702 = vmatmul.f32.gmra.mxu0 %v102
    %v703 = vpop.f32.mrf.mxu0
    %v704 = vadd.f32 0.0, %v703
    %705 = vmatmul.f32.gmra.mxu0 %v103
    %v706 = vpop.f32.mrf.mxu0
    %v707 = vadd.f32 0.0, %v706
    %708 = vmatmul.f32.gmra.mxu0 %v104
    %v709 = vpop.f32.mrf.mxu0
    %v710 = vadd.f32 0.0, %v709
    %711 = vmatmul.f32.gmra.mxu0 %v105
    %v712 = vpop.f32.mrf.mxu0
    %v713 = vadd.f32 0.0, %v712
    %714 = vmatmul.f32.gmra.mxu0 %v106
    %v715 = vpop.f32.mrf.mxu0
    %v716 = vadd.f32 0.0, %v715
    %717 = vmatmul.f32.gmra.mxu0 %v107
    %v718 = vpop.f32.mrf.mxu0
    %v719 = vadd.f32 0.0, %v718
    %720 = vmatmul.f32.gmra.mxu0 %v108
    %v721 = vpop.f32.mrf.mxu0
    %v722 = vadd.f32 0.0, %v721
    %723 = vdwg.mxu0
    %724 = vmatpush.msra.mxu0 %v528
    %725 = vmatpush.msra.mxu0 %v524
    %726 = vmatpush.msra.mxu0 %v520
    %727 = vmatpush.msra.mxu0 %v516
    %728 = vmatpush.msra.mxu0 %v512
    %729 = vmatpush.msra.mxu0 %v508
    %730 = vmatpush.msra.mxu0 %v504
    %731 = vmatpush.msra.mxu0 %v500
    %732 = vmatpush.msra.mxu0 %v496
    %733 = vmatpush.msra.mxu0 %v492
    %734 = vmatpush.msra.mxu0 %v488
    %735 = vmatpush.msra.mxu0 %v484
    %736 = vmatpush.msra.mxu0 %v480
    %737 = vmatpush.msra.mxu0 %v476
    %738 = vmatpush.msra.mxu0 %v472
    %739 = vmatpush.msra.mxu0 %v468
    %740 = vmatmul.f32.gmra.mxu0 %v93
    %v741 = vpop.f32.mrf.mxu0
    %v742 = vadd.f32 0.0, %v741
    %743 = vmatmul.f32.gmra.mxu0 %v94
    %v744 = vpop.f32.mrf.mxu0
    %v745 = vadd.f32 0.0, %v744
    %746 = vmatmul.f32.gmra.mxu0 %v95
    %v747 = vpop.f32.mrf.mxu0
    %v748 = vadd.f32 0.0, %v747
    %749 = vmatmul.f32.gmra.mxu0 %v96
    %v750 = vpop.f32.mrf.mxu0
    %v751 = vadd.f32 0.0, %v750
    %752 = vmatmul.f32.gmra.mxu0 %v97
    %v753 = vpop.f32.mrf.mxu0
    %v754 = vadd.f32 0.0, %v753
    %755 = vmatmul.f32.gmra.mxu0 %v98
    %v756 = vpop.f32.mrf.mxu0
    %v757 = vadd.f32 0.0, %v756
    %758 = vmatmul.f32.gmra.mxu0 %v99
    %v759 = vpop.f32.mrf.mxu0
    %v760 = vadd.f32 0.0, %v759
    %761 = vmatmul.f32.gmra.mxu0 %v100
    %v762 = vpop.f32.mrf.mxu0
    %v763 = vadd.f32 0.0, %v762
    %764 = vmatmul.f32.gmra.mxu0 %v101
    %v765 = vpop.f32.mrf.mxu0
    %v766 = vadd.f32 0.0, %v765
    %767 = vmatmul.f32.gmra.mxu0 %v102
    %v768 = vpop.f32.mrf.mxu0
    %v769 = vadd.f32 0.0, %v768
    %770 = vmatmul.f32.gmra.mxu0 %v103
    %v771 = vpop.f32.mrf.mxu0
    %v772 = vadd.f32 0.0, %v771
    %773 = vmatmul.f32.gmra.mxu0 %v104
    %v774 = vpop.f32.mrf.mxu0
    %v775 = vadd.f32 0.0, %v774
    %776 = vmatmul.f32.gmra.mxu0 %v105
    %v777 = vpop.f32.mrf.mxu0
    %v778 = vadd.f32 0.0, %v777
    %779 = vmatmul.f32.gmra.mxu0 %v106
    %v780 = vpop.f32.mrf.mxu0
    %v781 = vadd.f32 0.0, %v780
    %782 = vmatmul.f32.gmra.mxu0 %v107
    %v783 = vpop.f32.mrf.mxu0
    %v784 = vadd.f32 0.0, %v783
    %785 = vmatmul.f32.gmra.mxu0 %v108
    %v786 = vpop.f32.mrf.mxu0
    %v787 = vadd.f32 0.0, %v786
    %788 = vdwg.mxu0
    %790 = vset.pattern.permute.xlu0 0
    %791 = vperm.xlu0 %790, %v109
    %v792 = vpop.permute.xlu0 %791
    %795 = vset.pattern.permute.xlu0 0
    %796 = vperm.xlu0 %795, %v110
    %v797 = vpop.permute.xlu0 %796
    %800 = vset.pattern.permute.xlu0 0
    %801 = vperm.xlu0 %800, %v111
    %v802 = vpop.permute.xlu0 %801
    %805 = vset.pattern.permute.xlu0 0
    %806 = vperm.xlu0 %805, %v112
    %v807 = vpop.permute.xlu0 %806
    %810 = vset.pattern.permute.xlu0 0
    %811 = vperm.xlu0 %810, %v113
    %v812 = vpop.permute.xlu0 %811
    %815 = vset.pattern.permute.xlu0 0
    %816 = vperm.xlu0 %815, %v114
    %v817 = vpop.permute.xlu0 %816
    %820 = vset.pattern.permute.xlu0 0
    %821 = vperm.xlu0 %820, %v115
    %v822 = vpop.permute.xlu0 %821
    %825 = vset.pattern.permute.xlu0 0
    %826 = vperm.xlu0 %825, %v116
    %v827 = vpop.permute.xlu0 %826
    %830 = vset.pattern.permute.xlu0 0
    %831 = vperm.xlu0 %830, %v117
    %v832 = vpop.permute.xlu0 %831
    %835 = vset.pattern.permute.xlu0 0
    %836 = vperm.xlu0 %835, %v118
    %v837 = vpop.permute.xlu0 %836
    %840 = vset.pattern.permute.xlu0 0
    %841 = vperm.xlu0 %840, %v119
    %v842 = vpop.permute.xlu0 %841
    %845 = vset.pattern.permute.xlu0 0
    %846 = vperm.xlu0 %845, %v120
    %v847 = vpop.permute.xlu0 %846
    %850 = vset.pattern.permute.xlu0 0
    %851 = vperm.xlu0 %850, %v121
    %v852 = vpop.permute.xlu0 %851
    %855 = vset.pattern.permute.xlu0 0
    %856 = vperm.xlu0 %855, %v122
    %v857 = vpop.permute.xlu0 %856
    %860 = vset.pattern.permute.xlu0 0
    %861 = vperm.xlu0 %860, %v123
    %v862 = vpop.permute.xlu0 %861
    %865 = vset.pattern.permute.xlu0 0
    %866 = vperm.xlu0 %865, %v124
    %v867 = vpop.permute.xlu0 %866
    %v869 = vmul.f32 %v792, %v223
    %v870 = vmul.f32 %v792, %v288
    %v871 = vmul.f32 %v792, %v353
    %v872 = vmul.f32 %v792, %v418
    %v873 = vmul.f32 %v797, %v226
    %v874 = vmul.f32 %v797, %v291
    %v875 = vmul.f32 %v797, %v356
    %v876 = vmul.f32 %v797, %v421
    %v877 = vmul.f32 %v802, %v229
    %v878 = vmul.f32 %v802, %v294
    %v879 = vmul.f32 %v802, %v359
    %v880 = vmul.f32 %v802, %v424
    %v881 = vmul.f32 %v807, %v232
    %v882 = vmul.f32 %v807, %v297
    %v883 = vmul.f32 %v807, %v362
    %v884 = vmul.f32 %v807, %v427
    %v885 = vmul.f32 %v812, %v235
    %v886 = vmul.f32 %v812, %v300
    %v887 = vmul.f32 %v812, %v365
    %v888 = vmul.f32 %v812, %v430
    %v889 = vmul.f32 %v817, %v238
    %v890 = vmul.f32 %v817, %v303
    %v891 = vmul.f32 %v817, %v368
    %v892 = vmul.f32 %v817, %v433
    %v893 = vmul.f32 %v822, %v241
    %v894 = vmul.f32 %v822, %v306
    %v895 = vmul.f32 %v822, %v371
    %v896 = vmul.f32 %v822, %v436
    %v897 = vmul.f32 %v827, %v244
    %v898 = vmul.f32 %v827, %v309
    %v899 = vmul.f32 %v827, %v374
    %v900 = vmul.f32 %v827, %v439
    %v901 = vmul.f32 %v832, %v247
    %v902 = vmul.f32 %v832, %v312
    %v903 = vmul.f32 %v832, %v377
    %v904 = vmul.f32 %v832, %v442
    %v905 = vmul.f32 %v837, %v250
    %v906 = vmul.f32 %v837, %v315
    %v907 = vmul.f32 %v837, %v380
    %v908 = vmul.f32 %v837, %v445
    %v909 = vmul.f32 %v842, %v253
    %v910 = vmul.f32 %v842, %v318
    %v911 = vmul.f32 %v842, %v383
    %v912 = vmul.f32 %v842, %v448
    %v913 = vmul.f32 %v847, %v256
    %v914 = vmul.f32 %v847, %v321
    %v915 = vmul.f32 %v847, %v386
    %v916 = vmul.f32 %v847, %v451
    %v917 = vmul.f32 %v852, %v259
    %v918 = vmul.f32 %v852, %v324
    %v919 = vmul.f32 %v852, %v389
    %v920 = vmul.f32 %v852, %v454
    %v921 = vmul.f32 %v857, %v262
    %v922 = vmul.f32 %v857, %v327
    %v923 = vmul.f32 %v857, %v392
    %v924 = vmul.f32 %v857, %v457
    %v925 = vmul.f32 %v862, %v265
    %v926 = vmul.f32 %v862, %v330
    %v927 = vmul.f32 %v862, %v395
    %v928 = vmul.f32 %v862, %v460
    %v929 = vmul.f32 %v867, %v268
    %v930 = vmul.f32 %v867, %v333
    %v931 = vmul.f32 %v867, %v398
    %v932 = vmul.f32 %v867, %v463
    %v933 = vadd.f32 %v869, 0.0
    %v934 = vadd.f32 %v870, 0.0
    %v935 = vadd.f32 %v871, 0.0
    %v936 = vadd.f32 %v872, 0.0
    %v937 = vadd.f32 %v873, 0.0
    %v938 = vadd.f32 %v874, 0.0
    %v939 = vadd.f32 %v875, 0.0
    %v940 = vadd.f32 %v876, 0.0
    %v941 = vadd.f32 %v877, 0.0
    %v942 = vadd.f32 %v878, 0.0
    %v943 = vadd.f32 %v879, 0.0
    %v944 = vadd.f32 %v880, 0.0
    %v945 = vadd.f32 %v881, 0.0
    %v946 = vadd.f32 %v882, 0.0
    %v947 = vadd.f32 %v883, 0.0
    %v948 = vadd.f32 %v884, 0.0
    %v949 = vadd.f32 %v885, 0.0
    %v950 = vadd.f32 %v886, 0.0
    %v951 = vadd.f32 %v887, 0.0
    %v952 = vadd.f32 %v888, 0.0
    %v953 = vadd.f32 %v889, 0.0
    %v954 = vadd.f32 %v890, 0.0
    %v955 = vadd.f32 %v891, 0.0
    %v956 = vadd.f32 %v892, 0.0
    %v957 = vadd.f32 %v893, 0.0
    %v958 = vadd.f32 %v894, 0.0
    %v959 = vadd.f32 %v895, 0.0
    %v960 = vadd.f32 %v896, 0.0
    %v961 = vadd.f32 %v897, 0.0
    %v962 = vadd.f32 %v898, 0.0
    %v963 = vadd.f32 %v899, 0.0
    %v964 = vadd.f32 %v900, 0.0
    %v965 = vadd.f32 %v901, 0.0
    %v966 = vadd.f32 %v902, 0.0
    %v967 = vadd.f32 %v903, 0.0
    %v968 = vadd.f32 %v904, 0.0
    %v969 = vadd.f32 %v905, 0.0
    %v970 = vadd.f32 %v906, 0.0
    %v971 = vadd.f32 %v907, 0.0
    %v972 = vadd.f32 %v908, 0.0
    %v973 = vadd.f32 %v909, 0.0
    %v974 = vadd.f32 %v910, 0.0
    %v975 = vadd.f32 %v911, 0.0
    %v976 = vadd.f32 %v912, 0.0
    %v977 = vadd.f32 %v913, 0.0
    %v978 = vadd.f32 %v914, 0.0
    %v979 = vadd.f32 %v915, 0.0
    %v980 = vadd.f32 %v916, 0.0
    %v981 = vadd.f32 %v917, 0.0
    %v982 = vadd.f32 %v918, 0.0
    %v983 = vadd.f32 %v919, 0.0
    %v984 = vadd.f32 %v920, 0.0
    %v985 = vadd.f32 %v921, 0.0
    %v986 = vadd.f32 %v922, 0.0
    %v987 = vadd.f32 %v923, 0.0
    %v988 = vadd.f32 %v924, 0.0
    %v989 = vadd.f32 %v925, 0.0
    %v990 = vadd.f32 %v926, 0.0
    %v991 = vadd.f32 %v927, 0.0
    %v992 = vadd.f32 %v928, 0.0
    %v993 = vadd.f32 %v929, 0.0
    %v994 = vadd.f32 %v930, 0.0
    %v995 = vadd.f32 %v931, 0.0
    %v996 = vadd.f32 %v932, 0.0
    %998 = vset.pattern.permute.xlu0 0
    %999 = vperm.xlu0 %998, %v125
    %v1000 = vpop.permute.xlu0 %999
    %1003 = vset.pattern.permute.xlu0 0
    %1004 = vperm.xlu0 %1003, %v126
    %v1005 = vpop.permute.xlu0 %1004
    %1008 = vset.pattern.permute.xlu0 0
    %1009 = vperm.xlu0 %1008, %v127
    %v1010 = vpop.permute.xlu0 %1009
    %1013 = vset.pattern.permute.xlu0 0
    %1014 = vperm.xlu0 %1013, %v128
    %v1015 = vpop.permute.xlu0 %1014
    %1018 = vset.pattern.permute.xlu0 0
    %1019 = vperm.xlu0 %1018, %v129
    %v1020 = vpop.permute.xlu0 %1019
    %1023 = vset.pattern.permute.xlu0 0
    %1024 = vperm.xlu0 %1023, %v130
    %v1025 = vpop.permute.xlu0 %1024
    %1028 = vset.pattern.permute.xlu0 0
    %1029 = vperm.xlu0 %1028, %v131
    %v1030 = vpop.permute.xlu0 %1029
    %1033 = vset.pattern.permute.xlu0 0
    %1034 = vperm.xlu0 %1033, %v132
    %v1035 = vpop.permute.xlu0 %1034
    %1038 = vset.pattern.permute.xlu0 0
    %1039 = vperm.xlu0 %1038, %v133
    %v1040 = vpop.permute.xlu0 %1039
    %1043 = vset.pattern.permute.xlu0 0
    %1044 = vperm.xlu0 %1043, %v134
    %v1045 = vpop.permute.xlu0 %1044
    %1048 = vset.pattern.permute.xlu0 0
    %1049 = vperm.xlu0 %1048, %v135
    %v1050 = vpop.permute.xlu0 %1049
    %1053 = vset.pattern.permute.xlu0 0
    %1054 = vperm.xlu0 %1053, %v136
    %v1055 = vpop.permute.xlu0 %1054
    %1058 = vset.pattern.permute.xlu0 0
    %1059 = vperm.xlu0 %1058, %v137
    %v1060 = vpop.permute.xlu0 %1059
    %1063 = vset.pattern.permute.xlu0 0
    %1064 = vperm.xlu0 %1063, %v138
    %v1065 = vpop.permute.xlu0 %1064
    %1068 = vset.pattern.permute.xlu0 0
    %1069 = vperm.xlu0 %1068, %v139
    %v1070 = vpop.permute.xlu0 %1069
    %1073 = vset.pattern.permute.xlu0 0
    %1074 = vperm.xlu0 %1073, %v140
    %v1075 = vpop.permute.xlu0 %1074
    %v1077 = vmul.f32 %v1000, %v547
    %v1078 = vmul.f32 %v1000, %v612
    %v1079 = vmul.f32 %v1000, %v677
    %v1080 = vmul.f32 %v1000, %v742
    %v1081 = vmul.f32 %v1005, %v550
    %v1082 = vmul.f32 %v1005, %v615
    %v1083 = vmul.f32 %v1005, %v680
    %v1084 = vmul.f32 %v1005, %v745
    %v1085 = vmul.f32 %v1010, %v553
    %v1086 = vmul.f32 %v1010, %v618
    %v1087 = vmul.f32 %v1010, %v683
    %v1088 = vmul.f32 %v1010, %v748
    %v1089 = vmul.f32 %v1015, %v556
    %v1090 = vmul.f32 %v1015, %v621
    %v1091 = vmul.f32 %v1015, %v686
    %v1092 = vmul.f32 %v1015, %v751
    %v1093 = vmul.f32 %v1020, %v559
    %v1094 = vmul.f32 %v1020, %v624
    %v1095 = vmul.f32 %v1020, %v689
    %v1096 = vmul.f32 %v1020, %v754
    %v1097 = vmul.f32 %v1025, %v562
    %v1098 = vmul.f32 %v1025, %v627
    %v1099 = vmul.f32 %v1025, %v692
    %v1100 = vmul.f32 %v1025, %v757
    %v1101 = vmul.f32 %v1030, %v565
    %v1102 = vmul.f32 %v1030, %v630
    %v1103 = vmul.f32 %v1030, %v695
    %v1104 = vmul.f32 %v1030, %v760
    %v1105 = vmul.f32 %v1035, %v568
    %v1106 = vmul.f32 %v1035, %v633
    %v1107 = vmul.f32 %v1035, %v698
    %v1108 = vmul.f32 %v1035, %v763
    %v1109 = vmul.f32 %v1040, %v571
    %v1110 = vmul.f32 %v1040, %v636
    %v1111 = vmul.f32 %v1040, %v701
    %v1112 = vmul.f32 %v1040, %v766
    %v1113 = vmul.f32 %v1045, %v574
    %v1114 = vmul.f32 %v1045, %v639
    %v1115 = vmul.f32 %v1045, %v704
    %v1116 = vmul.f32 %v1045, %v769
    %v1117 = vmul.f32 %v1050, %v577
    %v1118 = vmul.f32 %v1050, %v642
    %v1119 = vmul.f32 %v1050, %v707
    %v1120 = vmul.f32 %v1050, %v772
    %v1121 = vmul.f32 %v1055, %v580
    %v1122 = vmul.f32 %v1055, %v645
    %v1123 = vmul.f32 %v1055, %v710
    %v1124 = vmul.f32 %v1055, %v775
    %v1125 = vmul.f32 %v1060, %v583
    %v1126 = vmul.f32 %v1060, %v648
    %v1127 = vmul.f32 %v1060, %v713
    %v1128 = vmul.f32 %v1060, %v778
    %v1129 = vmul.f32 %v1065, %v586
    %v1130 = vmul.f32 %v1065, %v651
    %v1131 = vmul.f32 %v1065, %v716
    %v1132 = vmul.f32 %v1065, %v781
    %v1133 = vmul.f32 %v1070, %v589
    %v1134 = vmul.f32 %v1070, %v654
    %v1135 = vmul.f32 %v1070, %v719
    %v1136 = vmul.f32 %v1070, %v784
    %v1137 = vmul.f32 %v1075, %v592
    %v1138 = vmul.f32 %v1075, %v657
    %v1139 = vmul.f32 %v1075, %v722
    %v1140 = vmul.f32 %v1075, %v787
    %v1141 = vadd.f32 %v933, %v1077
    %v1142 = vadd.f32 %v934, %v1078
    %v1143 = vadd.f32 %v935, %v1079
    %v1144 = vadd.f32 %v936, %v1080
    %v1145 = vadd.f32 %v937, %v1081
    %v1146 = vadd.f32 %v938, %v1082
    %v1147 = vadd.f32 %v939, %v1083
    %v1148 = vadd.f32 %v940, %v1084
    %v1149 = vadd.f32 %v941, %v1085
    %v1150 = vadd.f32 %v942, %v1086
    %v1151 = vadd.f32 %v943, %v1087
    %v1152 = vadd.f32 %v944, %v1088
    %v1153 = vadd.f32 %v945, %v1089
    %v1154 = vadd.f32 %v946, %v1090
    %v1155 = vadd.f32 %v947, %v1091
    %v1156 = vadd.f32 %v948, %v1092
    %v1157 = vadd.f32 %v949, %v1093
    %v1158 = vadd.f32 %v950, %v1094
    %v1159 = vadd.f32 %v951, %v1095
    %v1160 = vadd.f32 %v952, %v1096
    %v1161 = vadd.f32 %v953, %v1097
    %v1162 = vadd.f32 %v954, %v1098
    %v1163 = vadd.f32 %v955, %v1099
    %v1164 = vadd.f32 %v956, %v1100
    %v1165 = vadd.f32 %v957, %v1101
    %v1166 = vadd.f32 %v958, %v1102
    %v1167 = vadd.f32 %v959, %v1103
    %v1168 = vadd.f32 %v960, %v1104
    %v1169 = vadd.f32 %v961, %v1105
    %v1170 = vadd.f32 %v962, %v1106
    %v1171 = vadd.f32 %v963, %v1107
    %v1172 = vadd.f32 %v964, %v1108
    %v1173 = vadd.f32 %v965, %v1109
    %v1174 = vadd.f32 %v966, %v1110
    %v1175 = vadd.f32 %v967, %v1111
    %v1176 = vadd.f32 %v968, %v1112
    %v1177 = vadd.f32 %v969, %v1113
    %v1178 = vadd.f32 %v970, %v1114
    %v1179 = vadd.f32 %v971, %v1115
    %v1180 = vadd.f32 %v972, %v1116
    %v1181 = vadd.f32 %v973, %v1117
    %v1182 = vadd.f32 %v974, %v1118
    %v1183 = vadd.f32 %v975, %v1119
    %v1184 = vadd.f32 %v976, %v1120
    %v1185 = vadd.f32 %v977, %v1121
    %v1186 = vadd.f32 %v978, %v1122
    %v1187 = vadd.f32 %v979, %v1123
    %v1188 = vadd.f32 %v980, %v1124
    %v1189 = vadd.f32 %v981, %v1125
    %v1190 = vadd.f32 %v982, %v1126
    %v1191 = vadd.f32 %v983, %v1127
    %v1192 = vadd.f32 %v984, %v1128
    %v1193 = vadd.f32 %v985, %v1129
    %v1194 = vadd.f32 %v986, %v1130
    %v1195 = vadd.f32 %v987, %v1131
    %v1196 = vadd.f32 %v988, %v1132
    %v1197 = vadd.f32 %v989, %v1133
    %v1198 = vadd.f32 %v990, %v1134
    %v1199 = vadd.f32 %v991, %v1135
    %v1200 = vadd.f32 %v992, %v1136
    %v1201 = vadd.f32 %v993, %v1137
    %v1202 = vadd.f32 %v994, %v1138
    %v1203 = vadd.f32 %v995, %v1139
    %v1204 = vadd.f32 %v996, %v1140
    %s1205 = scalar_lea.vmem [#allocation5], 512
    %v1206 = vld [vmem:[%s1205] sm:$0xff]
    %v1207 = vld [vmem:[%s1205 + $0x8] sm:$0xff]
    %v1208 = vld [vmem:[%s1205 + $0x10] sm:$0xff]
    %v1209 = vld [vmem:[%s1205 + $0x18] sm:$0xff]
    %v1210 = vld [vmem:[%s1205 + $0x20] sm:$0xff]
    %v1211 = vld [vmem:[%s1205 + $0x28] sm:$0xff]
    %v1212 = vld [vmem:[%s1205 + $0x30] sm:$0xff]
    %v1213 = vld [vmem:[%s1205 + $0x38] sm:$0xff]
    %v1214 = vld [vmem:[%s1205 + $0x40] sm:$0xff]
    %v1215 = vld [vmem:[%s1205 + $0x48] sm:$0xff]
    %v1216 = vld [vmem:[%s1205 + $0x50] sm:$0xff]
    %v1217 = vld [vmem:[%s1205 + $0x58] sm:$0xff]
    %v1218 = vld [vmem:[%s1205 + $0x60] sm:$0xff]
    %v1219 = vld [vmem:[%s1205 + $0x68] sm:$0xff]
    %v1220 = vld [vmem:[%s1205 + $0x70] sm:$0xff]
    %v1221 = vld [vmem:[%s1205 + $0x78] sm:$0xff]
    %v1222 = vld [vmem:[%s1205 + $0x80] sm:$0xff]
    %v1223 = vld [vmem:[%s1205 + $0x88] sm:$0xff]
    %v1224 = vld [vmem:[%s1205 + $0x90] sm:$0xff]
    %v1225 = vld [vmem:[%s1205 + $0x98] sm:$0xff]
    %v1226 = vld [vmem:[%s1205 + $0xa0] sm:$0xff]
    %v1227 = vld [vmem:[%s1205 + $0xa8] sm:$0xff]
    %v1228 = vld [vmem:[%s1205 + $0xb0] sm:$0xff]
    %v1229 = vld [vmem:[%s1205 + $0xb8] sm:$0xff]
    %v1230 = vld [vmem:[%s1205 + $0xc0] sm:$0xff]
    %v1231 = vld [vmem:[%s1205 + $0xc8] sm:$0xff]
    %v1232 = vld [vmem:[%s1205 + $0xd0] sm:$0xff]
    %v1233 = vld [vmem:[%s1205 + $0xd8] sm:$0xff]
    %v1234 = vld [vmem:[%s1205 + $0xe0] sm:$0xff]
    %v1235 = vld [vmem:[%s1205 + $0xe8] sm:$0xff]
    %v1236 = vld [vmem:[%s1205 + $0xf0] sm:$0xff]
    %v1237 = vld [vmem:[%s1205 + $0xf8] sm:$0xff]
    %v1238 = vld [vmem:[%s1205 + $0x100] sm:$0xff]
    %v1239 = vld [vmem:[%s1205 + $0x108] sm:$0xff]
    %v1240 = vld [vmem:[%s1205 + $0x110] sm:$0xff]
    %v1241 = vld [vmem:[%s1205 + $0x118] sm:$0xff]
    %v1242 = vld [vmem:[%s1205 + $0x120] sm:$0xff]
    %v1243 = vld [vmem:[%s1205 + $0x128] sm:$0xff]
    %v1244 = vld [vmem:[%s1205 + $0x130] sm:$0xff]
    %v1245 = vld [vmem:[%s1205 + $0x138] sm:$0xff]
    %v1246 = vld [vmem:[%s1205 + $0x140] sm:$0xff]
    %v1247 = vld [vmem:[%s1205 + $0x148] sm:$0xff]
    %v1248 = vld [vmem:[%s1205 + $0x150] sm:$0xff]
    %v1249 = vld [vmem:[%s1205 + $0x158] sm:$0xff]
    %v1250 = vld [vmem:[%s1205 + $0x160] sm:$0xff]
    %v1251 = vld [vmem:[%s1205 + $0x168] sm:$0xff]
    %v1252 = vld [vmem:[%s1205 + $0x170] sm:$0xff]
    %v1253 = vld [vmem:[%s1205 + $0x178] sm:$0xff]
    %v1254 = vld [vmem:[%s1205 + $0x180] sm:$0xff]
    %v1255 = vld [vmem:[%s1205 + $0x188] sm:$0xff]
    %v1256 = vld [vmem:[%s1205 + $0x190] sm:$0xff]
    %v1257 = vld [vmem:[%s1205 + $0x198] sm:$0xff]
    %v1258 = vld [vmem:[%s1205 + $0x1a0] sm:$0xff]
    %v1259 = vld [vmem:[%s1205 + $0x1a8] sm:$0xff]
    %v1260 = vld [vmem:[%s1205 + $0x1b0] sm:$0xff]
    %v1261 = vld [vmem:[%s1205 + $0x1b8] sm:$0xff]
    %v1262 = vld [vmem:[%s1205 + $0x1c0] sm:$0xff]
    %v1263 = vld [vmem:[%s1205 + $0x1c8] sm:$0xff]
    %v1264 = vld [vmem:[%s1205 + $0x1d0] sm:$0xff]
    %v1265 = vld [vmem:[%s1205 + $0x1d8] sm:$0xff]
    %v1266 = vld [vmem:[%s1205 + $0x1e0] sm:$0xff]
    %v1267 = vld [vmem:[%s1205 + $0x1e8] sm:$0xff]
    %v1268 = vld [vmem:[%s1205 + $0x1f0] sm:$0xff]
    %v1269 = vld [vmem:[%s1205 + $0x1f8] sm:$0xff]
    %1270 = vmatpush.msra.mxu0 %v1266
    %1271 = vmatpush.msra.mxu0 %v1262
    %1272 = vmatpush.msra.mxu0 %v1258
    %1273 = vmatpush.msra.mxu0 %v1254
    %1274 = vmatpush.msra.mxu0 %v1250
    %1275 = vmatpush.msra.mxu0 %v1246
    %1276 = vmatpush.msra.mxu0 %v1242
    %1277 = vmatpush.msra.mxu0 %v1238
    %1278 = vmatpush.msra.mxu0 %v1234
    %1279 = vmatpush.msra.mxu0 %v1230
    %1280 = vmatpush.msra.mxu0 %v1226
    %1281 = vmatpush.msra.mxu0 %v1222
    %1282 = vmatpush.msra.mxu0 %v1218
    %1283 = vmatpush.msra.mxu0 %v1214
    %1284 = vmatpush.msra.mxu0 %v1210
    %1285 = vmatpush.msra.mxu0 %v1206
    %1286 = vmatmul.f32.gmra.mxu0 %v77
    %v1287 = vpop.f32.mrf.mxu0
    %v1288 = vadd.f32 0.0, %v1287
    %1289 = vmatmul.f32.gmra.mxu0 %v78
    %v1290 = vpop.f32.mrf.mxu0
    %v1291 = vadd.f32 0.0, %v1290
    %1292 = vmatmul.f32.gmra.mxu0 %v79
    %v1293 = vpop.f32.mrf.mxu0
    %v1294 = vadd.f32 0.0, %v1293
    %1295 = vmatmul.f32.gmra.mxu0 %v80
    %v1296 = vpop.f32.mrf.mxu0
    %v1297 = vadd.f32 0.0, %v1296
    %1298 = vmatmul.f32.gmra.mxu0 %v81
    %v1299 = vpop.f32.mrf.mxu0
    %v1300 = vadd.f32 0.0, %v1299
    %1301 = vmatmul.f32.gmra.mxu0 %v82
    %v1302 = vpop.f32.mrf.mxu0
    %v1303 = vadd.f32 0.0, %v1302
    %1304 = vmatmul.f32.gmra.mxu0 %v83
    %v1305 = vpop.f32.mrf.mxu0
    %v1306 = vadd.f32 0.0, %v1305
    %1307 = vmatmul.f32.gmra.mxu0 %v84
    %v1308 = vpop.f32.mrf.mxu0
    %v1309 = vadd.f32 0.0, %v1308
    %1310 = vmatmul.f32.gmra.mxu0 %v85
    %v1311 = vpop.f32.mrf.mxu0
    %v1312 = vadd.f32 0.0, %v1311
    %1313 = vmatmul.f32.gmra.mxu0 %v86
    %v1314 = vpop.f32.mrf.mxu0
    %v1315 = vadd.f32 0.0, %v1314
    %1316 = vmatmul.f32.gmra.mxu0 %v87
    %v1317 = vpop.f32.mrf.mxu0
    %v1318 = vadd.f32 0.0, %v1317
    %1319 = vmatmul.f32.gmra.mxu0 %v88
    %v1320 = vpop.f32.mrf.mxu0
    %v1321 = vadd.f32 0.0, %v1320
    %1322 = vmatmul.f32.gmra.mxu0 %v89
    %v1323 = vpop.f32.mrf.mxu0
    %v1324 = vadd.f32 0.0, %v1323
    %1325 = vmatmul.f32.gmra.mxu0 %v90
    %v1326 = vpop.f32.mrf.mxu0
    %v1327 = vadd.f32 0.0, %v1326
    %1328 = vmatmul.f32.gmra.mxu0 %v91
    %v1329 = vpop.f32.mrf.mxu0
    %v1330 = vadd.f32 0.0, %v1329
    %1331 = vmatmul.f32.gmra.mxu0 %v92
    %v1332 = vpop.f32.mrf.mxu0
    %v1333 = vadd.f32 0.0, %v1332
    %1334 = vdwg.mxu0
    %1335 = vmatpush.msra.mxu0 %v1267
    %1336 = vmatpush.msra.mxu0 %v1263
    %1337 = vmatpush.msra.mxu0 %v1259
    %1338 = vmatpush.msra.mxu0 %v1255
    %1339 = vmatpush.msra.mxu0 %v1251
    %1340 = vmatpush.msra.mxu0 %v1247
    %1341 = vmatpush.msra.mxu0 %v1243
    %1342 = vmatpush.msra.mxu0 %v1239
    %1343 = vmatpush.msra.mxu0 %v1235
    %1344 = vmatpush.msra.mxu0 %v1231
    %1345 = vmatpush.msra.mxu0 %v1227
    %1346 = vmatpush.msra.mxu0 %v1223
    %1347 = vmatpush.msra.mxu0 %v1219
    %1348 = vmatpush.msra.mxu0 %v1215
    %1349 = vmatpush.msra.mxu0 %v1211
    %1350 = vmatpush.msra.mxu0 %v1207
    %1351 = vmatmul.f32.gmra.mxu0 %v77
    %v1352 = vpop.f32.mrf.mxu0
    %v1353 = vadd.f32 0.0, %v1352
    %1354 = vmatmul.f32.gmra.mxu0 %v78
    %v1355 = vpop.f32.mrf.mxu0
    %v1356 = vadd.f32 0.0, %v1355
    %1357 = vmatmul.f32.gmra.mxu0 %v79
    %v1358 = vpop.f32.mrf.mxu0
    %v1359 = vadd.f32 0.0, %v1358
    %1360 = vmatmul.f32.gmra.mxu0 %v80
    %v1361 = vpop.f32.mrf.mxu0
    %v1362 = vadd.f32 0.0, %v1361
    %1363 = vmatmul.f32.gmra.mxu0 %v81
    %v1364 = vpop.f32.mrf.mxu0
    %v1365 = vadd.f32 0.0, %v1364
    %1366 = vmatmul.f32.gmra.mxu0 %v82
    %v1367 = vpop.f32.mrf.mxu0
    %v1368 = vadd.f32 0.0, %v1367
    %1369 = vmatmul.f32.gmra.mxu0 %v83
    %v1370 = vpop.f32.mrf.mxu0
    %v1371 = vadd.f32 0.0, %v1370
    %1372 = vmatmul.f32.gmra.mxu0 %v84
    %v1373 = vpop.f32.mrf.mxu0
    %v1374 = vadd.f32 0.0, %v1373
    %1375 = vmatmul.f32.gmra.mxu0 %v85
    %v1376 = vpop.f32.mrf.mxu0
    %v1377 = vadd.f32 0.0, %v1376
    %1378 = vmatmul.f32.gmra.mxu0 %v86
    %v1379 = vpop.f32.mrf.mxu0
    %v1380 = vadd.f32 0.0, %v1379
    %1381 = vmatmul.f32.gmra.mxu0 %v87
    %v1382 = vpop.f32.mrf.mxu0
    %v1383 = vadd.f32 0.0, %v1382
    %1384 = vmatmul.f32.gmra.mxu0 %v88
    %v1385 = vpop.f32.mrf.mxu0
    %v1386 = vadd.f32 0.0, %v1385
    %1387 = vmatmul.f32.gmra.mxu0 %v89
    %v1388 = vpop.f32.mrf.mxu0
    %v1389 = vadd.f32 0.0, %v1388
    %1390 = vmatmul.f32.gmra.mxu0 %v90
    %v1391 = vpop.f32.mrf.mxu0
    %v1392 = vadd.f32 0.0, %v1391
    %1393 = vmatmul.f32.gmra.mxu0 %v91
    %v1394 = vpop.f32.mrf.mxu0
    %v1395 = vadd.f32 0.0, %v1394
    %1396 = vmatmul.f32.gmra.mxu0 %v92
    %v1397 = vpop.f32.mrf.mxu0
    %v1398 = vadd.f32 0.0, %v1397
    %1399 = vdwg.mxu0
    %1400 = vmatpush.msra.mxu0 %v1268
    %1401 = vmatpush.msra.mxu0 %v1264
    %1402 = vmatpush.msra.mxu0 %v1260
    %1403 = vmatpush.msra.mxu0 %v1256
    %1404 = vmatpush.msra.mxu0 %v1252
    %1405 = vmatpush.msra.mxu0 %v1248
    %1406 = vmatpush.msra.mxu0 %v1244
    %1407 = vmatpush.msra.mxu0 %v1240
    %1408 = vmatpush.msra.mxu0 %v1236
    %1409 = vmatpush.msra.mxu0 %v1232
    %1410 = vmatpush.msra.mxu0 %v1228
    %1411 = vmatpush.msra.mxu0 %v1224
    %1412 = vmatpush.msra.mxu0 %v1220
    %1413 = vmatpush.msra.mxu0 %v1216
    %1414 = vmatpush.msra.mxu0 %v1212
    %1415 = vmatpush.msra.mxu0 %v1208
    %1416 = vmatmul.f32.gmra.mxu0 %v77
    %v1417 = vpop.f32.mrf.mxu0
    %v1418 = vadd.f32 0.0, %v1417
    %1419 = vmatmul.f32.gmra.mxu0 %v78
    %v1420 = vpop.f32.mrf.mxu0
    %v1421 = vadd.f32 0.0, %v1420
    %1422 = vmatmul.f32.gmra.mxu0 %v79
    %v1423 = vpop.f32.mrf.mxu0
    %v1424 = vadd.f32 0.0, %v1423
    %1425 = vmatmul.f32.gmra.mxu0 %v80
    %v1426 = vpop.f32.mrf.mxu0
    %v1427 = vadd.f32 0.0, %v1426
    %1428 = vmatmul.f32.gmra.mxu0 %v81
    %v1429 = vpop.f32.mrf.mxu0
    %v1430 = vadd.f32 0.0, %v1429
    %1431 = vmatmul.f32.gmra.mxu0 %v82
    %v1432 = vpop.f32.mrf.mxu0
    %v1433 = vadd.f32 0.0, %v1432
    %1434 = vmatmul.f32.gmra.mxu0 %v83
    %v1435 = vpop.f32.mrf.mxu0
    %v1436 = vadd.f32 0.0, %v1435
    %1437 = vmatmul.f32.gmra.mxu0 %v84
    %v1438 = vpop.f32.mrf.mxu0
    %v1439 = vadd.f32 0.0, %v1438
    %1440 = vmatmul.f32.gmra.mxu0 %v85
    %v1441 = vpop.f32.mrf.mxu0
    %v1442 = vadd.f32 0.0, %v1441
    %1443 = vmatmul.f32.gmra.mxu0 %v86
    %v1444 = vpop.f32.mrf.mxu0
    %v1445 = vadd.f32 0.0, %v1444
    %1446 = vmatmul.f32.gmra.mxu0 %v87
    %v1447 = vpop.f32.mrf.mxu0
    %v1448 = vadd.f32 0.0, %v1447
    %1449 = vmatmul.f32.gmra.mxu0 %v88
    %v1450 = vpop.f32.mrf.mxu0
    %v1451 = vadd.f32 0.0, %v1450
    %1452 = vmatmul.f32.gmra.mxu0 %v89
    %v1453 = vpop.f32.mrf.mxu0
    %v1454 = vadd.f32 0.0, %v1453
    %1455 = vmatmul.f32.gmra.mxu0 %v90
    %v1456 = vpop.f32.mrf.mxu0
    %v1457 = vadd.f32 0.0, %v1456
    %1458 = vmatmul.f32.gmra.mxu0 %v91
    %v1459 = vpop.f32.mrf.mxu0
    %v1460 = vadd.f32 0.0, %v1459
    %1461 = vmatmul.f32.gmra.mxu0 %v92
    %v1462 = vpop.f32.mrf.mxu0
    %v1463 = vadd.f32 0.0, %v1462
    %1464 = vdwg.mxu0
    %1465 = vmatpush.msra.mxu0 %v1269
    %1466 = vmatpush.msra.mxu0 %v1265
    %1467 = vmatpush.msra.mxu0 %v1261
    %1468 = vmatpush.msra.mxu0 %v1257
    %1469 = vmatpush.msra.mxu0 %v1253
    %1470 = vmatpush.msra.mxu0 %v1249
    %1471 = vmatpush.msra.mxu0 %v1245
    %1472 = vmatpush.msra.mxu0 %v1241
    %1473 = vmatpush.msra.mxu0 %v1237
    %1474 = vmatpush.msra.mxu0 %v1233
    %1475 = vmatpush.msra.mxu0 %v1229
    %1476 = vmatpush.msra.mxu0 %v1225
    %1477 = vmatpush.msra.mxu0 %v1221
    %1478 = vmatpush.msra.mxu0 %v1217
    %1479 = vmatpush.msra.mxu0 %v1213
    %1480 = vmatpush.msra.mxu0 %v1209
    %1481 = vmatmul.f32.gmra.mxu0 %v77
    %v1482 = vpop.f32.mrf.mxu0
    %v1483 = vadd.f32 0.0, %v1482
    %1484 = vmatmul.f32.gmra.mxu0 %v78
    %v1485 = vpop.f32.mrf.mxu0
    %v1486 = vadd.f32 0.0, %v1485
    %1487 = vmatmul.f32.gmra.mxu0 %v79
    %v1488 = vpop.f32.mrf.mxu0
    %v1489 = vadd.f32 0.0, %v1488
    %1490 = vmatmul.f32.gmra.mxu0 %v80
    %v1491 = vpop.f32.mrf.mxu0
    %v1492 = vadd.f32 0.0, %v1491
    %1493 = vmatmul.f32.gmra.mxu0 %v81
    %v1494 = vpop.f32.mrf.mxu0
    %v1495 = vadd.f32 0.0, %v1494
    %1496 = vmatmul.f32.gmra.mxu0 %v82
    %v1497 = vpop.f32.mrf.mxu0
    %v1498 = vadd.f32 0.0, %v1497
    %1499 = vmatmul.f32.gmra.mxu0 %v83
    %v1500 = vpop.f32.mrf.mxu0
    %v1501 = vadd.f32 0.0, %v1500
    %1502 = vmatmul.f32.gmra.mxu0 %v84
    %v1503 = vpop.f32.mrf.mxu0
    %v1504 = vadd.f32 0.0, %v1503
    %1505 = vmatmul.f32.gmra.mxu0 %v85
    %v1506 = vpop.f32.mrf.mxu0
    %v1507 = vadd.f32 0.0, %v1506
    %1508 = vmatmul.f32.gmra.mxu0 %v86
    %v1509 = vpop.f32.mrf.mxu0
    %v1510 = vadd.f32 0.0, %v1509
    %1511 = vmatmul.f32.gmra.mxu0 %v87
    %v1512 = vpop.f32.mrf.mxu0
    %v1513 = vadd.f32 0.0, %v1512
    %1514 = vmatmul.f32.gmra.mxu0 %v88
    %v1515 = vpop.f32.mrf.mxu0
    %v1516 = vadd.f32 0.0, %v1515
    %1517 = vmatmul.f32.gmra.mxu0 %v89
    %v1518 = vpop.f32.mrf.mxu0
    %v1519 = vadd.f32 0.0, %v1518
    %1520 = vmatmul.f32.gmra.mxu0 %v90
    %v1521 = vpop.f32.mrf.mxu0
    %v1522 = vadd.f32 0.0, %v1521
    %1523 = vmatmul.f32.gmra.mxu0 %v91
    %v1524 = vpop.f32.mrf.mxu0
    %v1525 = vadd.f32 0.0, %v1524
    %1526 = vmatmul.f32.gmra.mxu0 %v92
    %v1527 = vpop.f32.mrf.mxu0
    %v1528 = vadd.f32 0.0, %v1527
    %1529 = vdwg.mxu0
    %s1530 = scalar_lea.vmem [#allocation7], 512
    %v1531 = vld [vmem:[%s1530] sm:$0xff]
    %v1532 = vld [vmem:[%s1530 + $0x8] sm:$0xff]
    %v1533 = vld [vmem:[%s1530 + $0x10] sm:$0xff]
    %v1534 = vld [vmem:[%s1530 + $0x18] sm:$0xff]
    %v1535 = vld [vmem:[%s1530 + $0x20] sm:$0xff]
    %v1536 = vld [vmem:[%s1530 + $0x28] sm:$0xff]
    %v1537 = vld [vmem:[%s1530 + $0x30] sm:$0xff]
    %v1538 = vld [vmem:[%s1530 + $0x38] sm:$0xff]
    %v1539 = vld [vmem:[%s1530 + $0x40] sm:$0xff]
    %v1540 = vld [vmem:[%s1530 + $0x48] sm:$0xff]
    %v1541 = vld [vmem:[%s1530 + $0x50] sm:$0xff]
    %v1542 = vld [vmem:[%s1530 + $0x58] sm:$0xff]
    %v1543 = vld [vmem:[%s1530 + $0x60] sm:$0xff]
    %v1544 = vld [vmem:[%s1530 + $0x68] sm:$0xff]
    %v1545 = vld [vmem:[%s1530 + $0x70] sm:$0xff]
    %v1546 = vld [vmem:[%s1530 + $0x78] sm:$0xff]
    %v1547 = vld [vmem:[%s1530 + $0x80] sm:$0xff]
    %v1548 = vld [vmem:[%s1530 + $0x88] sm:$0xff]
    %v1549 = vld [vmem:[%s1530 + $0x90] sm:$0xff]
    %v1550 = vld [vmem:[%s1530 + $0x98] sm:$0xff]
    %v1551 = vld [vmem:[%s1530 + $0xa0] sm:$0xff]
    %v1552 = vld [vmem:[%s1530 + $0xa8] sm:$0xff]
    %v1553 = vld [vmem:[%s1530 + $0xb0] sm:$0xff]
    %v1554 = vld [vmem:[%s1530 + $0xb8] sm:$0xff]
    %v1555 = vld [vmem:[%s1530 + $0xc0] sm:$0xff]
    %v1556 = vld [vmem:[%s1530 + $0xc8] sm:$0xff]
    %v1557 = vld [vmem:[%s1530 + $0xd0] sm:$0xff]
    %v1558 = vld [vmem:[%s1530 + $0xd8] sm:$0xff]
    %v1559 = vld [vmem:[%s1530 + $0xe0] sm:$0xff]
    %v1560 = vld [vmem:[%s1530 + $0xe8] sm:$0xff]
    %v1561 = vld [vmem:[%s1530 + $0xf0] sm:$0xff]
    %v1562 = vld [vmem:[%s1530 + $0xf8] sm:$0xff]
    %v1563 = vld [vmem:[%s1530 + $0x100] sm:$0xff]
    %v1564 = vld [vmem:[%s1530 + $0x108] sm:$0xff]
    %v1565 = vld [vmem:[%s1530 + $0x110] sm:$0xff]
    %v1566 = vld [vmem:[%s1530 + $0x118] sm:$0xff]
    %v1567 = vld [vmem:[%s1530 + $0x120] sm:$0xff]
    %v1568 = vld [vmem:[%s1530 + $0x128] sm:$0xff]
    %v1569 = vld [vmem:[%s1530 + $0x130] sm:$0xff]
    %v1570 = vld [vmem:[%s1530 + $0x138] sm:$0xff]
    %v1571 = vld [vmem:[%s1530 + $0x140] sm:$0xff]
    %v1572 = vld [vmem:[%s1530 + $0x148] sm:$0xff]
    %v1573 = vld [vmem:[%s1530 + $0x150] sm:$0xff]
    %v1574 = vld [vmem:[%s1530 + $0x158] sm:$0xff]
    %v1575 = vld [vmem:[%s1530 + $0x160] sm:$0xff]
    %v1576 = vld [vmem:[%s1530 + $0x168] sm:$0xff]
    %v1577 = vld [vmem:[%s1530 + $0x170] sm:$0xff]
    %v1578 = vld [vmem:[%s1530 + $0x178] sm:$0xff]
    %v1579 = vld [vmem:[%s1530 + $0x180] sm:$0xff]
    %v1580 = vld [vmem:[%s1530 + $0x188] sm:$0xff]
    %v1581 = vld [vmem:[%s1530 + $0x190] sm:$0xff]
    %v1582 = vld [vmem:[%s1530 + $0x198] sm:$0xff]
    %v1583 = vld [vmem:[%s1530 + $0x1a0] sm:$0xff]
    %v1584 = vld [vmem:[%s1530 + $0x1a8] sm:$0xff]
    %v1585 = vld [vmem:[%s1530 + $0x1b0] sm:$0xff]
    %v1586 = vld [vmem:[%s1530 + $0x1b8] sm:$0xff]
    %v1587 = vld [vmem:[%s1530 + $0x1c0] sm:$0xff]
    %v1588 = vld [vmem:[%s1530 + $0x1c8] sm:$0xff]
    %v1589 = vld [vmem:[%s1530 + $0x1d0] sm:$0xff]
    %v1590 = vld [vmem:[%s1530 + $0x1d8] sm:$0xff]
    %v1591 = vld [vmem:[%s1530 + $0x1e0] sm:$0xff]
    %v1592 = vld [vmem:[%s1530 + $0x1e8] sm:$0xff]
    %v1593 = vld [vmem:[%s1530 + $0x1f0] sm:$0xff]
    %v1594 = vld [vmem:[%s1530 + $0x1f8] sm:$0xff]
    %1595 = vmatpush.msra.mxu0 %v1591
    %1596 = vmatpush.msra.mxu0 %v1587
    %1597 = vmatpush.msra.mxu0 %v1583
    %1598 = vmatpush.msra.mxu0 %v1579
    %1599 = vmatpush.msra.mxu0 %v1575
    %1600 = vmatpush.msra.mxu0 %v1571
    %1601 = vmatpush.msra.mxu0 %v1567
    %1602 = vmatpush.msra.mxu0 %v1563
    %1603 = vmatpush.msra.mxu0 %v1559
    %1604 = vmatpush.msra.mxu0 %v1555
    %1605 = vmatpush.msra.mxu0 %v1551
    %1606 = vmatpush.msra.mxu0 %v1547
    %1607 = vmatpush.msra.mxu0 %v1543
    %1608 = vmatpush.msra.mxu0 %v1539
    %1609 = vmatpush.msra.mxu0 %v1535
    %1610 = vmatpush.msra.mxu0 %v1531
    %1611 = vmatmul.f32.gmra.mxu0 %v93
    %v1612 = vpop.f32.mrf.mxu0
    %v1613 = vadd.f32 0.0, %v1612
    %1614 = vmatmul.f32.gmra.mxu0 %v94
    %v1615 = vpop.f32.mrf.mxu0
    %v1616 = vadd.f32 0.0, %v1615
    %1617 = vmatmul.f32.gmra.mxu0 %v95
    %v1618 = vpop.f32.mrf.mxu0
    %v1619 = vadd.f32 0.0, %v1618
    %1620 = vmatmul.f32.gmra.mxu0 %v96
    %v1621 = vpop.f32.mrf.mxu0
    %v1622 = vadd.f32 0.0, %v1621
    %1623 = vmatmul.f32.gmra.mxu0 %v97
    %v1624 = vpop.f32.mrf.mxu0
    %v1625 = vadd.f32 0.0, %v1624
    %1626 = vmatmul.f32.gmra.mxu0 %v98
    %v1627 = vpop.f32.mrf.mxu0
    %v1628 = vadd.f32 0.0, %v1627
    %1629 = vmatmul.f32.gmra.mxu0 %v99
    %v1630 = vpop.f32.mrf.mxu0
    %v1631 = vadd.f32 0.0, %v1630
    %1632 = vmatmul.f32.gmra.mxu0 %v100
    %v1633 = vpop.f32.mrf.mxu0
    %v1634 = vadd.f32 0.0, %v1633
    %1635 = vmatmul.f32.gmra.mxu0 %v101
    %v1636 = vpop.f32.mrf.mxu0
    %v1637 = vadd.f32 0.0, %v1636
    %1638 = vmatmul.f32.gmra.mxu0 %v102
    %v1639 = vpop.f32.mrf.mxu0
    %v1640 = vadd.f32 0.0, %v1639
    %1641 = vmatmul.f32.gmra.mxu0 %v103
    %v1642 = vpop.f32.mrf.mxu0
    %v1643 = vadd.f32 0.0, %v1642
    %1644 = vmatmul.f32.gmra.mxu0 %v104
    %v1645 = vpop.f32.mrf.mxu0
    %v1646 = vadd.f32 0.0, %v1645
    %1647 = vmatmul.f32.gmra.mxu0 %v105
    %v1648 = vpop.f32.mrf.mxu0
    %v1649 = vadd.f32 0.0, %v1648
    %1650 = vmatmul.f32.gmra.mxu0 %v106
    %v1651 = vpop.f32.mrf.mxu0
    %v1652 = vadd.f32 0.0, %v1651
    %1653 = vmatmul.f32.gmra.mxu0 %v107
    %v1654 = vpop.f32.mrf.mxu0
    %v1655 = vadd.f32 0.0, %v1654
    %1656 = vmatmul.f32.gmra.mxu0 %v108
    %v1657 = vpop.f32.mrf.mxu0
    %v1658 = vadd.f32 0.0, %v1657
    %1659 = vdwg.mxu0
    %1660 = vmatpush.msra.mxu0 %v1592
    %1661 = vmatpush.msra.mxu0 %v1588
    %1662 = vmatpush.msra.mxu0 %v1584
    %1663 = vmatpush.msra.mxu0 %v1580
    %1664 = vmatpush.msra.mxu0 %v1576
    %1665 = vmatpush.msra.mxu0 %v1572
    %1666 = vmatpush.msra.mxu0 %v1568
    %1667 = vmatpush.msra.mxu0 %v1564
    %1668 = vmatpush.msra.mxu0 %v1560
    %1669 = vmatpush.msra.mxu0 %v1556
    %1670 = vmatpush.msra.mxu0 %v1552
    %1671 = vmatpush.msra.mxu0 %v1548
    %1672 = vmatpush.msra.mxu0 %v1544
    %1673 = vmatpush.msra.mxu0 %v1540
    %1674 = vmatpush.msra.mxu0 %v1536
    %1675 = vmatpush.msra.mxu0 %v1532
    %1676 = vmatmul.f32.gmra.mxu0 %v93
    %v1677 = vpop.f32.mrf.mxu0
    %v1678 = vadd.f32 0.0, %v1677
    %1679 = vmatmul.f32.gmra.mxu0 %v94
    %v1680 = vpop.f32.mrf.mxu0
    %v1681 = vadd.f32 0.0, %v1680
    %1682 = vmatmul.f32.gmra.mxu0 %v95
    %v1683 = vpop.f32.mrf.mxu0
    %v1684 = vadd.f32 0.0, %v1683
    %1685 = vmatmul.f32.gmra.mxu0 %v96
    %v1686 = vpop.f32.mrf.mxu0
    %v1687 = vadd.f32 0.0, %v1686
    %1688 = vmatmul.f32.gmra.mxu0 %v97
    %v1689 = vpop.f32.mrf.mxu0
    %v1690 = vadd.f32 0.0, %v1689
    %1691 = vmatmul.f32.gmra.mxu0 %v98
    %v1692 = vpop.f32.mrf.mxu0
    %v1693 = vadd.f32 0.0, %v1692
    %1694 = vmatmul.f32.gmra.mxu0 %v99
    %v1695 = vpop.f32.mrf.mxu0
    %v1696 = vadd.f32 0.0, %v1695
    %1697 = vmatmul.f32.gmra.mxu0 %v100
    %v1698 = vpop.f32.mrf.mxu0
    %v1699 = vadd.f32 0.0, %v1698
    %1700 = vmatmul.f32.gmra.mxu0 %v101
    %v1701 = vpop.f32.mrf.mxu0
    %v1702 = vadd.f32 0.0, %v1701
    %1703 = vmatmul.f32.gmra.mxu0 %v102
    %v1704 = vpop.f32.mrf.mxu0
    %v1705 = vadd.f32 0.0, %v1704
    %1706 = vmatmul.f32.gmra.mxu0 %v103
    %v1707 = vpop.f32.mrf.mxu0
    %v1708 = vadd.f32 0.0, %v1707
    %1709 = vmatmul.f32.gmra.mxu0 %v104
    %v1710 = vpop.f32.mrf.mxu0
    %v1711 = vadd.f32 0.0, %v1710
    %1712 = vmatmul.f32.gmra.mxu0 %v105
    %v1713 = vpop.f32.mrf.mxu0
    %v1714 = vadd.f32 0.0, %v1713
    %1715 = vmatmul.f32.gmra.mxu0 %v106
    %v1716 = vpop.f32.mrf.mxu0
    %v1717 = vadd.f32 0.0, %v1716
    %1718 = vmatmul.f32.gmra.mxu0 %v107
    %v1719 = vpop.f32.mrf.mxu0
    %v1720 = vadd.f32 0.0, %v1719
    %1721 = vmatmul.f32.gmra.mxu0 %v108
    %v1722 = vpop.f32.mrf.mxu0
    %v1723 = vadd.f32 0.0, %v1722
    %1724 = vdwg.mxu0
    %1725 = vmatpush.msra.mxu0 %v1593
    %1726 = vmatpush.msra.mxu0 %v1589
    %1727 = vmatpush.msra.mxu0 %v1585
    %1728 = vmatpush.msra.mxu0 %v1581
    %1729 = vmatpush.msra.mxu0 %v1577
    %1730 = vmatpush.msra.mxu0 %v1573
    %1731 = vmatpush.msra.mxu0 %v1569
    %1732 = vmatpush.msra.mxu0 %v1565
    %1733 = vmatpush.msra.mxu0 %v1561
    %1734 = vmatpush.msra.mxu0 %v1557
    %1735 = vmatpush.msra.mxu0 %v1553
    %1736 = vmatpush.msra.mxu0 %v1549
    %1737 = vmatpush.msra.mxu0 %v1545
    %1738 = vmatpush.msra.mxu0 %v1541
    %1739 = vmatpush.msra.mxu0 %v1537
    %1740 = vmatpush.msra.mxu0 %v1533
    %1741 = vmatmul.f32.gmra.mxu0 %v93
    %v1742 = vpop.f32.mrf.mxu0
    %v1743 = vadd.f32 0.0, %v1742
    %1744 = vmatmul.f32.gmra.mxu0 %v94
    %v1745 = vpop.f32.mrf.mxu0
    %v1746 = vadd.f32 0.0, %v1745
    %1747 = vmatmul.f32.gmra.mxu0 %v95
    %v1748 = vpop.f32.mrf.mxu0
    %v1749 = vadd.f32 0.0, %v1748
    %1750 = vmatmul.f32.gmra.mxu0 %v96
    %v1751 = vpop.f32.mrf.mxu0
    %v1752 = vadd.f32 0.0, %v1751
    %1753 = vmatmul.f32.gmra.mxu0 %v97
    %v1754 = vpop.f32.mrf.mxu0
    %v1755 = vadd.f32 0.0, %v1754
    %1756 = vmatmul.f32.gmra.mxu0 %v98
    %v1757 = vpop.f32.mrf.mxu0
    %v1758 = vadd.f32 0.0, %v1757
    %1759 = vmatmul.f32.gmra.mxu0 %v99
    %v1760 = vpop.f32.mrf.mxu0
    %v1761 = vadd.f32 0.0, %v1760
    %1762 = vmatmul.f32.gmra.mxu0 %v100
    %v1763 = vpop.f32.mrf.mxu0
    %v1764 = vadd.f32 0.0, %v1763
    %1765 = vmatmul.f32.gmra.mxu0 %v101
    %v1766 = vpop.f32.mrf.mxu0
    %v1767 = vadd.f32 0.0, %v1766
    %1768 = vmatmul.f32.gmra.mxu0 %v102
    %v1769 = vpop.f32.mrf.mxu0
    %v1770 = vadd.f32 0.0, %v1769
    %1771 = vmatmul.f32.gmra.mxu0 %v103
    %v1772 = vpop.f32.mrf.mxu0
    %v1773 = vadd.f32 0.0, %v1772
    %1774 = vmatmul.f32.gmra.mxu0 %v104
    %v1775 = vpop.f32.mrf.mxu0
    %v1776 = vadd.f32 0.0, %v1775
    %1777 = vmatmul.f32.gmra.mxu0 %v105
    %v1778 = vpop.f32.mrf.mxu0
    %v1779 = vadd.f32 0.0, %v1778
    %1780 = vmatmul.f32.gmra.mxu0 %v106
    %v1781 = vpop.f32.mrf.mxu0
    %v1782 = vadd.f32 0.0, %v1781
    %1783 = vmatmul.f32.gmra.mxu0 %v107
    %v1784 = vpop.f32.mrf.mxu0
    %v1785 = vadd.f32 0.0, %v1784
    %1786 = vmatmul.f32.gmra.mxu0 %v108
    %v1787 = vpop.f32.mrf.mxu0
    %v1788 = vadd.f32 0.0, %v1787
    %1789 = vdwg.mxu0
    %1790 = vmatpush.msra.mxu0 %v1594
    %1791 = vmatpush.msra.mxu0 %v1590
    %1792 = vmatpush.msra.mxu0 %v1586
    %1793 = vmatpush.msra.mxu0 %v1582
    %1794 = vmatpush.msra.mxu0 %v1578
    %1795 = vmatpush.msra.mxu0 %v1574
    %1796 = vmatpush.msra.mxu0 %v1570
    %1797 = vmatpush.msra.mxu0 %v1566
    %1798 = vmatpush.msra.mxu0 %v1562
    %1799 = vmatpush.msra.mxu0 %v1558
    %1800 = vmatpush.msra.mxu0 %v1554
    %1801 = vmatpush.msra.mxu0 %v1550
    %1802 = vmatpush.msra.mxu0 %v1546
    %1803 = vmatpush.msra.mxu0 %v1542
    %1804 = vmatpush.msra.mxu0 %v1538
    %1805 = vmatpush.msra.mxu0 %v1534
    %1806 = vmatmul.f32.gmra.mxu0 %v93
    %v1807 = vpop.f32.mrf.mxu0
    %v1808 = vadd.f32 0.0, %v1807
    %1809 = vmatmul.f32.gmra.mxu0 %v94
    %v1810 = vpop.f32.mrf.mxu0
    %v1811 = vadd.f32 0.0, %v1810
    %1812 = vmatmul.f32.gmra.mxu0 %v95
    %v1813 = vpop.f32.mrf.mxu0
    %v1814 = vadd.f32 0.0, %v1813
    %1815 = vmatmul.f32.gmra.mxu0 %v96
    %v1816 = vpop.f32.mrf.mxu0
    %v1817 = vadd.f32 0.0, %v1816
    %1818 = vmatmul.f32.gmra.mxu0 %v97
    %v1819 = vpop.f32.mrf.mxu0
    %v1820 = vadd.f32 0.0, %v1819
    %1821 = vmatmul.f32.gmra.mxu0 %v98
    %v1822 = vpop.f32.mrf.mxu0
    %v1823 = vadd.f32 0.0, %v1822
    %1824 = vmatmul.f32.gmra.mxu0 %v99
    %v1825 = vpop.f32.mrf.mxu0
    %v1826 = vadd.f32 0.0, %v1825
    %1827 = vmatmul.f32.gmra.mxu0 %v100
    %v1828 = vpop.f32.mrf.mxu0
    %v1829 = vadd.f32 0.0, %v1828
    %1830 = vmatmul.f32.gmra.mxu0 %v101
    %v1831 = vpop.f32.mrf.mxu0
    %v1832 = vadd.f32 0.0, %v1831
    %1833 = vmatmul.f32.gmra.mxu0 %v102
    %v1834 = vpop.f32.mrf.mxu0
    %v1835 = vadd.f32 0.0, %v1834
    %1836 = vmatmul.f32.gmra.mxu0 %v103
    %v1837 = vpop.f32.mrf.mxu0
    %v1838 = vadd.f32 0.0, %v1837
    %1839 = vmatmul.f32.gmra.mxu0 %v104
    %v1840 = vpop.f32.mrf.mxu0
    %v1841 = vadd.f32 0.0, %v1840
    %1842 = vmatmul.f32.gmra.mxu0 %v105
    %v1843 = vpop.f32.mrf.mxu0
    %v1844 = vadd.f32 0.0, %v1843
    %1845 = vmatmul.f32.gmra.mxu0 %v106
    %v1846 = vpop.f32.mrf.mxu0
    %v1847 = vadd.f32 0.0, %v1846
    %1848 = vmatmul.f32.gmra.mxu0 %v107
    %v1849 = vpop.f32.mrf.mxu0
    %v1850 = vadd.f32 0.0, %v1849
    %1851 = vmatmul.f32.gmra.mxu0 %v108
    %v1852 = vpop.f32.mrf.mxu0
    %v1853 = vadd.f32 0.0, %v1852
    %1854 = vdwg.mxu0
    %1855 = vset.pattern.permute.xlu0 1
    %1856 = vperm.xlu0 %1855, %v109
    %v1857 = vpop.permute.xlu0 %1856
    %1859 = vset.pattern.permute.xlu0 1
    %1860 = vperm.xlu0 %1859, %v110
    %v1861 = vpop.permute.xlu0 %1860
    %1863 = vset.pattern.permute.xlu0 1
    %1864 = vperm.xlu0 %1863, %v111
    %v1865 = vpop.permute.xlu0 %1864
    %1867 = vset.pattern.permute.xlu0 1
    %1868 = vperm.xlu0 %1867, %v112
    %v1869 = vpop.permute.xlu0 %1868
    %1871 = vset.pattern.permute.xlu0 1
    %1872 = vperm.xlu0 %1871, %v113
    %v1873 = vpop.permute.xlu0 %1872
    %1875 = vset.pattern.permute.xlu0 1
    %1876 = vperm.xlu0 %1875, %v114
    %v1877 = vpop.permute.xlu0 %1876
    %1879 = vset.pattern.permute.xlu0 1
    %1880 = vperm.xlu0 %1879, %v115
    %v1881 = vpop.permute.xlu0 %1880
    %1883 = vset.pattern.permute.xlu0 1
    %1884 = vperm.xlu0 %1883, %v116
    %v1885 = vpop.permute.xlu0 %1884
    %1887 = vset.pattern.permute.xlu0 1
    %1888 = vperm.xlu0 %1887, %v117
    %v1889 = vpop.permute.xlu0 %1888
    %1891 = vset.pattern.permute.xlu0 1
    %1892 = vperm.xlu0 %1891, %v118
    %v1893 = vpop.permute.xlu0 %1892
    %1895 = vset.pattern.permute.xlu0 1
    %1896 = vperm.xlu0 %1895, %v119
    %v1897 = vpop.permute.xlu0 %1896
    %1899 = vset.pattern.permute.xlu0 1
    %1900 = vperm.xlu0 %1899, %v120
    %v1901 = vpop.permute.xlu0 %1900
    %1903 = vset.pattern.permute.xlu0 1
    %1904 = vperm.xlu0 %1903, %v121
    %v1905 = vpop.permute.xlu0 %1904
    %1907 = vset.pattern.permute.xlu0 1
    %1908 = vperm.xlu0 %1907, %v122
    %v1909 = vpop.permute.xlu0 %1908
    %1911 = vset.pattern.permute.xlu0 1
    %1912 = vperm.xlu0 %1911, %v123
    %v1913 = vpop.permute.xlu0 %1912
    %1915 = vset.pattern.permute.xlu0 1
    %1916 = vperm.xlu0 %1915, %v124
    %v1917 = vpop.permute.xlu0 %1916
    %v1919 = vmul.f32 %v1857, %v1288
    %v1920 = vmul.f32 %v1857, %v1353
    %v1921 = vmul.f32 %v1857, %v1418
    %v1922 = vmul.f32 %v1857, %v1483
    %v1923 = vmul.f32 %v1861, %v1291
    %v1924 = vmul.f32 %v1861, %v1356
    %v1925 = vmul.f32 %v1861, %v1421
    %v1926 = vmul.f32 %v1861, %v1486
    %v1927 = vmul.f32 %v1865, %v1294
    %v1928 = vmul.f32 %v1865, %v1359
    %v1929 = vmul.f32 %v1865, %v1424
    %v1930 = vmul.f32 %v1865, %v1489
    %v1931 = vmul.f32 %v1869, %v1297
    %v1932 = vmul.f32 %v1869, %v1362
    %v1933 = vmul.f32 %v1869, %v1427
    %v1934 = vmul.f32 %v1869, %v1492
    %v1935 = vmul.f32 %v1873, %v1300
    %v1936 = vmul.f32 %v1873, %v1365
    %v1937 = vmul.f32 %v1873, %v1430
    %v1938 = vmul.f32 %v1873, %v1495
    %v1939 = vmul.f32 %v1877, %v1303
    %v1940 = vmul.f32 %v1877, %v1368
    %v1941 = vmul.f32 %v1877, %v1433
    %v1942 = vmul.f32 %v1877, %v1498
    %v1943 = vmul.f32 %v1881, %v1306
    %v1944 = vmul.f32 %v1881, %v1371
    %v1945 = vmul.f32 %v1881, %v1436
    %v1946 = vmul.f32 %v1881, %v1501
    %v1947 = vmul.f32 %v1885, %v1309
    %v1948 = vmul.f32 %v1885, %v1374
    %v1949 = vmul.f32 %v1885, %v1439
    %v1950 = vmul.f32 %v1885, %v1504
    %v1951 = vmul.f32 %v1889, %v1312
    %v1952 = vmul.f32 %v1889, %v1377
    %v1953 = vmul.f32 %v1889, %v1442
    %v1954 = vmul.f32 %v1889, %v1507
    %v1955 = vmul.f32 %v1893, %v1315
    %v1956 = vmul.f32 %v1893, %v1380
    %v1957 = vmul.f32 %v1893, %v1445
    %v1958 = vmul.f32 %v1893, %v1510
    %v1959 = vmul.f32 %v1897, %v1318
    %v1960 = vmul.f32 %v1897, %v1383
    %v1961 = vmul.f32 %v1897, %v1448
    %v1962 = vmul.f32 %v1897, %v1513
    %v1963 = vmul.f32 %v1901, %v1321
    %v1964 = vmul.f32 %v1901, %v1386
    %v1965 = vmul.f32 %v1901, %v1451
    %v1966 = vmul.f32 %v1901, %v1516
    %v1967 = vmul.f32 %v1905, %v1324
    %v1968 = vmul.f32 %v1905, %v1389
    %v1969 = vmul.f32 %v1905, %v1454
    %v1970 = vmul.f32 %v1905, %v1519
    %v1971 = vmul.f32 %v1909, %v1327
    %v1972 = vmul.f32 %v1909, %v1392
    %v1973 = vmul.f32 %v1909, %v1457
    %v1974 = vmul.f32 %v1909, %v1522
    %v1975 = vmul.f32 %v1913, %v1330
    %v1976 = vmul.f32 %v1913, %v1395
    %v1977 = vmul.f32 %v1913, %v1460
    %v1978 = vmul.f32 %v1913, %v1525
    %v1979 = vmul.f32 %v1917, %v1333
    %v1980 = vmul.f32 %v1917, %v1398
    %v1981 = vmul.f32 %v1917, %v1463
    %v1982 = vmul.f32 %v1917, %v1528
    %v1983 = vadd.f32 %v1141, %v1919
    %v1984 = vadd.f32 %v1142, %v1920
    %v1985 = vadd.f32 %v1143, %v1921
    %v1986 = vadd.f32 %v1144, %v1922
    %v1987 = vadd.f32 %v1145, %v1923
    %v1988 = vadd.f32 %v1146, %v1924
    %v1989 = vadd.f32 %v1147, %v1925
    %v1990 = vadd.f32 %v1148, %v1926
    %v1991 = vadd.f32 %v1149, %v1927
    %v1992 = vadd.f32 %v1150, %v1928
    %v1993 = vadd.f32 %v1151, %v1929
    %v1994 = vadd.f32 %v1152, %v1930
    %v1995 = vadd.f32 %v1153, %v1931
    %v1996 = vadd.f32 %v1154, %v1932
    %v1997 = vadd.f32 %v1155, %v1933
    %v1998 = vadd.f32 %v1156, %v1934
    %v1999 = vadd.f32 %v1157, %v1935
    %v2000 = vadd.f32 %v1158, %v1936
    %v2001 = vadd.f32 %v1159, %v1937
    %v2002 = vadd.f32 %v1160, %v1938
    %v2003 = vadd.f32 %v1161, %v1939
    %v2004 = vadd.f32 %v1162, %v1940
    %v2005 = vadd.f32 %v1163, %v1941
    %v2006 = vadd.f32 %v1164, %v1942
    %v2007 = vadd.f32 %v1165, %v1943
    %v2008 = vadd.f32 %v1166, %v1944
    %v2009 = vadd.f32 %v1167, %v1945
    %v2010 = vadd.f32 %v1168, %v1946
    %v2011 = vadd.f32 %v1169, %v1947
    %v2012 = vadd.f32 %v1170, %v1948
    %v2013 = vadd.f32 %v1171, %v1949
    %v2014 = vadd.f32 %v1172, %v1950
    %v2015 = vadd.f32 %v1173, %v1951
    %v2016 = vadd.f32 %v1174, %v1952
    %v2017 = vadd.f32 %v1175, %v1953
    %v2018 = vadd.f32 %v1176, %v1954
    %v2019 = vadd.f32 %v1177, %v1955
    %v2020 = vadd.f32 %v1178, %v1956
    %v2021 = vadd.f32 %v1179, %v1957
    %v2022 = vadd.f32 %v1180, %v1958
    %v2023 = vadd.f32 %v1181, %v1959
    %v2024 = vadd.f32 %v1182, %v1960
    %v2025 = vadd.f32 %v1183, %v1961
    %v2026 = vadd.f32 %v1184, %v1962
    %v2027 = vadd.f32 %v1185, %v1963
    %v2028 = vadd.f32 %v1186, %v1964
    %v2029 = vadd.f32 %v1187, %v1965
    %v2030 = vadd.f32 %v1188, %v1966
    %v2031 = vadd.f32 %v1189, %v1967
    %v2032 = vadd.f32 %v1190, %v1968
    %v2033 = vadd.f32 %v1191, %v1969
    %v2034 = vadd.f32 %v1192, %v1970
    %v2035 = vadd.f32 %v1193, %v1971
    %v2036 = vadd.f32 %v1194, %v1972
    %v2037 = vadd.f32 %v1195, %v1973
    %v2038 = vadd.f32 %v1196, %v1974
    %v2039 = vadd.f32 %v1197, %v1975
    %v2040 = vadd.f32 %v1198, %v1976
    %v2041 = vadd.f32 %v1199, %v1977
    %v2042 = vadd.f32 %v1200, %v1978
    %v2043 = vadd.f32 %v1201, %v1979
    %v2044 = vadd.f32 %v1202, %v1980
    %v2045 = vadd.f32 %v1203, %v1981
    %v2046 = vadd.f32 %v1204, %v1982
    %2047 = vset.pattern.permute.xlu0 1
    %2048 = vperm.xlu0 %2047, %v125
    %v2049 = vpop.permute.xlu0 %2048
    %2051 = vset.pattern.permute.xlu0 1
    %2052 = vperm.xlu0 %2051, %v126
    %v2053 = vpop.permute.xlu0 %2052
    %2055 = vset.pattern.permute.xlu0 1
    %2056 = vperm.xlu0 %2055, %v127
    %v2057 = vpop.permute.xlu0 %2056
    %2059 = vset.pattern.permute.xlu0 1
    %2060 = vperm.xlu0 %2059, %v128
    %v2061 = vpop.permute.xlu0 %2060
    %2063 = vset.pattern.permute.xlu0 1
    %2064 = vperm.xlu0 %2063, %v129
    %v2065 = vpop.permute.xlu0 %2064
    %2067 = vset.pattern.permute.xlu0 1
    %2068 = vperm.xlu0 %2067, %v130
    %v2069 = vpop.permute.xlu0 %2068
    %2071 = vset.pattern.permute.xlu0 1
    %2072 = vperm.xlu0 %2071, %v131
    %v2073 = vpop.permute.xlu0 %2072
    %2075 = vset.pattern.permute.xlu0 1
    %2076 = vperm.xlu0 %2075, %v132
    %v2077 = vpop.permute.xlu0 %2076
    %2079 = vset.pattern.permute.xlu0 1
    %2080 = vperm.xlu0 %2079, %v133
    %v2081 = vpop.permute.xlu0 %2080
    %2083 = vset.pattern.permute.xlu0 1
    %2084 = vperm.xlu0 %2083, %v134
    %v2085 = vpop.permute.xlu0 %2084
    %2087 = vset.pattern.permute.xlu0 1
    %2088 = vperm.xlu0 %2087, %v135
    %v2089 = vpop.permute.xlu0 %2088
    %2091 = vset.pattern.permute.xlu0 1
    %2092 = vperm.xlu0 %2091, %v136
    %v2093 = vpop.permute.xlu0 %2092
    %2095 = vset.pattern.permute.xlu0 1
    %2096 = vperm.xlu0 %2095, %v137
    %v2097 = vpop.permute.xlu0 %2096
    %2099 = vset.pattern.permute.xlu0 1
    %2100 = vperm.xlu0 %2099, %v138
    %v2101 = vpop.permute.xlu0 %2100
    %2103 = vset.pattern.permute.xlu0 1
    %2104 = vperm.xlu0 %2103, %v139
    %v2105 = vpop.permute.xlu0 %2104
    %2107 = vset.pattern.permute.xlu0 1
    %2108 = vperm.xlu0 %2107, %v140
    %v2109 = vpop.permute.xlu0 %2108
    %v2111 = vmul.f32 %v2049, %v1613
    %v2112 = vmul.f32 %v2049, %v1678
    %v2113 = vmul.f32 %v2049, %v1743
    %v2114 = vmul.f32 %v2049, %v1808
    %v2115 = vmul.f32 %v2053, %v1616
    %v2116 = vmul.f32 %v2053, %v1681
    %v2117 = vmul.f32 %v2053, %v1746
    %v2118 = vmul.f32 %v2053, %v1811
    %v2119 = vmul.f32 %v2057, %v1619
    %v2120 = vmul.f32 %v2057, %v1684
    %v2121 = vmul.f32 %v2057, %v1749
    %v2122 = vmul.f32 %v2057, %v1814
    %v2123 = vmul.f32 %v2061, %v1622
    %v2124 = vmul.f32 %v2061, %v1687
    %v2125 = vmul.f32 %v2061, %v1752
    %v2126 = vmul.f32 %v2061, %v1817
    %v2127 = vmul.f32 %v2065, %v1625
    %v2128 = vmul.f32 %v2065, %v1690
    %v2129 = vmul.f32 %v2065, %v1755
    %v2130 = vmul.f32 %v2065, %v1820
    %v2131 = vmul.f32 %v2069, %v1628
    %v2132 = vmul.f32 %v2069, %v1693
    %v2133 = vmul.f32 %v2069, %v1758
    %v2134 = vmul.f32 %v2069, %v1823
    %v2135 = vmul.f32 %v2073, %v1631
    %v2136 = vmul.f32 %v2073, %v1696
    %v2137 = vmul.f32 %v2073, %v1761
    %v2138 = vmul.f32 %v2073, %v1826
    %v2139 = vmul.f32 %v2077, %v1634
    %v2140 = vmul.f32 %v2077, %v1699
    %v2141 = vmul.f32 %v2077, %v1764
    %v2142 = vmul.f32 %v2077, %v1829
    %v2143 = vmul.f32 %v2081, %v1637
    %v2144 = vmul.f32 %v2081, %v1702
    %v2145 = vmul.f32 %v2081, %v1767
    %v2146 = vmul.f32 %v2081, %v1832
    %v2147 = vmul.f32 %v2085, %v1640
    %v2148 = vmul.f32 %v2085, %v1705
    %v2149 = vmul.f32 %v2085, %v1770
    %v2150 = vmul.f32 %v2085, %v1835
    %v2151 = vmul.f32 %v2089, %v1643
    %v2152 = vmul.f32 %v2089, %v1708
    %v2153 = vmul.f32 %v2089, %v1773
    %v2154 = vmul.f32 %v2089, %v1838
    %v2155 = vmul.f32 %v2093, %v1646
    %v2156 = vmul.f32 %v2093, %v1711
    %v2157 = vmul.f32 %v2093, %v1776
    %v2158 = vmul.f32 %v2093, %v1841
    %v2159 = vmul.f32 %v2097, %v1649
    %v2160 = vmul.f32 %v2097, %v1714
    %v2161 = vmul.f32 %v2097, %v1779
    %v2162 = vmul.f32 %v2097, %v1844
    %v2163 = vmul.f32 %v2101, %v1652
    %v2164 = vmul.f32 %v2101, %v1717
    %v2165 = vmul.f32 %v2101, %v1782
    %v2166 = vmul.f32 %v2101, %v1847
    %v2167 = vmul.f32 %v2105, %v1655
    %v2168 = vmul.f32 %v2105, %v1720
    %v2169 = vmul.f32 %v2105, %v1785
    %v2170 = vmul.f32 %v2105, %v1850
    %v2171 = vmul.f32 %v2109, %v1658
    %v2172 = vmul.f32 %v2109, %v1723
    %v2173 = vmul.f32 %v2109, %v1788
    %v2174 = vmul.f32 %v2109, %v1853
    %v2175 = vadd.f32 %v1983, %v2111
    %v2176 = vadd.f32 %v1984, %v2112
    %v2177 = vadd.f32 %v1985, %v2113
    %v2178 = vadd.f32 %v1986, %v2114
    %v2179 = vadd.f32 %v1987, %v2115
    %v2180 = vadd.f32 %v1988, %v2116
    %v2181 = vadd.f32 %v1989, %v2117
    %v2182 = vadd.f32 %v1990, %v2118
    %v2183 = vadd.f32 %v1991, %v2119
    %v2184 = vadd.f32 %v1992, %v2120
    %v2185 = vadd.f32 %v1993, %v2121
    %v2186 = vadd.f32 %v1994, %v2122
    %v2187 = vadd.f32 %v1995, %v2123
    %v2188 = vadd.f32 %v1996, %v2124
    %v2189 = vadd.f32 %v1997, %v2125
    %v2190 = vadd.f32 %v1998, %v2126
    %v2191 = vadd.f32 %v1999, %v2127
    %v2192 = vadd.f32 %v2000, %v2128
    %v2193 = vadd.f32 %v2001, %v2129
    %v2194 = vadd.f32 %v2002, %v2130
    %v2195 = vadd.f32 %v2003, %v2131
    %v2196 = vadd.f32 %v2004, %v2132
    %v2197 = vadd.f32 %v2005, %v2133
    %v2198 = vadd.f32 %v2006, %v2134
    %v2199 = vadd.f32 %v2007, %v2135
    %v2200 = vadd.f32 %v2008, %v2136
    %v2201 = vadd.f32 %v2009, %v2137
    %v2202 = vadd.f32 %v2010, %v2138
    %v2203 = vadd.f32 %v2011, %v2139
    %v2204 = vadd.f32 %v2012, %v2140
    %v2205 = vadd.f32 %v2013, %v2141
    %v2206 = vadd.f32 %v2014, %v2142
    %v2207 = vadd.f32 %v2015, %v2143
    %v2208 = vadd.f32 %v2016, %v2144
    %v2209 = vadd.f32 %v2017, %v2145
    %v2210 = vadd.f32 %v2018, %v2146
    %v2211 = vadd.f32 %v2019, %v2147
    %v2212 = vadd.f32 %v2020, %v2148
    %v2213 = vadd.f32 %v2021, %v2149
    %v2214 = vadd.f32 %v2022, %v2150
    %v2215 = vadd.f32 %v2023, %v2151
    %v2216 = vadd.f32 %v2024, %v2152
    %v2217 = vadd.f32 %v2025, %v2153
    %v2218 = vadd.f32 %v2026, %v2154
    %v2219 = vadd.f32 %v2027, %v2155
    %v2220 = vadd.f32 %v2028, %v2156
    %v2221 = vadd.f32 %v2029, %v2157
    %v2222 = vadd.f32 %v2030, %v2158
    %v2223 = vadd.f32 %v2031, %v2159
    %v2224 = vadd.f32 %v2032, %v2160
    %v2225 = vadd.f32 %v2033, %v2161
    %v2226 = vadd.f32 %v2034, %v2162
    %v2227 = vadd.f32 %v2035, %v2163
    %v2228 = vadd.f32 %v2036, %v2164
    %v2229 = vadd.f32 %v2037, %v2165
    %v2230 = vadd.f32 %v2038, %v2166
    %v2231 = vadd.f32 %v2039, %v2167
    %v2232 = vadd.f32 %v2040, %v2168
    %v2233 = vadd.f32 %v2041, %v2169
    %v2234 = vadd.f32 %v2042, %v2170
    %v2235 = vadd.f32 %v2043, %v2171
    %v2236 = vadd.f32 %v2044, %v2172
    %v2237 = vadd.f32 %v2045, %v2173
    %v2238 = vadd.f32 %v2046, %v2174
    %s2239 = scalar_lea.vmem [#allocation5], 1024
    %v2240 = vld [vmem:[%s2239] sm:$0xff]
    %v2241 = vld [vmem:[%s2239 + $0x8] sm:$0xff]
    %v2242 = vld [vmem:[%s2239 + $0x10] sm:$0xff]
    %v2243 = vld [vmem:[%s2239 + $0x18] sm:$0xff]
    %v2244 = vld [vmem:[%s2239 + $0x20] sm:$0xff]
    %v2245 = vld [vmem:[%s2239 + $0x28] sm:$0xff]
    %v2246 = vld [vmem:[%s2239 + $0x30] sm:$0xff]
    %v2247 = vld [vmem:[%s2239 + $0x38] sm:$0xff]
    %v2248 = vld [vmem:[%s2239 + $0x40] sm:$0xff]
    %v2249 = vld [vmem:[%s2239 + $0x48] sm:$0xff]
    %v2250 = vld [vmem:[%s2239 + $0x50] sm:$0xff]
    %v2251 = vld [vmem:[%s2239 + $0x58] sm:$0xff]
    %v2252 = vld [vmem:[%s2239 + $0x60] sm:$0xff]
    %v2253 = vld [vmem:[%s2239 + $0x68] sm:$0xff]
    %v2254 = vld [vmem:[%s2239 + $0x70] sm:$0xff]
    %v2255 = vld [vmem:[%s2239 + $0x78] sm:$0xff]
    %v2256 = vld [vmem:[%s2239 + $0x80] sm:$0xff]
    %v2257 = vld [vmem:[%s2239 + $0x88] sm:$0xff]
    %v2258 = vld [vmem:[%s2239 + $0x90] sm:$0xff]
    %v2259 = vld [vmem:[%s2239 + $0x98] sm:$0xff]
    %v2260 = vld [vmem:[%s2239 + $0xa0] sm:$0xff]
    %v2261 = vld [vmem:[%s2239 + $0xa8] sm:$0xff]
    %v2262 = vld [vmem:[%s2239 + $0xb0] sm:$0xff]
    %v2263 = vld [vmem:[%s2239 + $0xb8] sm:$0xff]
    %v2264 = vld [vmem:[%s2239 + $0xc0] sm:$0xff]
    %v2265 = vld [vmem:[%s2239 + $0xc8] sm:$0xff]
    %v2266 = vld [vmem:[%s2239 + $0xd0] sm:$0xff]
    %v2267 = vld [vmem:[%s2239 + $0xd8] sm:$0xff]
    %v2268 = vld [vmem:[%s2239 + $0xe0] sm:$0xff]
    %v2269 = vld [vmem:[%s2239 + $0xe8] sm:$0xff]
    %v2270 = vld [vmem:[%s2239 + $0xf0] sm:$0xff]
    %v2271 = vld [vmem:[%s2239 + $0xf8] sm:$0xff]
    %v2272 = vld [vmem:[%s2239 + $0x100] sm:$0xff]
    %v2273 = vld [vmem:[%s2239 + $0x108] sm:$0xff]
    %v2274 = vld [vmem:[%s2239 + $0x110] sm:$0xff]
    %v2275 = vld [vmem:[%s2239 + $0x118] sm:$0xff]
    %v2276 = vld [vmem:[%s2239 + $0x120] sm:$0xff]
    %v2277 = vld [vmem:[%s2239 + $0x128] sm:$0xff]
    %v2278 = vld [vmem:[%s2239 + $0x130] sm:$0xff]
    %v2279 = vld [vmem:[%s2239 + $0x138] sm:$0xff]
    %v2280 = vld [vmem:[%s2239 + $0x140] sm:$0xff]
    %v2281 = vld [vmem:[%s2239 + $0x148] sm:$0xff]
    %v2282 = vld [vmem:[%s2239 + $0x150] sm:$0xff]
    %v2283 = vld [vmem:[%s2239 + $0x158] sm:$0xff]
    %v2284 = vld [vmem:[%s2239 + $0x160] sm:$0xff]
    %v2285 = vld [vmem:[%s2239 + $0x168] sm:$0xff]
    %v2286 = vld [vmem:[%s2239 + $0x170] sm:$0xff]
    %v2287 = vld [vmem:[%s2239 + $0x178] sm:$0xff]
    %v2288 = vld [vmem:[%s2239 + $0x180] sm:$0xff]
    %v2289 = vld [vmem:[%s2239 + $0x188] sm:$0xff]
    %v2290 = vld [vmem:[%s2239 + $0x190] sm:$0xff]
    %v2291 = vld [vmem:[%s2239 + $0x198] sm:$0xff]
    %v2292 = vld [vmem:[%s2239 + $0x1a0] sm:$0xff]
    %v2293 = vld [vmem:[%s2239 + $0x1a8] sm:$0xff]
    %v2294 = vld [vmem:[%s2239 + $0x1b0] sm:$0xff]
    %v2295 = vld [vmem:[%s2239 + $0x1b8] sm:$0xff]
    %v2296 = vld [vmem:[%s2239 + $0x1c0] sm:$0xff]
    %v2297 = vld [vmem:[%s2239 + $0x1c8] sm:$0xff]
    %v2298 = vld [vmem:[%s2239 + $0x1d0] sm:$0xff]
    %v2299 = vld [vmem:[%s2239 + $0x1d8] sm:$0xff]
    %v2300 = vld [vmem:[%s2239 + $0x1e0] sm:$0xff]
    %v2301 = vld [vmem:[%s2239 + $0x1e8] sm:$0xff]
    %v2302 = vld [vmem:[%s2239 + $0x1f0] sm:$0xff]
    %v2303 = vld [vmem:[%s2239 + $0x1f8] sm:$0xff]
    %2304 = vmatpush.msra.mxu0 %v2300
    %2305 = vmatpush.msra.mxu0 %v2296
    %2306 = vmatpush.msra.mxu0 %v2292
    %2307 = vmatpush.msra.mxu0 %v2288
    %2308 = vmatpush.msra.mxu0 %v2284
    %2309 = vmatpush.msra.mxu0 %v2280
    %2310 = vmatpush.msra.mxu0 %v2276
    %2311 = vmatpush.msra.mxu0 %v2272
    %2312 = vmatpush.msra.mxu0 %v2268
    %2313 = vmatpush.msra.mxu0 %v2264
    %2314 = vmatpush.msra.mxu0 %v2260
    %2315 = vmatpush.msra.mxu0 %v2256
    %2316 = vmatpush.msra.mxu0 %v2252
    %2317 = vmatpush.msra.mxu0 %v2248
    %2318 = vmatpush.msra.mxu0 %v2244
    %2319 = vmatpush.msra.mxu0 %v2240
    %2320 = vmatmul.f32.gmra.mxu0 %v77
    %v2321 = vpop.f32.mrf.mxu0
    %v2322 = vadd.f32 0.0, %v2321
    %2323 = vmatmul.f32.gmra.mxu0 %v78
    %v2324 = vpop.f32.mrf.mxu0
    %v2325 = vadd.f32 0.0, %v2324
    %2326 = vmatmul.f32.gmra.mxu0 %v79
    %v2327 = vpop.f32.mrf.mxu0
    %v2328 = vadd.f32 0.0, %v2327
    %2329 = vmatmul.f32.gmra.mxu0 %v80
    %v2330 = vpop.f32.mrf.mxu0
    %v2331 = vadd.f32 0.0, %v2330
    %2332 = vmatmul.f32.gmra.mxu0 %v81
    %v2333 = vpop.f32.mrf.mxu0
    %v2334 = vadd.f32 0.0, %v2333
    %2335 = vmatmul.f32.gmra.mxu0 %v82
    %v2336 = vpop.f32.mrf.mxu0
    %v2337 = vadd.f32 0.0, %v2336
    %2338 = vmatmul.f32.gmra.mxu0 %v83
    %v2339 = vpop.f32.mrf.mxu0
    %v2340 = vadd.f32 0.0, %v2339
    %2341 = vmatmul.f32.gmra.mxu0 %v84
    %v2342 = vpop.f32.mrf.mxu0
    %v2343 = vadd.f32 0.0, %v2342
    %2344 = vmatmul.f32.gmra.mxu0 %v85
    %v2345 = vpop.f32.mrf.mxu0
    %v2346 = vadd.f32 0.0, %v2345
    %2347 = vmatmul.f32.gmra.mxu0 %v86
    %v2348 = vpop.f32.mrf.mxu0
    %v2349 = vadd.f32 0.0, %v2348
    %2350 = vmatmul.f32.gmra.mxu0 %v87
    %v2351 = vpop.f32.mrf.mxu0
    %v2352 = vadd.f32 0.0, %v2351
    %2353 = vmatmul.f32.gmra.mxu0 %v88
    %v2354 = vpop.f32.mrf.mxu0
    %v2355 = vadd.f32 0.0, %v2354
    %2356 = vmatmul.f32.gmra.mxu0 %v89
    %v2357 = vpop.f32.mrf.mxu0
    %v2358 = vadd.f32 0.0, %v2357
    %2359 = vmatmul.f32.gmra.mxu0 %v90
    %v2360 = vpop.f32.mrf.mxu0
    %v2361 = vadd.f32 0.0, %v2360
    %2362 = vmatmul.f32.gmra.mxu0 %v91
    %v2363 = vpop.f32.mrf.mxu0
    %v2364 = vadd.f32 0.0, %v2363
    %2365 = vmatmul.f32.gmra.mxu0 %v92
    %v2366 = vpop.f32.mrf.mxu0
    %v2367 = vadd.f32 0.0, %v2366
    %2368 = vdwg.mxu0
    %2369 = vmatpush.msra.mxu0 %v2301
    %2370 = vmatpush.msra.mxu0 %v2297
    %2371 = vmatpush.msra.mxu0 %v2293
    %2372 = vmatpush.msra.mxu0 %v2289
    %2373 = vmatpush.msra.mxu0 %v2285
    %2374 = vmatpush.msra.mxu0 %v2281
    %2375 = vmatpush.msra.mxu0 %v2277
    %2376 = vmatpush.msra.mxu0 %v2273
    %2377 = vmatpush.msra.mxu0 %v2269
    %2378 = vmatpush.msra.mxu0 %v2265
    %2379 = vmatpush.msra.mxu0 %v2261
    %2380 = vmatpush.msra.mxu0 %v2257
    %2381 = vmatpush.msra.mxu0 %v2253
    %2382 = vmatpush.msra.mxu0 %v2249
    %2383 = vmatpush.msra.mxu0 %v2245
    %2384 = vmatpush.msra.mxu0 %v2241
    %2385 = vmatmul.f32.gmra.mxu0 %v77
    %v2386 = vpop.f32.mrf.mxu0
    %v2387 = vadd.f32 0.0, %v2386
    %2388 = vmatmul.f32.gmra.mxu0 %v78
    %v2389 = vpop.f32.mrf.mxu0
    %v2390 = vadd.f32 0.0, %v2389
    %2391 = vmatmul.f32.gmra.mxu0 %v79
    %v2392 = vpop.f32.mrf.mxu0
    %v2393 = vadd.f32 0.0, %v2392
    %2394 = vmatmul.f32.gmra.mxu0 %v80
    %v2395 = vpop.f32.mrf.mxu0
    %v2396 = vadd.f32 0.0, %v2395
    %2397 = vmatmul.f32.gmra.mxu0 %v81
    %v2398 = vpop.f32.mrf.mxu0
    %v2399 = vadd.f32 0.0, %v2398
    %2400 = vmatmul.f32.gmra.mxu0 %v82
    %v2401 = vpop.f32.mrf.mxu0
    %v2402 = vadd.f32 0.0, %v2401
    %2403 = vmatmul.f32.gmra.mxu0 %v83
    %v2404 = vpop.f32.mrf.mxu0
    %v2405 = vadd.f32 0.0, %v2404
    %2406 = vmatmul.f32.gmra.mxu0 %v84
    %v2407 = vpop.f32.mrf.mxu0
    %v2408 = vadd.f32 0.0, %v2407
    %2409 = vmatmul.f32.gmra.mxu0 %v85
    %v2410 = vpop.f32.mrf.mxu0
    %v2411 = vadd.f32 0.0, %v2410
    %2412 = vmatmul.f32.gmra.mxu0 %v86
    %v2413 = vpop.f32.mrf.mxu0
    %v2414 = vadd.f32 0.0, %v2413
    %2415 = vmatmul.f32.gmra.mxu0 %v87
    %v2416 = vpop.f32.mrf.mxu0
    %v2417 = vadd.f32 0.0, %v2416
    %2418 = vmatmul.f32.gmra.mxu0 %v88
    %v2419 = vpop.f32.mrf.mxu0
    %v2420 = vadd.f32 0.0, %v2419
    %2421 = vmatmul.f32.gmra.mxu0 %v89
    %v2422 = vpop.f32.mrf.mxu0
    %v2423 = vadd.f32 0.0, %v2422
    %2424 = vmatmul.f32.gmra.mxu0 %v90
    %v2425 = vpop.f32.mrf.mxu0
    %v2426 = vadd.f32 0.0, %v2425
    %2427 = vmatmul.f32.gmra.mxu0 %v91
    %v2428 = vpop.f32.mrf.mxu0
    %v2429 = vadd.f32 0.0, %v2428
    %2430 = vmatmul.f32.gmra.mxu0 %v92
    %v2431 = vpop.f32.mrf.mxu0
    %v2432 = vadd.f32 0.0, %v2431
    %2433 = vdwg.mxu0
    %2434 = vmatpush.msra.mxu0 %v2302
    %2435 = vmatpush.msra.mxu0 %v2298
    %2436 = vmatpush.msra.mxu0 %v2294
    %2437 = vmatpush.msra.mxu0 %v2290
    %2438 = vmatpush.msra.mxu0 %v2286
    %2439 = vmatpush.msra.mxu0 %v2282
    %2440 = vmatpush.msra.mxu0 %v2278
    %2441 = vmatpush.msra.mxu0 %v2274
    %2442 = vmatpush.msra.mxu0 %v2270
    %2443 = vmatpush.msra.mxu0 %v2266
    %2444 = vmatpush.msra.mxu0 %v2262
    %2445 = vmatpush.msra.mxu0 %v2258
    %2446 = vmatpush.msra.mxu0 %v2254
    %2447 = vmatpush.msra.mxu0 %v2250
    %2448 = vmatpush.msra.mxu0 %v2246
    %2449 = vmatpush.msra.mxu0 %v2242
    %2450 = vmatmul.f32.gmra.mxu0 %v77
    %v2451 = vpop.f32.mrf.mxu0
    %v2452 = vadd.f32 0.0, %v2451
    %2453 = vmatmul.f32.gmra.mxu0 %v78
    %v2454 = vpop.f32.mrf.mxu0
    %v2455 = vadd.f32 0.0, %v2454
    %2456 = vmatmul.f32.gmra.mxu0 %v79
    %v2457 = vpop.f32.mrf.mxu0
    %v2458 = vadd.f32 0.0, %v2457
    %2459 = vmatmul.f32.gmra.mxu0 %v80
    %v2460 = vpop.f32.mrf.mxu0
    %v2461 = vadd.f32 0.0, %v2460
    %2462 = vmatmul.f32.gmra.mxu0 %v81
    %v2463 = vpop.f32.mrf.mxu0
    %v2464 = vadd.f32 0.0, %v2463
    %2465 = vmatmul.f32.gmra.mxu0 %v82
    %v2466 = vpop.f32.mrf.mxu0
    %v2467 = vadd.f32 0.0, %v2466
    %2468 = vmatmul.f32.gmra.mxu0 %v83
    %v2469 = vpop.f32.mrf.mxu0
    %v2470 = vadd.f32 0.0, %v2469
    %2471 = vmatmul.f32.gmra.mxu0 %v84
    %v2472 = vpop.f32.mrf.mxu0
    %v2473 = vadd.f32 0.0, %v2472
    %2474 = vmatmul.f32.gmra.mxu0 %v85
    %v2475 = vpop.f32.mrf.mxu0
    %v2476 = vadd.f32 0.0, %v2475
    %2477 = vmatmul.f32.gmra.mxu0 %v86
    %v2478 = vpop.f32.mrf.mxu0
    %v2479 = vadd.f32 0.0, %v2478
    %2480 = vmatmul.f32.gmra.mxu0 %v87
    %v2481 = vpop.f32.mrf.mxu0
    %v2482 = vadd.f32 0.0, %v2481
    %2483 = vmatmul.f32.gmra.mxu0 %v88
    %v2484 = vpop.f32.mrf.mxu0
    %v2485 = vadd.f32 0.0, %v2484
    %2486 = vmatmul.f32.gmra.mxu0 %v89
    %v2487 = vpop.f32.mrf.mxu0
    %v2488 = vadd.f32 0.0, %v2487
    %2489 = vmatmul.f32.gmra.mxu0 %v90
    %v2490 = vpop.f32.mrf.mxu0
    %v2491 = vadd.f32 0.0, %v2490
    %2492 = vmatmul.f32.gmra.mxu0 %v91
    %v2493 = vpop.f32.mrf.mxu0
    %v2494 = vadd.f32 0.0, %v2493
    %2495 = vmatmul.f32.gmra.mxu0 %v92
    %v2496 = vpop.f32.mrf.mxu0
    %v2497 = vadd.f32 0.0, %v2496
    %2498 = vdwg.mxu0
    %2499 = vmatpush.msra.mxu0 %v2303
    %2500 = vmatpush.msra.mxu0 %v2299
    %2501 = vmatpush.msra.mxu0 %v2295
    %2502 = vmatpush.msra.mxu0 %v2291
    %2503 = vmatpush.msra.mxu0 %v2287
    %2504 = vmatpush.msra.mxu0 %v2283
    %2505 = vmatpush.msra.mxu0 %v2279
    %2506 = vmatpush.msra.mxu0 %v2275
    %2507 = vmatpush.msra.mxu0 %v2271
    %2508 = vmatpush.msra.mxu0 %v2267
    %2509 = vmatpush.msra.mxu0 %v2263
    %2510 = vmatpush.msra.mxu0 %v2259
    %2511 = vmatpush.msra.mxu0 %v2255
    %2512 = vmatpush.msra.mxu0 %v2251
    %2513 = vmatpush.msra.mxu0 %v2247
    %2514 = vmatpush.msra.mxu0 %v2243
    %2515 = vmatmul.f32.gmra.mxu0 %v77
    %v2516 = vpop.f32.mrf.mxu0
    %v2517 = vadd.f32 0.0, %v2516
    %2518 = vmatmul.f32.gmra.mxu0 %v78
    %v2519 = vpop.f32.mrf.mxu0
    %v2520 = vadd.f32 0.0, %v2519
    %2521 = vmatmul.f32.gmra.mxu0 %v79
    %v2522 = vpop.f32.mrf.mxu0
    %v2523 = vadd.f32 0.0, %v2522
    %2524 = vmatmul.f32.gmra.mxu0 %v80
    %v2525 = vpop.f32.mrf.mxu0
    %v2526 = vadd.f32 0.0, %v2525
    %2527 = vmatmul.f32.gmra.mxu0 %v81
    %v2528 = vpop.f32.mrf.mxu0
    %v2529 = vadd.f32 0.0, %v2528
    %2530 = vmatmul.f32.gmra.mxu0 %v82
    %v2531 = vpop.f32.mrf.mxu0
    %v2532 = vadd.f32 0.0, %v2531
    %2533 = vmatmul.f32.gmra.mxu0 %v83
    %v2534 = vpop.f32.mrf.mxu0
    %v2535 = vadd.f32 0.0, %v2534
    %2536 = vmatmul.f32.gmra.mxu0 %v84
    %v2537 = vpop.f32.mrf.mxu0
    %v2538 = vadd.f32 0.0, %v2537
    %2539 = vmatmul.f32.gmra.mxu0 %v85
    %v2540 = vpop.f32.mrf.mxu0
    %v2541 = vadd.f32 0.0, %v2540
    %2542 = vmatmul.f32.gmra.mxu0 %v86
    %v2543 = vpop.f32.mrf.mxu0
    %v2544 = vadd.f32 0.0, %v2543
    %2545 = vmatmul.f32.gmra.mxu0 %v87
    %v2546 = vpop.f32.mrf.mxu0
    %v2547 = vadd.f32 0.0, %v2546
    %2548 = vmatmul.f32.gmra.mxu0 %v88
    %v2549 = vpop.f32.mrf.mxu0
    %v2550 = vadd.f32 0.0, %v2549
    %2551 = vmatmul.f32.gmra.mxu0 %v89
    %v2552 = vpop.f32.mrf.mxu0
    %v2553 = vadd.f32 0.0, %v2552
    %2554 = vmatmul.f32.gmra.mxu0 %v90
    %v2555 = vpop.f32.mrf.mxu0
    %v2556 = vadd.f32 0.0, %v2555
    %2557 = vmatmul.f32.gmra.mxu0 %v91
    %v2558 = vpop.f32.mrf.mxu0
    %v2559 = vadd.f32 0.0, %v2558
    %2560 = vmatmul.f32.gmra.mxu0 %v92
    %v2561 = vpop.f32.mrf.mxu0
    %v2562 = vadd.f32 0.0, %v2561
    %2563 = vdwg.mxu0
    %s2564 = scalar_lea.vmem [#allocation7], 1024
    %v2565 = vld [vmem:[%s2564] sm:$0xff]
    %v2566 = vld [vmem:[%s2564 + $0x8] sm:$0xff]
    %v2567 = vld [vmem:[%s2564 + $0x10] sm:$0xff]
    %v2568 = vld [vmem:[%s2564 + $0x18] sm:$0xff]
    %v2569 = vld [vmem:[%s2564 + $0x20] sm:$0xff]
    %v2570 = vld [vmem:[%s2564 + $0x28] sm:$0xff]
    %v2571 = vld [vmem:[%s2564 + $0x30] sm:$0xff]
    %v2572 = vld [vmem:[%s2564 + $0x38] sm:$0xff]
    %v2573 = vld [vmem:[%s2564 + $0x40] sm:$0xff]
    %v2574 = vld [vmem:[%s2564 + $0x48] sm:$0xff]
    %v2575 = vld [vmem:[%s2564 + $0x50] sm:$0xff]
    %v2576 = vld [vmem:[%s2564 + $0x58] sm:$0xff]
    %v2577 = vld [vmem:[%s2564 + $0x60] sm:$0xff]
    %v2578 = vld [vmem:[%s2564 + $0x68] sm:$0xff]
    %v2579 = vld [vmem:[%s2564 + $0x70] sm:$0xff]
    %v2580 = vld [vmem:[%s2564 + $0x78] sm:$0xff]
    %v2581 = vld [vmem:[%s2564 + $0x80] sm:$0xff]
    %v2582 = vld [vmem:[%s2564 + $0x88] sm:$0xff]
    %v2583 = vld [vmem:[%s2564 + $0x90] sm:$0xff]
    %v2584 = vld [vmem:[%s2564 + $0x98] sm:$0xff]
    %v2585 = vld [vmem:[%s2564 + $0xa0] sm:$0xff]
    %v2586 = vld [vmem:[%s2564 + $0xa8] sm:$0xff]
    %v2587 = vld [vmem:[%s2564 + $0xb0] sm:$0xff]
    %v2588 = vld [vmem:[%s2564 + $0xb8] sm:$0xff]
    %v2589 = vld [vmem:[%s2564 + $0xc0] sm:$0xff]
    %v2590 = vld [vmem:[%s2564 + $0xc8] sm:$0xff]
    %v2591 = vld [vmem:[%s2564 + $0xd0] sm:$0xff]
    %v2592 = vld [vmem:[%s2564 + $0xd8] sm:$0xff]
    %v2593 = vld [vmem:[%s2564 + $0xe0] sm:$0xff]
    %v2594 = vld [vmem:[%s2564 + $0xe8] sm:$0xff]
    %v2595 = vld [vmem:[%s2564 + $0xf0] sm:$0xff]
    %v2596 = vld [vmem:[%s2564 + $0xf8] sm:$0xff]
    %v2597 = vld [vmem:[%s2564 + $0x100] sm:$0xff]
    %v2598 = vld [vmem:[%s2564 + $0x108] sm:$0xff]
    %v2599 = vld [vmem:[%s2564 + $0x110] sm:$0xff]
    %v2600 = vld [vmem:[%s2564 + $0x118] sm:$0xff]
    %v2601 = vld [vmem:[%s2564 + $0x120] sm:$0xff]
    %v2602 = vld [vmem:[%s2564 + $0x128] sm:$0xff]
    %v2603 = vld [vmem:[%s2564 + $0x130] sm:$0xff]
    %v2604 = vld [vmem:[%s2564 + $0x138] sm:$0xff]
    %v2605 = vld [vmem:[%s2564 + $0x140] sm:$0xff]
    %v2606 = vld [vmem:[%s2564 + $0x148] sm:$0xff]
    %v2607 = vld [vmem:[%s2564 + $0x150] sm:$0xff]
    %v2608 = vld [vmem:[%s2564 + $0x158] sm:$0xff]
    %v2609 = vld [vmem:[%s2564 + $0x160] sm:$0xff]
    %v2610 = vld [vmem:[%s2564 + $0x168] sm:$0xff]
    %v2611 = vld [vmem:[%s2564 + $0x170] sm:$0xff]
    %v2612 = vld [vmem:[%s2564 + $0x178] sm:$0xff]
    %v2613 = vld [vmem:[%s2564 + $0x180] sm:$0xff]
    %v2614 = vld [vmem:[%s2564 + $0x188] sm:$0xff]
    %v2615 = vld [vmem:[%s2564 + $0x190] sm:$0xff]
    %v2616 = vld [vmem:[%s2564 + $0x198] sm:$0xff]
    %v2617 = vld [vmem:[%s2564 + $0x1a0] sm:$0xff]
    %v2618 = vld [vmem:[%s2564 + $0x1a8] sm:$0xff]
    %v2619 = vld [vmem:[%s2564 + $0x1b0] sm:$0xff]
    %v2620 = vld [vmem:[%s2564 + $0x1b8] sm:$0xff]
    %v2621 = vld [vmem:[%s2564 + $0x1c0] sm:$0xff]
    %v2622 = vld [vmem:[%s2564 + $0x1c8] sm:$0xff]
    %v2623 = vld [vmem:[%s2564 + $0x1d0] sm:$0xff]
    %v2624 = vld [vmem:[%s2564 + $0x1d8] sm:$0xff]
    %v2625 = vld [vmem:[%s2564 + $0x1e0] sm:$0xff]
    %v2626 = vld [vmem:[%s2564 + $0x1e8] sm:$0xff]
    %v2627 = vld [vmem:[%s2564 + $0x1f0] sm:$0xff]
    %v2628 = vld [vmem:[%s2564 + $0x1f8] sm:$0xff]
    %2629 = vmatpush.msra.mxu0 %v2625
    %2630 = vmatpush.msra.mxu0 %v2621
    %2631 = vmatpush.msra.mxu0 %v2617
    %2632 = vmatpush.msra.mxu0 %v2613
    %2633 = vmatpush.msra.mxu0 %v2609
    %2634 = vmatpush.msra.mxu0 %v2605
    %2635 = vmatpush.msra.mxu0 %v2601
    %2636 = vmatpush.msra.mxu0 %v2597
    %2637 = vmatpush.msra.mxu0 %v2593
    %2638 = vmatpush.msra.mxu0 %v2589
    %2639 = vmatpush.msra.mxu0 %v2585
    %2640 = vmatpush.msra.mxu0 %v2581
    %2641 = vmatpush.msra.mxu0 %v2577
    %2642 = vmatpush.msra.mxu0 %v2573
    %2643 = vmatpush.msra.mxu0 %v2569
    %2644 = vmatpush.msra.mxu0 %v2565
    %2645 = vmatmul.f32.gmra.mxu0 %v93
    %v2646 = vpop.f32.mrf.mxu0
    %v2647 = vadd.f32 0.0, %v2646
    %2648 = vmatmul.f32.gmra.mxu0 %v94
    %v2649 = vpop.f32.mrf.mxu0
    %v2650 = vadd.f32 0.0, %v2649
    %2651 = vmatmul.f32.gmra.mxu0 %v95
    %v2652 = vpop.f32.mrf.mxu0
    %v2653 = vadd.f32 0.0, %v2652
    %2654 = vmatmul.f32.gmra.mxu0 %v96
    %v2655 = vpop.f32.mrf.mxu0
    %v2656 = vadd.f32 0.0, %v2655
    %2657 = vmatmul.f32.gmra.mxu0 %v97
    %v2658 = vpop.f32.mrf.mxu0
    %v2659 = vadd.f32 0.0, %v2658
    %2660 = vmatmul.f32.gmra.mxu0 %v98
    %v2661 = vpop.f32.mrf.mxu0
    %v2662 = vadd.f32 0.0, %v2661
    %2663 = vmatmul.f32.gmra.mxu0 %v99
    %v2664 = vpop.f32.mrf.mxu0
    %v2665 = vadd.f32 0.0, %v2664
    %2666 = vmatmul.f32.gmra.mxu0 %v100
    %v2667 = vpop.f32.mrf.mxu0
    %v2668 = vadd.f32 0.0, %v2667
    %2669 = vmatmul.f32.gmra.mxu0 %v101
    %v2670 = vpop.f32.mrf.mxu0
    %v2671 = vadd.f32 0.0, %v2670
    %2672 = vmatmul.f32.gmra.mxu0 %v102
    %v2673 = vpop.f32.mrf.mxu0
    %v2674 = vadd.f32 0.0, %v2673
    %2675 = vmatmul.f32.gmra.mxu0 %v103
    %v2676 = vpop.f32.mrf.mxu0
    %v2677 = vadd.f32 0.0, %v2676
    %2678 = vmatmul.f32.gmra.mxu0 %v104
    %v2679 = vpop.f32.mrf.mxu0
    %v2680 = vadd.f32 0.0, %v2679
    %2681 = vmatmul.f32.gmra.mxu0 %v105
    %v2682 = vpop.f32.mrf.mxu0
    %v2683 = vadd.f32 0.0, %v2682
    %2684 = vmatmul.f32.gmra.mxu0 %v106
    %v2685 = vpop.f32.mrf.mxu0
    %v2686 = vadd.f32 0.0, %v2685
    %2687 = vmatmul.f32.gmra.mxu0 %v107
    %v2688 = vpop.f32.mrf.mxu0
    %v2689 = vadd.f32 0.0, %v2688
    %2690 = vmatmul.f32.gmra.mxu0 %v108
    %v2691 = vpop.f32.mrf.mxu0
    %v2692 = vadd.f32 0.0, %v2691
    %2693 = vdwg.mxu0
    %2694 = vmatpush.msra.mxu0 %v2626
    %2695 = vmatpush.msra.mxu0 %v2622
    %2696 = vmatpush.msra.mxu0 %v2618
    %2697 = vmatpush.msra.mxu0 %v2614
    %2698 = vmatpush.msra.mxu0 %v2610
    %2699 = vmatpush.msra.mxu0 %v2606
    %2700 = vmatpush.msra.mxu0 %v2602
    %2701 = vmatpush.msra.mxu0 %v2598
    %2702 = vmatpush.msra.mxu0 %v2594
    %2703 = vmatpush.msra.mxu0 %v2590
    %2704 = vmatpush.msra.mxu0 %v2586
    %2705 = vmatpush.msra.mxu0 %v2582
    %2706 = vmatpush.msra.mxu0 %v2578
    %2707 = vmatpush.msra.mxu0 %v2574
    %2708 = vmatpush.msra.mxu0 %v2570
    %2709 = vmatpush.msra.mxu0 %v2566
    %2710 = vmatmul.f32.gmra.mxu0 %v93
    %v2711 = vpop.f32.mrf.mxu0
    %v2712 = vadd.f32 0.0, %v2711
    %2713 = vmatmul.f32.gmra.mxu0 %v94
    %v2714 = vpop.f32.mrf.mxu0
    %v2715 = vadd.f32 0.0, %v2714
    %2716 = vmatmul.f32.gmra.mxu0 %v95
    %v2717 = vpop.f32.mrf.mxu0
    %v2718 = vadd.f32 0.0, %v2717
    %2719 = vmatmul.f32.gmra.mxu0 %v96
    %v2720 = vpop.f32.mrf.mxu0
    %v2721 = vadd.f32 0.0, %v2720
    %2722 = vmatmul.f32.gmra.mxu0 %v97
    %v2723 = vpop.f32.mrf.mxu0
    %v2724 = vadd.f32 0.0, %v2723
    %2725 = vmatmul.f32.gmra.mxu0 %v98
    %v2726 = vpop.f32.mrf.mxu0
    %v2727 = vadd.f32 0.0, %v2726
    %2728 = vmatmul.f32.gmra.mxu0 %v99
    %v2729 = vpop.f32.mrf.mxu0
    %v2730 = vadd.f32 0.0, %v2729
    %2731 = vmatmul.f32.gmra.mxu0 %v100
    %v2732 = vpop.f32.mrf.mxu0
    %v2733 = vadd.f32 0.0, %v2732
    %2734 = vmatmul.f32.gmra.mxu0 %v101
    %v2735 = vpop.f32.mrf.mxu0
    %v2736 = vadd.f32 0.0, %v2735
    %2737 = vmatmul.f32.gmra.mxu0 %v102
    %v2738 = vpop.f32.mrf.mxu0
    %v2739 = vadd.f32 0.0, %v2738
    %2740 = vmatmul.f32.gmra.mxu0 %v103
    %v2741 = vpop.f32.mrf.mxu0
    %v2742 = vadd.f32 0.0, %v2741
    %2743 = vmatmul.f32.gmra.mxu0 %v104
    %v2744 = vpop.f32.mrf.mxu0
    %v2745 = vadd.f32 0.0, %v2744
    %2746 = vmatmul.f32.gmra.mxu0 %v105
    %v2747 = vpop.f32.mrf.mxu0
    %v2748 = vadd.f32 0.0, %v2747
    %2749 = vmatmul.f32.gmra.mxu0 %v106
    %v2750 = vpop.f32.mrf.mxu0
    %v2751 = vadd.f32 0.0, %v2750
    %2752 = vmatmul.f32.gmra.mxu0 %v107
    %v2753 = vpop.f32.mrf.mxu0
    %v2754 = vadd.f32 0.0, %v2753
    %2755 = vmatmul.f32.gmra.mxu0 %v108
    %v2756 = vpop.f32.mrf.mxu0
    %v2757 = vadd.f32 0.0, %v2756
    %2758 = vdwg.mxu0
    %2759 = vmatpush.msra.mxu0 %v2627
    %2760 = vmatpush.msra.mxu0 %v2623
    %2761 = vmatpush.msra.mxu0 %v2619
    %2762 = vmatpush.msra.mxu0 %v2615
    %2763 = vmatpush.msra.mxu0 %v2611
    %2764 = vmatpush.msra.mxu0 %v2607
    %2765 = vmatpush.msra.mxu0 %v2603
    %2766 = vmatpush.msra.mxu0 %v2599
    %2767 = vmatpush.msra.mxu0 %v2595
    %2768 = vmatpush.msra.mxu0 %v2591
    %2769 = vmatpush.msra.mxu0 %v2587
    %2770 = vmatpush.msra.mxu0 %v2583
    %2771 = vmatpush.msra.mxu0 %v2579
    %2772 = vmatpush.msra.mxu0 %v2575
    %2773 = vmatpush.msra.mxu0 %v2571
    %2774 = vmatpush.msra.mxu0 %v2567
    %2775 = vmatmul.f32.gmra.mxu0 %v93
    %v2776 = vpop.f32.mrf.mxu0
    %v2777 = vadd.f32 0.0, %v2776
    %2778 = vmatmul.f32.gmra.mxu0 %v94
    %v2779 = vpop.f32.mrf.mxu0
    %v2780 = vadd.f32 0.0, %v2779
    %2781 = vmatmul.f32.gmra.mxu0 %v95
    %v2782 = vpop.f32.mrf.mxu0
    %v2783 = vadd.f32 0.0, %v2782
    %2784 = vmatmul.f32.gmra.mxu0 %v96
    %v2785 = vpop.f32.mrf.mxu0
    %v2786 = vadd.f32 0.0, %v2785
    %2787 = vmatmul.f32.gmra.mxu0 %v97
    %v2788 = vpop.f32.mrf.mxu0
    %v2789 = vadd.f32 0.0, %v2788
    %2790 = vmatmul.f32.gmra.mxu0 %v98
    %v2791 = vpop.f32.mrf.mxu0
    %v2792 = vadd.f32 0.0, %v2791
    %2793 = vmatmul.f32.gmra.mxu0 %v99
    %v2794 = vpop.f32.mrf.mxu0
    %v2795 = vadd.f32 0.0, %v2794
    %2796 = vmatmul.f32.gmra.mxu0 %v100
    %v2797 = vpop.f32.mrf.mxu0
    %v2798 = vadd.f32 0.0, %v2797
    %2799 = vmatmul.f32.gmra.mxu0 %v101
    %v2800 = vpop.f32.mrf.mxu0
    %v2801 = vadd.f32 0.0, %v2800
    %2802 = vmatmul.f32.gmra.mxu0 %v102
    %v2803 = vpop.f32.mrf.mxu0
    %v2804 = vadd.f32 0.0, %v2803
    %2805 = vmatmul.f32.gmra.mxu0 %v103
    %v2806 = vpop.f32.mrf.mxu0
    %v2807 = vadd.f32 0.0, %v2806
    %2808 = vmatmul.f32.gmra.mxu0 %v104
    %v2809 = vpop.f32.mrf.mxu0
    %v2810 = vadd.f32 0.0, %v2809
    %2811 = vmatmul.f32.gmra.mxu0 %v105
    %v2812 = vpop.f32.mrf.mxu0
    %v2813 = vadd.f32 0.0, %v2812
    %2814 = vmatmul.f32.gmra.mxu0 %v106
    %v2815 = vpop.f32.mrf.mxu0
    %v2816 = vadd.f32 0.0, %v2815
    %2817 = vmatmul.f32.gmra.mxu0 %v107
    %v2818 = vpop.f32.mrf.mxu0
    %v2819 = vadd.f32 0.0, %v2818
    %2820 = vmatmul.f32.gmra.mxu0 %v108
    %v2821 = vpop.f32.mrf.mxu0
    %v2822 = vadd.f32 0.0, %v2821
    %2823 = vdwg.mxu0
    %2824 = vmatpush.msra.mxu0 %v2628
    %2825 = vmatpush.msra.mxu0 %v2624
    %2826 = vmatpush.msra.mxu0 %v2620
    %2827 = vmatpush.msra.mxu0 %v2616
    %2828 = vmatpush.msra.mxu0 %v2612
    %2829 = vmatpush.msra.mxu0 %v2608
    %2830 = vmatpush.msra.mxu0 %v2604
    %2831 = vmatpush.msra.mxu0 %v2600
    %2832 = vmatpush.msra.mxu0 %v2596
    %2833 = vmatpush.msra.mxu0 %v2592
    %2834 = vmatpush.msra.mxu0 %v2588
    %2835 = vmatpush.msra.mxu0 %v2584
    %2836 = vmatpush.msra.mxu0 %v2580
    %2837 = vmatpush.msra.mxu0 %v2576
    %2838 = vmatpush.msra.mxu0 %v2572
    %2839 = vmatpush.msra.mxu0 %v2568
    %2840 = vmatmul.f32.gmra.mxu0 %v93
    %v2841 = vpop.f32.mrf.mxu0
    %v2842 = vadd.f32 0.0, %v2841
    %2843 = vmatmul.f32.gmra.mxu0 %v94
    %v2844 = vpop.f32.mrf.mxu0
    %v2845 = vadd.f32 0.0, %v2844
    %2846 = vmatmul.f32.gmra.mxu0 %v95
    %v2847 = vpop.f32.mrf.mxu0
    %v2848 = vadd.f32 0.0, %v2847
    %2849 = vmatmul.f32.gmra.mxu0 %v96
    %v2850 = vpop.f32.mrf.mxu0
    %v2851 = vadd.f32 0.0, %v2850
    %2852 = vmatmul.f32.gmra.mxu0 %v97
    %v2853 = vpop.f32.mrf.mxu0
    %v2854 = vadd.f32 0.0, %v2853
    %2855 = vmatmul.f32.gmra.mxu0 %v98
    %v2856 = vpop.f32.mrf.mxu0
    %v2857 = vadd.f32 0.0, %v2856
    %2858 = vmatmul.f32.gmra.mxu0 %v99
    %v2859 = vpop.f32.mrf.mxu0
    %v2860 = vadd.f32 0.0, %v2859
    %2861 = vmatmul.f32.gmra.mxu0 %v100
    %v2862 = vpop.f32.mrf.mxu0
    %v2863 = vadd.f32 0.0, %v2862
    %2864 = vmatmul.f32.gmra.mxu0 %v101
    %v2865 = vpop.f32.mrf.mxu0
    %v2866 = vadd.f32 0.0, %v2865
    %2867 = vmatmul.f32.gmra.mxu0 %v102
    %v2868 = vpop.f32.mrf.mxu0
    %v2869 = vadd.f32 0.0, %v2868
    %2870 = vmatmul.f32.gmra.mxu0 %v103
    %v2871 = vpop.f32.mrf.mxu0
    %v2872 = vadd.f32 0.0, %v2871
    %2873 = vmatmul.f32.gmra.mxu0 %v104
    %v2874 = vpop.f32.mrf.mxu0
    %v2875 = vadd.f32 0.0, %v2874
    %2876 = vmatmul.f32.gmra.mxu0 %v105
    %v2877 = vpop.f32.mrf.mxu0
    %v2878 = vadd.f32 0.0, %v2877
    %2879 = vmatmul.f32.gmra.mxu0 %v106
    %v2880 = vpop.f32.mrf.mxu0
    %v2881 = vadd.f32 0.0, %v2880
    %2882 = vmatmul.f32.gmra.mxu0 %v107
    %v2883 = vpop.f32.mrf.mxu0
    %v2884 = vadd.f32 0.0, %v2883
    %2885 = vmatmul.f32.gmra.mxu0 %v108
    %v2886 = vpop.f32.mrf.mxu0
    %v2887 = vadd.f32 0.0, %v2886
    %2888 = vdwg.mxu0
    %2889 = vset.pattern.permute.xlu0 2
    %2890 = vperm.xlu0 %2889, %v109
    %v2891 = vpop.permute.xlu0 %2890
    %2893 = vset.pattern.permute.xlu0 2
    %2894 = vperm.xlu0 %2893, %v110
    %v2895 = vpop.permute.xlu0 %2894
    %2897 = vset.pattern.permute.xlu0 2
    %2898 = vperm.xlu0 %2897, %v111
    %v2899 = vpop.permute.xlu0 %2898
    %2901 = vset.pattern.permute.xlu0 2
    %2902 = vperm.xlu0 %2901, %v112
    %v2903 = vpop.permute.xlu0 %2902
    %2905 = vset.pattern.permute.xlu0 2
    %2906 = vperm.xlu0 %2905, %v113
    %v2907 = vpop.permute.xlu0 %2906
    %2909 = vset.pattern.permute.xlu0 2
    %2910 = vperm.xlu0 %2909, %v114
    %v2911 = vpop.permute.xlu0 %2910
    %2913 = vset.pattern.permute.xlu0 2
    %2914 = vperm.xlu0 %2913, %v115
    %v2915 = vpop.permute.xlu0 %2914
    %2917 = vset.pattern.permute.xlu0 2
    %2918 = vperm.xlu0 %2917, %v116
    %v2919 = vpop.permute.xlu0 %2918
    %2921 = vset.pattern.permute.xlu0 2
    %2922 = vperm.xlu0 %2921, %v117
    %v2923 = vpop.permute.xlu0 %2922
    %2925 = vset.pattern.permute.xlu0 2
    %2926 = vperm.xlu0 %2925, %v118
    %v2927 = vpop.permute.xlu0 %2926
    %2929 = vset.pattern.permute.xlu0 2
    %2930 = vperm.xlu0 %2929, %v119
    %v2931 = vpop.permute.xlu0 %2930
    %2933 = vset.pattern.permute.xlu0 2
    %2934 = vperm.xlu0 %2933, %v120
    %v2935 = vpop.permute.xlu0 %2934
    %2937 = vset.pattern.permute.xlu0 2
    %2938 = vperm.xlu0 %2937, %v121
    %v2939 = vpop.permute.xlu0 %2938
    %2941 = vset.pattern.permute.xlu0 2
    %2942 = vperm.xlu0 %2941, %v122
    %v2943 = vpop.permute.xlu0 %2942
    %2945 = vset.pattern.permute.xlu0 2
    %2946 = vperm.xlu0 %2945, %v123
    %v2947 = vpop.permute.xlu0 %2946
    %2949 = vset.pattern.permute.xlu0 2
    %2950 = vperm.xlu0 %2949, %v124
    %v2951 = vpop.permute.xlu0 %2950
    %v2953 = vmul.f32 %v2891, %v2322
    %v2954 = vmul.f32 %v2891, %v2387
    %v2955 = vmul.f32 %v2891, %v2452
    %v2956 = vmul.f32 %v2891, %v2517
    %v2957 = vmul.f32 %v2895, %v2325
    %v2958 = vmul.f32 %v2895, %v2390
    %v2959 = vmul.f32 %v2895, %v2455
    %v2960 = vmul.f32 %v2895, %v2520
    %v2961 = vmul.f32 %v2899, %v2328
    %v2962 = vmul.f32 %v2899, %v2393
    %v2963 = vmul.f32 %v2899, %v2458
    %v2964 = vmul.f32 %v2899, %v2523
    %v2965 = vmul.f32 %v2903, %v2331
    %v2966 = vmul.f32 %v2903, %v2396
    %v2967 = vmul.f32 %v2903, %v2461
    %v2968 = vmul.f32 %v2903, %v2526
    %v2969 = vmul.f32 %v2907, %v2334
    %v2970 = vmul.f32 %v2907, %v2399
    %v2971 = vmul.f32 %v2907, %v2464
    %v2972 = vmul.f32 %v2907, %v2529
    %v2973 = vmul.f32 %v2911, %v2337
    %v2974 = vmul.f32 %v2911, %v2402
    %v2975 = vmul.f32 %v2911, %v2467
    %v2976 = vmul.f32 %v2911, %v2532
    %v2977 = vmul.f32 %v2915, %v2340
    %v2978 = vmul.f32 %v2915, %v2405
    %v2979 = vmul.f32 %v2915, %v2470
    %v2980 = vmul.f32 %v2915, %v2535
    %v2981 = vmul.f32 %v2919, %v2343
    %v2982 = vmul.f32 %v2919, %v2408
    %v2983 = vmul.f32 %v2919, %v2473
    %v2984 = vmul.f32 %v2919, %v2538
    %v2985 = vmul.f32 %v2923, %v2346
    %v2986 = vmul.f32 %v2923, %v2411
    %v2987 = vmul.f32 %v2923, %v2476
    %v2988 = vmul.f32 %v2923, %v2541
    %v2989 = vmul.f32 %v2927, %v2349
    %v2990 = vmul.f32 %v2927, %v2414
    %v2991 = vmul.f32 %v2927, %v2479
    %v2992 = vmul.f32 %v2927, %v2544
    %v2993 = vmul.f32 %v2931, %v2352
    %v2994 = vmul.f32 %v2931, %v2417
    %v2995 = vmul.f32 %v2931, %v2482
    %v2996 = vmul.f32 %v2931, %v2547
    %v2997 = vmul.f32 %v2935, %v2355
    %v2998 = vmul.f32 %v2935, %v2420
    %v2999 = vmul.f32 %v2935, %v2485
    %v3000 = vmul.f32 %v2935, %v2550
    %v3001 = vmul.f32 %v2939, %v2358
    %v3002 = vmul.f32 %v2939, %v2423
    %v3003 = vmul.f32 %v2939, %v2488
    %v3004 = vmul.f32 %v2939, %v2553
    %v3005 = vmul.f32 %v2943, %v2361
    %v3006 = vmul.f32 %v2943, %v2426
    %v3007 = vmul.f32 %v2943, %v2491
    %v3008 = vmul.f32 %v2943, %v2556
    %v3009 = vmul.f32 %v2947, %v2364
    %v3010 = vmul.f32 %v2947, %v2429
    %v3011 = vmul.f32 %v2947, %v2494
    %v3012 = vmul.f32 %v2947, %v2559
    %v3013 = vmul.f32 %v2951, %v2367
    %v3014 = vmul.f32 %v2951, %v2432
    %v3015 = vmul.f32 %v2951, %v2497
    %v3016 = vmul.f32 %v2951, %v2562
    %v3017 = vadd.f32 %v2175, %v2953
    %v3018 = vadd.f32 %v2176, %v2954
    %v3019 = vadd.f32 %v2177, %v2955
    %v3020 = vadd.f32 %v2178, %v2956
    %v3021 = vadd.f32 %v2179, %v2957
    %v3022 = vadd.f32 %v2180, %v2958
    %v3023 = vadd.f32 %v2181, %v2959
    %v3024 = vadd.f32 %v2182, %v2960
    %v3025 = vadd.f32 %v2183, %v2961
    %v3026 = vadd.f32 %v2184, %v2962
    %v3027 = vadd.f32 %v2185, %v2963
    %v3028 = vadd.f32 %v2186, %v2964
    %v3029 = vadd.f32 %v2187, %v2965
    %v3030 = vadd.f32 %v2188, %v2966
    %v3031 = vadd.f32 %v2189, %v2967
    %v3032 = vadd.f32 %v2190, %v2968
    %v3033 = vadd.f32 %v2191, %v2969
    %v3034 = vadd.f32 %v2192, %v2970
    %v3035 = vadd.f32 %v2193, %v2971
    %v3036 = vadd.f32 %v2194, %v2972
    %v3037 = vadd.f32 %v2195, %v2973
    %v3038 = vadd.f32 %v2196, %v2974
    %v3039 = vadd.f32 %v2197, %v2975
    %v3040 = vadd.f32 %v2198, %v2976
    %v3041 = vadd.f32 %v2199, %v2977
    %v3042 = vadd.f32 %v2200, %v2978
    %v3043 = vadd.f32 %v2201, %v2979
    %v3044 = vadd.f32 %v2202, %v2980
    %v3045 = vadd.f32 %v2203, %v2981
    %v3046 = vadd.f32 %v2204, %v2982
    %v3047 = vadd.f32 %v2205, %v2983
    %v3048 = vadd.f32 %v2206, %v2984
    %v3049 = vadd.f32 %v2207, %v2985
    %v3050 = vadd.f32 %v2208, %v2986
    %v3051 = vadd.f32 %v2209, %v2987
    %v3052 = vadd.f32 %v2210, %v2988
    %v3053 = vadd.f32 %v2211, %v2989
    %v3054 = vadd.f32 %v2212, %v2990
    %v3055 = vadd.f32 %v2213, %v2991
    %v3056 = vadd.f32 %v2214, %v2992
    %v3057 = vadd.f32 %v2215, %v2993
    %v3058 = vadd.f32 %v2216, %v2994
    %v3059 = vadd.f32 %v2217, %v2995
    %v3060 = vadd.f32 %v2218, %v2996
    %v3061 = vadd.f32 %v2219, %v2997
    %v3062 = vadd.f32 %v2220, %v2998
    %v3063 = vadd.f32 %v2221, %v2999
    %v3064 = vadd.f32 %v2222, %v3000
    %v3065 = vadd.f32 %v2223, %v3001
    %v3066 = vadd.f32 %v2224, %v3002
    %v3067 = vadd.f32 %v2225, %v3003
    %v3068 = vadd.f32 %v2226, %v3004
    %v3069 = vadd.f32 %v2227, %v3005
    %v3070 = vadd.f32 %v2228, %v3006
    %v3071 = vadd.f32 %v2229, %v3007
    %v3072 = vadd.f32 %v2230, %v3008
    %v3073 = vadd.f32 %v2231, %v3009
    %v3074 = vadd.f32 %v2232, %v3010
    %v3075 = vadd.f32 %v2233, %v3011
    %v3076 = vadd.f32 %v2234, %v3012
    %v3077 = vadd.f32 %v2235, %v3013
    %v3078 = vadd.f32 %v2236, %v3014
    %v3079 = vadd.f32 %v2237, %v3015
    %v3080 = vadd.f32 %v2238, %v3016
    %3081 = vset.pattern.permute.xlu0 2
    %3082 = vperm.xlu0 %3081, %v125
    %v3083 = vpop.permute.xlu0 %3082
    %3085 = vset.pattern.permute.xlu0 2
    %3086 = vperm.xlu0 %3085, %v126
    %v3087 = vpop.permute.xlu0 %3086
    %3089 = vset.pattern.permute.xlu0 2
    %3090 = vperm.xlu0 %3089, %v127
    %v3091 = vpop.permute.xlu0 %3090
    %3093 = vset.pattern.permute.xlu0 2
    %3094 = vperm.xlu0 %3093, %v128
    %v3095 = vpop.permute.xlu0 %3094
    %3097 = vset.pattern.permute.xlu0 2
    %3098 = vperm.xlu0 %3097, %v129
    %v3099 = vpop.permute.xlu0 %3098
    %3101 = vset.pattern.permute.xlu0 2
    %3102 = vperm.xlu0 %3101, %v130
    %v3103 = vpop.permute.xlu0 %3102
    %3105 = vset.pattern.permute.xlu0 2
    %3106 = vperm.xlu0 %3105, %v131
    %v3107 = vpop.permute.xlu0 %3106
    %3109 = vset.pattern.permute.xlu0 2
    %3110 = vperm.xlu0 %3109, %v132
    %v3111 = vpop.permute.xlu0 %3110
    %3113 = vset.pattern.permute.xlu0 2
    %3114 = vperm.xlu0 %3113, %v133
    %v3115 = vpop.permute.xlu0 %3114
    %3117 = vset.pattern.permute.xlu0 2
    %3118 = vperm.xlu0 %3117, %v134
    %v3119 = vpop.permute.xlu0 %3118
    %3121 = vset.pattern.permute.xlu0 2
    %3122 = vperm.xlu0 %3121, %v135
    %v3123 = vpop.permute.xlu0 %3122
    %3125 = vset.pattern.permute.xlu0 2
    %3126 = vperm.xlu0 %3125, %v136
    %v3127 = vpop.permute.xlu0 %3126
    %3129 = vset.pattern.permute.xlu0 2
    %3130 = vperm.xlu0 %3129, %v137
    %v3131 = vpop.permute.xlu0 %3130
    %3133 = vset.pattern.permute.xlu0 2
    %3134 = vperm.xlu0 %3133, %v138
    %v3135 = vpop.permute.xlu0 %3134
    %3137 = vset.pattern.permute.xlu0 2
    %3138 = vperm.xlu0 %3137, %v139
    %v3139 = vpop.permute.xlu0 %3138
    %3141 = vset.pattern.permute.xlu0 2
    %3142 = vperm.xlu0 %3141, %v140
    %v3143 = vpop.permute.xlu0 %3142
    %v3145 = vmul.f32 %v3083, %v2647
    %v3146 = vmul.f32 %v3083, %v2712
    %v3147 = vmul.f32 %v3083, %v2777
    %v3148 = vmul.f32 %v3083, %v2842
    %v3149 = vmul.f32 %v3087, %v2650
    %v3150 = vmul.f32 %v3087, %v2715
    %v3151 = vmul.f32 %v3087, %v2780
    %v3152 = vmul.f32 %v3087, %v2845
    %v3153 = vmul.f32 %v3091, %v2653
    %v3154 = vmul.f32 %v3091, %v2718
    %v3155 = vmul.f32 %v3091, %v2783
    %v3156 = vmul.f32 %v3091, %v2848
    %v3157 = vmul.f32 %v3095, %v2656
    %v3158 = vmul.f32 %v3095, %v2721
    %v3159 = vmul.f32 %v3095, %v2786
    %v3160 = vmul.f32 %v3095, %v2851
    %v3161 = vmul.f32 %v3099, %v2659
    %v3162 = vmul.f32 %v3099, %v2724
    %v3163 = vmul.f32 %v3099, %v2789
    %v3164 = vmul.f32 %v3099, %v2854
    %v3165 = vmul.f32 %v3103, %v2662
    %v3166 = vmul.f32 %v3103, %v2727
    %v3167 = vmul.f32 %v3103, %v2792
    %v3168 = vmul.f32 %v3103, %v2857
    %v3169 = vmul.f32 %v3107, %v2665
    %v3170 = vmul.f32 %v3107, %v2730
    %v3171 = vmul.f32 %v3107, %v2795
    %v3172 = vmul.f32 %v3107, %v2860
    %v3173 = vmul.f32 %v3111, %v2668
    %v3174 = vmul.f32 %v3111, %v2733
    %v3175 = vmul.f32 %v3111, %v2798
    %v3176 = vmul.f32 %v3111, %v2863
    %v3177 = vmul.f32 %v3115, %v2671
    %v3178 = vmul.f32 %v3115, %v2736
    %v3179 = vmul.f32 %v3115, %v2801
    %v3180 = vmul.f32 %v3115, %v2866
    %v3181 = vmul.f32 %v3119, %v2674
    %v3182 = vmul.f32 %v3119, %v2739
    %v3183 = vmul.f32 %v3119, %v2804
    %v3184 = vmul.f32 %v3119, %v2869
    %v3185 = vmul.f32 %v3123, %v2677
    %v3186 = vmul.f32 %v3123, %v2742
    %v3187 = vmul.f32 %v3123, %v2807
    %v3188 = vmul.f32 %v3123, %v2872
    %v3189 = vmul.f32 %v3127, %v2680
    %v3190 = vmul.f32 %v3127, %v2745
    %v3191 = vmul.f32 %v3127, %v2810
    %v3192 = vmul.f32 %v3127, %v2875
    %v3193 = vmul.f32 %v3131, %v2683
    %v3194 = vmul.f32 %v3131, %v2748
    %v3195 = vmul.f32 %v3131, %v2813
    %v3196 = vmul.f32 %v3131, %v2878
    %v3197 = vmul.f32 %v3135, %v2686
    %v3198 = vmul.f32 %v3135, %v2751
    %v3199 = vmul.f32 %v3135, %v2816
    %v3200 = vmul.f32 %v3135, %v2881
    %v3201 = vmul.f32 %v3139, %v2689
    %v3202 = vmul.f32 %v3139, %v2754
    %v3203 = vmul.f32 %v3139, %v2819
    %v3204 = vmul.f32 %v3139, %v2884
    %v3205 = vmul.f32 %v3143, %v2692
    %v3206 = vmul.f32 %v3143, %v2757
    %v3207 = vmul.f32 %v3143, %v2822
    %v3208 = vmul.f32 %v3143, %v2887
    %v3209 = vadd.f32 %v3017, %v3145
    %v3210 = vadd.f32 %v3018, %v3146
    %v3211 = vadd.f32 %v3019, %v3147
    %v3212 = vadd.f32 %v3020, %v3148
    %v3213 = vadd.f32 %v3021, %v3149
    %v3214 = vadd.f32 %v3022, %v3150
    %v3215 = vadd.f32 %v3023, %v3151
    %v3216 = vadd.f32 %v3024, %v3152
    %v3217 = vadd.f32 %v3025, %v3153
    %v3218 = vadd.f32 %v3026, %v3154
    %v3219 = vadd.f32 %v3027, %v3155
    %v3220 = vadd.f32 %v3028, %v3156
    %v3221 = vadd.f32 %v3029, %v3157
    %v3222 = vadd.f32 %v3030, %v3158
    %v3223 = vadd.f32 %v3031, %v3159
    %v3224 = vadd.f32 %v3032, %v3160
    %v3225 = vadd.f32 %v3033, %v3161
    %v3226 = vadd.f32 %v3034, %v3162
    %v3227 = vadd.f32 %v3035, %v3163
    %v3228 = vadd.f32 %v3036, %v3164
    %v3229 = vadd.f32 %v3037, %v3165
    %v3230 = vadd.f32 %v3038, %v3166
    %v3231 = vadd.f32 %v3039, %v3167
    %v3232 = vadd.f32 %v3040, %v3168
    %v3233 = vadd.f32 %v3041, %v3169
    %v3234 = vadd.f32 %v3042, %v3170
    %v3235 = vadd.f32 %v3043, %v3171
    %v3236 = vadd.f32 %v3044, %v3172
    %v3237 = vadd.f32 %v3045, %v3173
    %v3238 = vadd.f32 %v3046, %v3174
    %v3239 = vadd.f32 %v3047, %v3175
    %v3240 = vadd.f32 %v3048, %v3176
    %v3241 = vadd.f32 %v3049, %v3177
    %v3242 = vadd.f32 %v3050, %v3178
    %v3243 = vadd.f32 %v3051, %v3179
    %v3244 = vadd.f32 %v3052, %v3180
    %v3245 = vadd.f32 %v3053, %v3181
    %v3246 = vadd.f32 %v3054, %v3182
    %v3247 = vadd.f32 %v3055, %v3183
    %v3248 = vadd.f32 %v3056, %v3184
    %v3249 = vadd.f32 %v3057, %v3185
    %v3250 = vadd.f32 %v3058, %v3186
    %v3251 = vadd.f32 %v3059, %v3187
    %v3252 = vadd.f32 %v3060, %v3188
    %v3253 = vadd.f32 %v3061, %v3189
    %v3254 = vadd.f32 %v3062, %v3190
    %v3255 = vadd.f32 %v3063, %v3191
    %v3256 = vadd.f32 %v3064, %v3192
    %v3257 = vadd.f32 %v3065, %v3193
    %v3258 = vadd.f32 %v3066, %v3194
    %v3259 = vadd.f32 %v3067, %v3195
    %v3260 = vadd.f32 %v3068, %v3196
    %v3261 = vadd.f32 %v3069, %v3197
    %v3262 = vadd.f32 %v3070, %v3198
    %v3263 = vadd.f32 %v3071, %v3199
    %v3264 = vadd.f32 %v3072, %v3200
    %v3265 = vadd.f32 %v3073, %v3201
    %v3266 = vadd.f32 %v3074, %v3202
    %v3267 = vadd.f32 %v3075, %v3203
    %v3268 = vadd.f32 %v3076, %v3204
    %v3269 = vadd.f32 %v3077, %v3205
    %v3270 = vadd.f32 %v3078, %v3206
    %v3271 = vadd.f32 %v3079, %v3207
    %v3272 = vadd.f32 %v3080, %v3208
    %v3273 = vxor.u32 %v3209, 2147483648
    %v3274 = vxor.u32 %v3213, 2147483648
    %v3275 = vxor.u32 %v3217, 2147483648
    %v3276 = vxor.u32 %v3221, 2147483648
    %v3277 = vxor.u32 %v3225, 2147483648
    %v3278 = vxor.u32 %v3229, 2147483648
    %v3279 = vxor.u32 %v3233, 2147483648
    %v3280 = vxor.u32 %v3237, 2147483648
    %v3281 = vxor.u32 %v3241, 2147483648
    %v3282 = vxor.u32 %v3245, 2147483648
    %v3283 = vxor.u32 %v3249, 2147483648
    %v3284 = vxor.u32 %v3253, 2147483648
    %v3285 = vxor.u32 %v3257, 2147483648
    %v3286 = vxor.u32 %v3261, 2147483648
    %v3287 = vxor.u32 %v3265, 2147483648
    %v3288 = vxor.u32 %v3269, 2147483648
    %v3289 = vmul.f32 %v3273, 1.442695
    %v3290 = vpow.pop %v3289
    %v3291 = vmul.f32 %v3274, 1.442695
    %v3292 = vpow.pop %v3291
    %v3293 = vmul.f32 %v3275, 1.442695
    %v3294 = vpow.pop %v3293
    %v3295 = vmul.f32 %v3276, 1.442695
    %v3296 = vpow.pop %v3295
    %v3297 = vmul.f32 %v3277, 1.442695
    %v3298 = vpow.pop %v3297
    %v3299 = vmul.f32 %v3278, 1.442695
    %v3300 = vpow.pop %v3299
    %v3301 = vmul.f32 %v3279, 1.442695
    %v3302 = vpow.pop %v3301
    %v3303 = vmul.f32 %v3280, 1.442695
    %v3304 = vpow.pop %v3303
    %v3305 = vmul.f32 %v3281, 1.442695
    %v3306 = vpow.pop %v3305
    %v3307 = vmul.f32 %v3282, 1.442695
    %v3308 = vpow.pop %v3307
    %v3309 = vmul.f32 %v3283, 1.442695
    %v3310 = vpow.pop %v3309
    %v3311 = vmul.f32 %v3284, 1.442695
    %v3312 = vpow.pop %v3311
    %v3313 = vmul.f32 %v3285, 1.442695
    %v3314 = vpow.pop %v3313
    %v3315 = vmul.f32 %v3286, 1.442695
    %v3316 = vpow.pop %v3315
    %v3317 = vmul.f32 %v3287, 1.442695
    %v3318 = vpow.pop %v3317
    %v3319 = vmul.f32 %v3288, 1.442695
    %v3320 = vpow.pop %v3319
    %v3321 = vadd.f32 %v3290, 1.0
    %v3322 = vadd.f32 %v3292, 1.0
    %v3323 = vadd.f32 %v3294, 1.0
    %v3324 = vadd.f32 %v3296, 1.0
    %v3325 = vadd.f32 %v3298, 1.0
    %v3326 = vadd.f32 %v3300, 1.0
    %v3327 = vadd.f32 %v3302, 1.0
    %v3328 = vadd.f32 %v3304, 1.0
    %v3329 = vadd.f32 %v3306, 1.0
    %v3330 = vadd.f32 %v3308, 1.0
    %v3331 = vadd.f32 %v3310, 1.0
    %v3332 = vadd.f32 %v3312, 1.0
    %v3333 = vadd.f32 %v3314, 1.0
    %v3334 = vadd.f32 %v3316, 1.0
    %v3335 = vadd.f32 %v3318, 1.0
    %v3336 = vadd.f32 %v3320, 1.0
    %v3337 = vrcp.pop %v3321
    %v3338 = vmul.f32 %v3321, %v3337
    %v3339 = vsub.f32 1.0, %v3338
    %v3340 = vmul.f32 %v3337, %v3339
    %v3341 = vadd.f32 %v3337, %v3340
    %vm3342 = vweird.f32 %v3321
    %vm3343 = vweird.f32 %v3337
    %vm3344 = vmor %vm3342, %vm3343
    %v3345 = vsel %vm3344, %v3337, %v3341
    %v3346 = vand.u32 2147483647, %v3321
    %vm3347 = vcmp.eq.f32.partialorder %v3346, 8.507059e+37
    %v3348 = vand.u32 %v3321, 2147483648
    %v3349 = vor.u32 1.1754944e-38, %v3348
    %v3350 = vsel %vm3347, %v3349, %v3345
    %v3351 = vmul.f32 1.0, %v3350
    %v3352 = vrcp.pop %v3322
    %v3353 = vmul.f32 %v3322, %v3352
    %v3354 = vsub.f32 1.0, %v3353
    %v3355 = vmul.f32 %v3352, %v3354
    %v3356 = vadd.f32 %v3352, %v3355
    %vm3357 = vweird.f32 %v3322
    %vm3358 = vweird.f32 %v3352
    %vm3359 = vmor %vm3357, %vm3358
    %v3360 = vsel %vm3359, %v3352, %v3356
    %v3361 = vand.u32 2147483647, %v3322
    %vm3362 = vcmp.eq.f32.partialorder %v3361, 8.507059e+37
    %v3363 = vand.u32 %v3322, 2147483648
    %v3364 = vor.u32 1.1754944e-38, %v3363
    %v3365 = vsel %vm3362, %v3364, %v3360
    %v3366 = vmul.f32 1.0, %v3365
    %v3367 = vrcp.pop %v3323
    %v3368 = vmul.f32 %v3323, %v3367
    %v3369 = vsub.f32 1.0, %v3368
    %v3370 = vmul.f32 %v3367, %v3369
    %v3371 = vadd.f32 %v3367, %v3370
    %vm3372 = vweird.f32 %v3323
    %vm3373 = vweird.f32 %v3367
    %vm3374 = vmor %vm3372, %vm3373
    %v3375 = vsel %vm3374, %v3367, %v3371
    %v3376 = vand.u32 2147483647, %v3323
    %vm3377 = vcmp.eq.f32.partialorder %v3376, 8.507059e+37
    %v3378 = vand.u32 %v3323, 2147483648
    %v3379 = vor.u32 1.1754944e-38, %v3378
    %v3380 = vsel %vm3377, %v3379, %v3375
    %v3381 = vmul.f32 1.0, %v3380
    %v3382 = vrcp.pop %v3324
    %v3383 = vmul.f32 %v3324, %v3382
    %v3384 = vsub.f32 1.0, %v3383
    %v3385 = vmul.f32 %v3382, %v3384
    %v3386 = vadd.f32 %v3382, %v3385
    %vm3387 = vweird.f32 %v3324
    %vm3388 = vweird.f32 %v3382
    %vm3389 = vmor %vm3387, %vm3388
    %v3390 = vsel %vm3389, %v3382, %v3386
    %v3391 = vand.u32 2147483647, %v3324
    %vm3392 = vcmp.eq.f32.partialorder %v3391, 8.507059e+37
    %v3393 = vand.u32 %v3324, 2147483648
    %v3394 = vor.u32 1.1754944e-38, %v3393
    %v3395 = vsel %vm3392, %v3394, %v3390
    %v3396 = vmul.f32 1.0, %v3395
    %v3397 = vrcp.pop %v3325
    %v3398 = vmul.f32 %v3325, %v3397
    %v3399 = vsub.f32 1.0, %v3398
    %v3400 = vmul.f32 %v3397, %v3399
    %v3401 = vadd.f32 %v3397, %v3400
    %vm3402 = vweird.f32 %v3325
    %vm3403 = vweird.f32 %v3397
    %vm3404 = vmor %vm3402, %vm3403
    %v3405 = vsel %vm3404, %v3397, %v3401
    %v3406 = vand.u32 2147483647, %v3325
    %vm3407 = vcmp.eq.f32.partialorder %v3406, 8.507059e+37
    %v3408 = vand.u32 %v3325, 2147483648
    %v3409 = vor.u32 1.1754944e-38, %v3408
    %v3410 = vsel %vm3407, %v3409, %v3405
    %v3411 = vmul.f32 1.0, %v3410
    %v3412 = vrcp.pop %v3326
    %v3413 = vmul.f32 %v3326, %v3412
    %v3414 = vsub.f32 1.0, %v3413
    %v3415 = vmul.f32 %v3412, %v3414
    %v3416 = vadd.f32 %v3412, %v3415
    %vm3417 = vweird.f32 %v3326
    %vm3418 = vweird.f32 %v3412
    %vm3419 = vmor %vm3417, %vm3418
    %v3420 = vsel %vm3419, %v3412, %v3416
    %v3421 = vand.u32 2147483647, %v3326
    %vm3422 = vcmp.eq.f32.partialorder %v3421, 8.507059e+37
    %v3423 = vand.u32 %v3326, 2147483648
    %v3424 = vor.u32 1.1754944e-38, %v3423
    %v3425 = vsel %vm3422, %v3424, %v3420
    %v3426 = vmul.f32 1.0, %v3425
    %v3427 = vrcp.pop %v3327
    %v3428 = vmul.f32 %v3327, %v3427
    %v3429 = vsub.f32 1.0, %v3428
    %v3430 = vmul.f32 %v3427, %v3429
    %v3431 = vadd.f32 %v3427, %v3430
    %vm3432 = vweird.f32 %v3327
    %vm3433 = vweird.f32 %v3427
    %vm3434 = vmor %vm3432, %vm3433
    %v3435 = vsel %vm3434, %v3427, %v3431
    %v3436 = vand.u32 2147483647, %v3327
    %vm3437 = vcmp.eq.f32.partialorder %v3436, 8.507059e+37
    %v3438 = vand.u32 %v3327, 2147483648
    %v3439 = vor.u32 1.1754944e-38, %v3438
    %v3440 = vsel %vm3437, %v3439, %v3435
    %v3441 = vmul.f32 1.0, %v3440
    %v3442 = vrcp.pop %v3328
    %v3443 = vmul.f32 %v3328, %v3442
    %v3444 = vsub.f32 1.0, %v3443
    %v3445 = vmul.f32 %v3442, %v3444
    %v3446 = vadd.f32 %v3442, %v3445
    %vm3447 = vweird.f32 %v3328
    %vm3448 = vweird.f32 %v3442
    %vm3449 = vmor %vm3447, %vm3448
    %v3450 = vsel %vm3449, %v3442, %v3446
    %v3451 = vand.u32 2147483647, %v3328
    %vm3452 = vcmp.eq.f32.partialorder %v3451, 8.507059e+37
    %v3453 = vand.u32 %v3328, 2147483648
    %v3454 = vor.u32 1.1754944e-38, %v3453
    %v3455 = vsel %vm3452, %v3454, %v3450
    %v3456 = vmul.f32 1.0, %v3455
    %v3457 = vrcp.pop %v3329
    %v3458 = vmul.f32 %v3329, %v3457
    %v3459 = vsub.f32 1.0, %v3458
    %v3460 = vmul.f32 %v3457, %v3459
    %v3461 = vadd.f32 %v3457, %v3460
    %vm3462 = vweird.f32 %v3329
    %vm3463 = vweird.f32 %v3457
    %vm3464 = vmor %vm3462, %vm3463
    %v3465 = vsel %vm3464, %v3457, %v3461
    %v3466 = vand.u32 2147483647, %v3329
    %vm3467 = vcmp.eq.f32.partialorder %v3466, 8.507059e+37
    %v3468 = vand.u32 %v3329, 2147483648
    %v3469 = vor.u32 1.1754944e-38, %v3468
    %v3470 = vsel %vm3467, %v3469, %v3465
    %v3471 = vmul.f32 1.0, %v3470
    %v3472 = vrcp.pop %v3330
    %v3473 = vmul.f32 %v3330, %v3472
    %v3474 = vsub.f32 1.0, %v3473
    %v3475 = vmul.f32 %v3472, %v3474
    %v3476 = vadd.f32 %v3472, %v3475
    %vm3477 = vweird.f32 %v3330
    %vm3478 = vweird.f32 %v3472
    %vm3479 = vmor %vm3477, %vm3478
    %v3480 = vsel %vm3479, %v3472, %v3476
    %v3481 = vand.u32 2147483647, %v3330
    %vm3482 = vcmp.eq.f32.partialorder %v3481, 8.507059e+37
    %v3483 = vand.u32 %v3330, 2147483648
    %v3484 = vor.u32 1.1754944e-38, %v3483
    %v3485 = vsel %vm3482, %v3484, %v3480
    %v3486 = vmul.f32 1.0, %v3485
    %v3487 = vrcp.pop %v3331
    %v3488 = vmul.f32 %v3331, %v3487
    %v3489 = vsub.f32 1.0, %v3488
    %v3490 = vmul.f32 %v3487, %v3489
    %v3491 = vadd.f32 %v3487, %v3490
    %vm3492 = vweird.f32 %v3331
    %vm3493 = vweird.f32 %v3487
    %vm3494 = vmor %vm3492, %vm3493
    %v3495 = vsel %vm3494, %v3487, %v3491
    %v3496 = vand.u32 2147483647, %v3331
    %vm3497 = vcmp.eq.f32.partialorder %v3496, 8.507059e+37
    %v3498 = vand.u32 %v3331, 2147483648
    %v3499 = vor.u32 1.1754944e-38, %v3498
    %v3500 = vsel %vm3497, %v3499, %v3495
    %v3501 = vmul.f32 1.0, %v3500
    %v3502 = vrcp.pop %v3332
    %v3503 = vmul.f32 %v3332, %v3502
    %v3504 = vsub.f32 1.0, %v3503
    %v3505 = vmul.f32 %v3502, %v3504
    %v3506 = vadd.f32 %v3502, %v3505
    %vm3507 = vweird.f32 %v3332
    %vm3508 = vweird.f32 %v3502
    %vm3509 = vmor %vm3507, %vm3508
    %v3510 = vsel %vm3509, %v3502, %v3506
    %v3511 = vand.u32 2147483647, %v3332
    %vm3512 = vcmp.eq.f32.partialorder %v3511, 8.507059e+37
    %v3513 = vand.u32 %v3332, 2147483648
    %v3514 = vor.u32 1.1754944e-38, %v3513
    %v3515 = vsel %vm3512, %v3514, %v3510
    %v3516 = vmul.f32 1.0, %v3515
    %v3517 = vrcp.pop %v3333
    %v3518 = vmul.f32 %v3333, %v3517
    %v3519 = vsub.f32 1.0, %v3518
    %v3520 = vmul.f32 %v3517, %v3519
    %v3521 = vadd.f32 %v3517, %v3520
    %vm3522 = vweird.f32 %v3333
    %vm3523 = vweird.f32 %v3517
    %vm3524 = vmor %vm3522, %vm3523
    %v3525 = vsel %vm3524, %v3517, %v3521
    %v3526 = vand.u32 2147483647, %v3333
    %vm3527 = vcmp.eq.f32.partialorder %v3526, 8.507059e+37
    %v3528 = vand.u32 %v3333, 2147483648
    %v3529 = vor.u32 1.1754944e-38, %v3528
    %v3530 = vsel %vm3527, %v3529, %v3525
    %v3531 = vmul.f32 1.0, %v3530
    %v3532 = vrcp.pop %v3334
    %v3533 = vmul.f32 %v3334, %v3532
    %v3534 = vsub.f32 1.0, %v3533
    %v3535 = vmul.f32 %v3532, %v3534
    %v3536 = vadd.f32 %v3532, %v3535
    %vm3537 = vweird.f32 %v3334
    %vm3538 = vweird.f32 %v3532
    %vm3539 = vmor %vm3537, %vm3538
    %v3540 = vsel %vm3539, %v3532, %v3536
    %v3541 = vand.u32 2147483647, %v3334
    %vm3542 = vcmp.eq.f32.partialorder %v3541, 8.507059e+37
    %v3543 = vand.u32 %v3334, 2147483648
    %v3544 = vor.u32 1.1754944e-38, %v3543
    %v3545 = vsel %vm3542, %v3544, %v3540
    %v3546 = vmul.f32 1.0, %v3545
    %v3547 = vrcp.pop %v3335
    %v3548 = vmul.f32 %v3335, %v3547
    %v3549 = vsub.f32 1.0, %v3548
    %v3550 = vmul.f32 %v3547, %v3549
    %v3551 = vadd.f32 %v3547, %v3550
    %vm3552 = vweird.f32 %v3335
    %vm3553 = vweird.f32 %v3547
    %vm3554 = vmor %vm3552, %vm3553
    %v3555 = vsel %vm3554, %v3547, %v3551
    %v3556 = vand.u32 2147483647, %v3335
    %vm3557 = vcmp.eq.f32.partialorder %v3556, 8.507059e+37
    %v3558 = vand.u32 %v3335, 2147483648
    %v3559 = vor.u32 1.1754944e-38, %v3558
    %v3560 = vsel %vm3557, %v3559, %v3555
    %v3561 = vmul.f32 1.0, %v3560
    %v3562 = vrcp.pop %v3336
    %v3563 = vmul.f32 %v3336, %v3562
    %v3564 = vsub.f32 1.0, %v3563
    %v3565 = vmul.f32 %v3562, %v3564
    %v3566 = vadd.f32 %v3562, %v3565
    %vm3567 = vweird.f32 %v3336
    %vm3568 = vweird.f32 %v3562
    %vm3569 = vmor %vm3567, %vm3568
    %v3570 = vsel %vm3569, %v3562, %v3566
    %v3571 = vand.u32 2147483647, %v3336
    %vm3572 = vcmp.eq.f32.partialorder %v3571, 8.507059e+37
    %v3573 = vand.u32 %v3336, 2147483648
    %v3574 = vor.u32 1.1754944e-38, %v3573
    %v3575 = vsel %vm3572, %v3574, %v3570
    %v3576 = vmul.f32 1.0, %v3575
    %v3577 = vxor.u32 %v3210, 2147483648
    %v3578 = vxor.u32 %v3214, 2147483648
    %v3579 = vxor.u32 %v3218, 2147483648
    %v3580 = vxor.u32 %v3222, 2147483648
    %v3581 = vxor.u32 %v3226, 2147483648
    %v3582 = vxor.u32 %v3230, 2147483648
    %v3583 = vxor.u32 %v3234, 2147483648
    %v3584 = vxor.u32 %v3238, 2147483648
    %v3585 = vxor.u32 %v3242, 2147483648
    %v3586 = vxor.u32 %v3246, 2147483648
    %v3587 = vxor.u32 %v3250, 2147483648
    %v3588 = vxor.u32 %v3254, 2147483648
    %v3589 = vxor.u32 %v3258, 2147483648
    %v3590 = vxor.u32 %v3262, 2147483648
    %v3591 = vxor.u32 %v3266, 2147483648
    %v3592 = vxor.u32 %v3270, 2147483648
    %v3593 = vmul.f32 %v3577, 1.442695
    %v3594 = vpow.pop %v3593
    %v3595 = vmul.f32 %v3578, 1.442695
    %v3596 = vpow.pop %v3595
    %v3597 = vmul.f32 %v3579, 1.442695
    %v3598 = vpow.pop %v3597
    %v3599 = vmul.f32 %v3580, 1.442695
    %v3600 = vpow.pop %v3599
    %v3601 = vmul.f32 %v3581, 1.442695
    %v3602 = vpow.pop %v3601
    %v3603 = vmul.f32 %v3582, 1.442695
    %v3604 = vpow.pop %v3603
    %v3605 = vmul.f32 %v3583, 1.442695
    %v3606 = vpow.pop %v3605
    %v3607 = vmul.f32 %v3584, 1.442695
    %v3608 = vpow.pop %v3607
    %v3609 = vmul.f32 %v3585, 1.442695
    %v3610 = vpow.pop %v3609
    %v3611 = vmul.f32 %v3586, 1.442695
    %v3612 = vpow.pop %v3611
    %v3613 = vmul.f32 %v3587, 1.442695
    %v3614 = vpow.pop %v3613
    %v3615 = vmul.f32 %v3588, 1.442695
    %v3616 = vpow.pop %v3615
    %v3617 = vmul.f32 %v3589, 1.442695
    %v3618 = vpow.pop %v3617
    %v3619 = vmul.f32 %v3590, 1.442695
    %v3620 = vpow.pop %v3619
    %v3621 = vmul.f32 %v3591, 1.442695
    %v3622 = vpow.pop %v3621
    %v3623 = vmul.f32 %v3592, 1.442695
    %v3624 = vpow.pop %v3623
    %v3625 = vadd.f32 %v3594, 1.0
    %v3626 = vadd.f32 %v3596, 1.0
    %v3627 = vadd.f32 %v3598, 1.0
    %v3628 = vadd.f32 %v3600, 1.0
    %v3629 = vadd.f32 %v3602, 1.0
    %v3630 = vadd.f32 %v3604, 1.0
    %v3631 = vadd.f32 %v3606, 1.0
    %v3632 = vadd.f32 %v3608, 1.0
    %v3633 = vadd.f32 %v3610, 1.0
    %v3634 = vadd.f32 %v3612, 1.0
    %v3635 = vadd.f32 %v3614, 1.0
    %v3636 = vadd.f32 %v3616, 1.0
    %v3637 = vadd.f32 %v3618, 1.0
    %v3638 = vadd.f32 %v3620, 1.0
    %v3639 = vadd.f32 %v3622, 1.0
    %v3640 = vadd.f32 %v3624, 1.0
    %v3641 = vrcp.pop %v3625
    %v3642 = vmul.f32 %v3625, %v3641
    %v3643 = vsub.f32 1.0, %v3642
    %v3644 = vmul.f32 %v3641, %v3643
    %v3645 = vadd.f32 %v3641, %v3644
    %vm3646 = vweird.f32 %v3625
    %vm3647 = vweird.f32 %v3641
    %vm3648 = vmor %vm3646, %vm3647
    %v3649 = vsel %vm3648, %v3641, %v3645
    %v3650 = vand.u32 2147483647, %v3625
    %vm3651 = vcmp.eq.f32.partialorder %v3650, 8.507059e+37
    %v3652 = vand.u32 %v3625, 2147483648
    %v3653 = vor.u32 1.1754944e-38, %v3652
    %v3654 = vsel %vm3651, %v3653, %v3649
    %v3655 = vmul.f32 1.0, %v3654
    %v3656 = vrcp.pop %v3626
    %v3657 = vmul.f32 %v3626, %v3656
    %v3658 = vsub.f32 1.0, %v3657
    %v3659 = vmul.f32 %v3656, %v3658
    %v3660 = vadd.f32 %v3656, %v3659
    %vm3661 = vweird.f32 %v3626
    %vm3662 = vweird.f32 %v3656
    %vm3663 = vmor %vm3661, %vm3662
    %v3664 = vsel %vm3663, %v3656, %v3660
    %v3665 = vand.u32 2147483647, %v3626
    %vm3666 = vcmp.eq.f32.partialorder %v3665, 8.507059e+37
    %v3667 = vand.u32 %v3626, 2147483648
    %v3668 = vor.u32 1.1754944e-38, %v3667
    %v3669 = vsel %vm3666, %v3668, %v3664
    %v3670 = vmul.f32 1.0, %v3669
    %v3671 = vrcp.pop %v3627
    %v3672 = vmul.f32 %v3627, %v3671
    %v3673 = vsub.f32 1.0, %v3672
    %v3674 = vmul.f32 %v3671, %v3673
    %v3675 = vadd.f32 %v3671, %v3674
    %vm3676 = vweird.f32 %v3627
    %vm3677 = vweird.f32 %v3671
    %vm3678 = vmor %vm3676, %vm3677
    %v3679 = vsel %vm3678, %v3671, %v3675
    %v3680 = vand.u32 2147483647, %v3627
    %vm3681 = vcmp.eq.f32.partialorder %v3680, 8.507059e+37
    %v3682 = vand.u32 %v3627, 2147483648
    %v3683 = vor.u32 1.1754944e-38, %v3682
    %v3684 = vsel %vm3681, %v3683, %v3679
    %v3685 = vmul.f32 1.0, %v3684
    %v3686 = vrcp.pop %v3628
    %v3687 = vmul.f32 %v3628, %v3686
    %v3688 = vsub.f32 1.0, %v3687
    %v3689 = vmul.f32 %v3686, %v3688
    %v3690 = vadd.f32 %v3686, %v3689
    %vm3691 = vweird.f32 %v3628
    %vm3692 = vweird.f32 %v3686
    %vm3693 = vmor %vm3691, %vm3692
    %v3694 = vsel %vm3693, %v3686, %v3690
    %v3695 = vand.u32 2147483647, %v3628
    %vm3696 = vcmp.eq.f32.partialorder %v3695, 8.507059e+37
    %v3697 = vand.u32 %v3628, 2147483648
    %v3698 = vor.u32 1.1754944e-38, %v3697
    %v3699 = vsel %vm3696, %v3698, %v3694
    %v3700 = vmul.f32 1.0, %v3699
    %v3701 = vrcp.pop %v3629
    %v3702 = vmul.f32 %v3629, %v3701
    %v3703 = vsub.f32 1.0, %v3702
    %v3704 = vmul.f32 %v3701, %v3703
    %v3705 = vadd.f32 %v3701, %v3704
    %vm3706 = vweird.f32 %v3629
    %vm3707 = vweird.f32 %v3701
    %vm3708 = vmor %vm3706, %vm3707
    %v3709 = vsel %vm3708, %v3701, %v3705
    %v3710 = vand.u32 2147483647, %v3629
    %vm3711 = vcmp.eq.f32.partialorder %v3710, 8.507059e+37
    %v3712 = vand.u32 %v3629, 2147483648
    %v3713 = vor.u32 1.1754944e-38, %v3712
    %v3714 = vsel %vm3711, %v3713, %v3709
    %v3715 = vmul.f32 1.0, %v3714
    %v3716 = vrcp.pop %v3630
    %v3717 = vmul.f32 %v3630, %v3716
    %v3718 = vsub.f32 1.0, %v3717
    %v3719 = vmul.f32 %v3716, %v3718
    %v3720 = vadd.f32 %v3716, %v3719
    %vm3721 = vweird.f32 %v3630
    %vm3722 = vweird.f32 %v3716
    %vm3723 = vmor %vm3721, %vm3722
    %v3724 = vsel %vm3723, %v3716, %v3720
    %v3725 = vand.u32 2147483647, %v3630
    %vm3726 = vcmp.eq.f32.partialorder %v3725, 8.507059e+37
    %v3727 = vand.u32 %v3630, 2147483648
    %v3728 = vor.u32 1.1754944e-38, %v3727
    %v3729 = vsel %vm3726, %v3728, %v3724
    %v3730 = vmul.f32 1.0, %v3729
    %v3731 = vrcp.pop %v3631
    %v3732 = vmul.f32 %v3631, %v3731
    %v3733 = vsub.f32 1.0, %v3732
    %v3734 = vmul.f32 %v3731, %v3733
    %v3735 = vadd.f32 %v3731, %v3734
    %vm3736 = vweird.f32 %v3631
    %vm3737 = vweird.f32 %v3731
    %vm3738 = vmor %vm3736, %vm3737
    %v3739 = vsel %vm3738, %v3731, %v3735
    %v3740 = vand.u32 2147483647, %v3631
    %vm3741 = vcmp.eq.f32.partialorder %v3740, 8.507059e+37
    %v3742 = vand.u32 %v3631, 2147483648
    %v3743 = vor.u32 1.1754944e-38, %v3742
    %v3744 = vsel %vm3741, %v3743, %v3739
    %v3745 = vmul.f32 1.0, %v3744
    %v3746 = vrcp.pop %v3632
    %v3747 = vmul.f32 %v3632, %v3746
    %v3748 = vsub.f32 1.0, %v3747
    %v3749 = vmul.f32 %v3746, %v3748
    %v3750 = vadd.f32 %v3746, %v3749
    %vm3751 = vweird.f32 %v3632
    %vm3752 = vweird.f32 %v3746
    %vm3753 = vmor %vm3751, %vm3752
    %v3754 = vsel %vm3753, %v3746, %v3750
    %v3755 = vand.u32 2147483647, %v3632
    %vm3756 = vcmp.eq.f32.partialorder %v3755, 8.507059e+37
    %v3757 = vand.u32 %v3632, 2147483648
    %v3758 = vor.u32 1.1754944e-38, %v3757
    %v3759 = vsel %vm3756, %v3758, %v3754
    %v3760 = vmul.f32 1.0, %v3759
    %v3761 = vrcp.pop %v3633
    %v3762 = vmul.f32 %v3633, %v3761
    %v3763 = vsub.f32 1.0, %v3762
    %v3764 = vmul.f32 %v3761, %v3763
    %v3765 = vadd.f32 %v3761, %v3764
    %vm3766 = vweird.f32 %v3633
    %vm3767 = vweird.f32 %v3761
    %vm3768 = vmor %vm3766, %vm3767
    %v3769 = vsel %vm3768, %v3761, %v3765
    %v3770 = vand.u32 2147483647, %v3633
    %vm3771 = vcmp.eq.f32.partialorder %v3770, 8.507059e+37
    %v3772 = vand.u32 %v3633, 2147483648
    %v3773 = vor.u32 1.1754944e-38, %v3772
    %v3774 = vsel %vm3771, %v3773, %v3769
    %v3775 = vmul.f32 1.0, %v3774
    %v3776 = vrcp.pop %v3634
    %v3777 = vmul.f32 %v3634, %v3776
    %v3778 = vsub.f32 1.0, %v3777
    %v3779 = vmul.f32 %v3776, %v3778
    %v3780 = vadd.f32 %v3776, %v3779
    %vm3781 = vweird.f32 %v3634
    %vm3782 = vweird.f32 %v3776
    %vm3783 = vmor %vm3781, %vm3782
    %v3784 = vsel %vm3783, %v3776, %v3780
    %v3785 = vand.u32 2147483647, %v3634
    %vm3786 = vcmp.eq.f32.partialorder %v3785, 8.507059e+37
    %v3787 = vand.u32 %v3634, 2147483648
    %v3788 = vor.u32 1.1754944e-38, %v3787
    %v3789 = vsel %vm3786, %v3788, %v3784
    %v3790 = vmul.f32 1.0, %v3789
    %v3791 = vrcp.pop %v3635
    %v3792 = vmul.f32 %v3635, %v3791
    %v3793 = vsub.f32 1.0, %v3792
    %v3794 = vmul.f32 %v3791, %v3793
    %v3795 = vadd.f32 %v3791, %v3794
    %vm3796 = vweird.f32 %v3635
    %vm3797 = vweird.f32 %v3791
    %vm3798 = vmor %vm3796, %vm3797
    %v3799 = vsel %vm3798, %v3791, %v3795
    %v3800 = vand.u32 2147483647, %v3635
    %vm3801 = vcmp.eq.f32.partialorder %v3800, 8.507059e+37
    %v3802 = vand.u32 %v3635, 2147483648
    %v3803 = vor.u32 1.1754944e-38, %v3802
    %v3804 = vsel %vm3801, %v3803, %v3799
    %v3805 = vmul.f32 1.0, %v3804
    %v3806 = vrcp.pop %v3636
    %v3807 = vmul.f32 %v3636, %v3806
    %v3808 = vsub.f32 1.0, %v3807
    %v3809 = vmul.f32 %v3806, %v3808
    %v3810 = vadd.f32 %v3806, %v3809
    %vm3811 = vweird.f32 %v3636
    %vm3812 = vweird.f32 %v3806
    %vm3813 = vmor %vm3811, %vm3812
    %v3814 = vsel %vm3813, %v3806, %v3810
    %v3815 = vand.u32 2147483647, %v3636
    %vm3816 = vcmp.eq.f32.partialorder %v3815, 8.507059e+37
    %v3817 = vand.u32 %v3636, 2147483648
    %v3818 = vor.u32 1.1754944e-38, %v3817
    %v3819 = vsel %vm3816, %v3818, %v3814
    %v3820 = vmul.f32 1.0, %v3819
    %v3821 = vrcp.pop %v3637
    %v3822 = vmul.f32 %v3637, %v3821
    %v3823 = vsub.f32 1.0, %v3822
    %v3824 = vmul.f32 %v3821, %v3823
    %v3825 = vadd.f32 %v3821, %v3824
    %vm3826 = vweird.f32 %v3637
    %vm3827 = vweird.f32 %v3821
    %vm3828 = vmor %vm3826, %vm3827
    %v3829 = vsel %vm3828, %v3821, %v3825
    %v3830 = vand.u32 2147483647, %v3637
    %vm3831 = vcmp.eq.f32.partialorder %v3830, 8.507059e+37
    %v3832 = vand.u32 %v3637, 2147483648
    %v3833 = vor.u32 1.1754944e-38, %v3832
    %v3834 = vsel %vm3831, %v3833, %v3829
    %v3835 = vmul.f32 1.0, %v3834
    %v3836 = vrcp.pop %v3638
    %v3837 = vmul.f32 %v3638, %v3836
    %v3838 = vsub.f32 1.0, %v3837
    %v3839 = vmul.f32 %v3836, %v3838
    %v3840 = vadd.f32 %v3836, %v3839
    %vm3841 = vweird.f32 %v3638
    %vm3842 = vweird.f32 %v3836
    %vm3843 = vmor %vm3841, %vm3842
    %v3844 = vsel %vm3843, %v3836, %v3840
    %v3845 = vand.u32 2147483647, %v3638
    %vm3846 = vcmp.eq.f32.partialorder %v3845, 8.507059e+37
    %v3847 = vand.u32 %v3638, 2147483648
    %v3848 = vor.u32 1.1754944e-38, %v3847
    %v3849 = vsel %vm3846, %v3848, %v3844
    %v3850 = vmul.f32 1.0, %v3849
    %v3851 = vrcp.pop %v3639
    %v3852 = vmul.f32 %v3639, %v3851
    %v3853 = vsub.f32 1.0, %v3852
    %v3854 = vmul.f32 %v3851, %v3853
    %v3855 = vadd.f32 %v3851, %v3854
    %vm3856 = vweird.f32 %v3639
    %vm3857 = vweird.f32 %v3851
    %vm3858 = vmor %vm3856, %vm3857
    %v3859 = vsel %vm3858, %v3851, %v3855
    %v3860 = vand.u32 2147483647, %v3639
    %vm3861 = vcmp.eq.f32.partialorder %v3860, 8.507059e+37
    %v3862 = vand.u32 %v3639, 2147483648
    %v3863 = vor.u32 1.1754944e-38, %v3862
    %v3864 = vsel %vm3861, %v3863, %v3859
    %v3865 = vmul.f32 1.0, %v3864
    %v3866 = vrcp.pop %v3640
    %v3867 = vmul.f32 %v3640, %v3866
    %v3868 = vsub.f32 1.0, %v3867
    %v3869 = vmul.f32 %v3866, %v3868
    %v3870 = vadd.f32 %v3866, %v3869
    %vm3871 = vweird.f32 %v3640
    %vm3872 = vweird.f32 %v3866
    %vm3873 = vmor %vm3871, %vm3872
    %v3874 = vsel %vm3873, %v3866, %v3870
    %v3875 = vand.u32 2147483647, %v3640
    %vm3876 = vcmp.eq.f32.partialorder %v3875, 8.507059e+37
    %v3877 = vand.u32 %v3640, 2147483648
    %v3878 = vor.u32 1.1754944e-38, %v3877
    %v3879 = vsel %vm3876, %v3878, %v3874
    %v3880 = vmul.f32 1.0, %v3879
    %v3881 = vxor.u32 %v3211, 2147483648
    %v3882 = vxor.u32 %v3215, 2147483648
    %v3883 = vxor.u32 %v3219, 2147483648
    %v3884 = vxor.u32 %v3223, 2147483648
    %v3885 = vxor.u32 %v3227, 2147483648
    %v3886 = vxor.u32 %v3231, 2147483648
    %v3887 = vxor.u32 %v3235, 2147483648
    %v3888 = vxor.u32 %v3239, 2147483648
    %v3889 = vxor.u32 %v3243, 2147483648
    %v3890 = vxor.u32 %v3247, 2147483648
    %v3891 = vxor.u32 %v3251, 2147483648
    %v3892 = vxor.u32 %v3255, 2147483648
    %v3893 = vxor.u32 %v3259, 2147483648
    %v3894 = vxor.u32 %v3263, 2147483648
    %v3895 = vxor.u32 %v3267, 2147483648
    %v3896 = vxor.u32 %v3271, 2147483648
    %v3897 = vmul.f32 %v3881, 1.442695
    %v3898 = vpow.pop %v3897
    %v3899 = vmul.f32 %v3882, 1.442695
    %v3900 = vpow.pop %v3899
    %v3901 = vmul.f32 %v3883, 1.442695
    %v3902 = vpow.pop %v3901
    %v3903 = vmul.f32 %v3884, 1.442695
    %v3904 = vpow.pop %v3903
    %v3905 = vmul.f32 %v3885, 1.442695
    %v3906 = vpow.pop %v3905
    %v3907 = vmul.f32 %v3886, 1.442695
    %v3908 = vpow.pop %v3907
    %v3909 = vmul.f32 %v3887, 1.442695
    %v3910 = vpow.pop %v3909
    %v3911 = vmul.f32 %v3888, 1.442695
    %v3912 = vpow.pop %v3911
    %v3913 = vmul.f32 %v3889, 1.442695
    %v3914 = vpow.pop %v3913
    %v3915 = vmul.f32 %v3890, 1.442695
    %v3916 = vpow.pop %v3915
    %v3917 = vmul.f32 %v3891, 1.442695
    %v3918 = vpow.pop %v3917
    %v3919 = vmul.f32 %v3892, 1.442695
    %v3920 = vpow.pop %v3919
    %v3921 = vmul.f32 %v3893, 1.442695
    %v3922 = vpow.pop %v3921
    %v3923 = vmul.f32 %v3894, 1.442695
    %v3924 = vpow.pop %v3923
    %v3925 = vmul.f32 %v3895, 1.442695
    %v3926 = vpow.pop %v3925
    %v3927 = vmul.f32 %v3896, 1.442695
    %v3928 = vpow.pop %v3927
    %v3929 = vadd.f32 %v3898, 1.0
    %v3930 = vadd.f32 %v3900, 1.0
    %v3931 = vadd.f32 %v3902, 1.0
    %v3932 = vadd.f32 %v3904, 1.0
    %v3933 = vadd.f32 %v3906, 1.0
    %v3934 = vadd.f32 %v3908, 1.0
    %v3935 = vadd.f32 %v3910, 1.0
    %v3936 = vadd.f32 %v3912, 1.0
    %v3937 = vadd.f32 %v3914, 1.0
    %v3938 = vadd.f32 %v3916, 1.0
    %v3939 = vadd.f32 %v3918, 1.0
    %v3940 = vadd.f32 %v3920, 1.0
    %v3941 = vadd.f32 %v3922, 1.0
    %v3942 = vadd.f32 %v3924, 1.0
    %v3943 = vadd.f32 %v3926, 1.0
    %v3944 = vadd.f32 %v3928, 1.0
    %v3945 = vrcp.pop %v3929
    %v3946 = vmul.f32 %v3929, %v3945
    %v3947 = vsub.f32 1.0, %v3946
    %v3948 = vmul.f32 %v3945, %v3947
    %v3949 = vadd.f32 %v3945, %v3948
    %vm3950 = vweird.f32 %v3929
    %vm3951 = vweird.f32 %v3945
    %vm3952 = vmor %vm3950, %vm3951
    %v3953 = vsel %vm3952, %v3945, %v3949
    %v3954 = vand.u32 2147483647, %v3929
    %vm3955 = vcmp.eq.f32.partialorder %v3954, 8.507059e+37
    %v3956 = vand.u32 %v3929, 2147483648
    %v3957 = vor.u32 1.1754944e-38, %v3956
    %v3958 = vsel %vm3955, %v3957, %v3953
    %v3959 = vmul.f32 1.0, %v3958
    %v3960 = vrcp.pop %v3930
    %v3961 = vmul.f32 %v3930, %v3960
    %v3962 = vsub.f32 1.0, %v3961
    %v3963 = vmul.f32 %v3960, %v3962
    %v3964 = vadd.f32 %v3960, %v3963
    %vm3965 = vweird.f32 %v3930
    %vm3966 = vweird.f32 %v3960
    %vm3967 = vmor %vm3965, %vm3966
    %v3968 = vsel %vm3967, %v3960, %v3964
    %v3969 = vand.u32 2147483647, %v3930
    %vm3970 = vcmp.eq.f32.partialorder %v3969, 8.507059e+37
    %v3971 = vand.u32 %v3930, 2147483648
    %v3972 = vor.u32 1.1754944e-38, %v3971
    %v3973 = vsel %vm3970, %v3972, %v3968
    %v3974 = vmul.f32 1.0, %v3973
    %v3975 = vrcp.pop %v3931
    %v3976 = vmul.f32 %v3931, %v3975
    %v3977 = vsub.f32 1.0, %v3976
    %v3978 = vmul.f32 %v3975, %v3977
    %v3979 = vadd.f32 %v3975, %v3978
    %vm3980 = vweird.f32 %v3931
    %vm3981 = vweird.f32 %v3975
    %vm3982 = vmor %vm3980, %vm3981
    %v3983 = vsel %vm3982, %v3975, %v3979
    %v3984 = vand.u32 2147483647, %v3931
    %vm3985 = vcmp.eq.f32.partialorder %v3984, 8.507059e+37
    %v3986 = vand.u32 %v3931, 2147483648
    %v3987 = vor.u32 1.1754944e-38, %v3986
    %v3988 = vsel %vm3985, %v3987, %v3983
    %v3989 = vmul.f32 1.0, %v3988
    %v3990 = vrcp.pop %v3932
    %v3991 = vmul.f32 %v3932, %v3990
    %v3992 = vsub.f32 1.0, %v3991
    %v3993 = vmul.f32 %v3990, %v3992
    %v3994 = vadd.f32 %v3990, %v3993
    %vm3995 = vweird.f32 %v3932
    %vm3996 = vweird.f32 %v3990
    %vm3997 = vmor %vm3995, %vm3996
    %v3998 = vsel %vm3997, %v3990, %v3994
    %v3999 = vand.u32 2147483647, %v3932
    %vm4000 = vcmp.eq.f32.partialorder %v3999, 8.507059e+37
    %v4001 = vand.u32 %v3932, 2147483648
    %v4002 = vor.u32 1.1754944e-38, %v4001
    %v4003 = vsel %vm4000, %v4002, %v3998
    %v4004 = vmul.f32 1.0, %v4003
    %v4005 = vrcp.pop %v3933
    %v4006 = vmul.f32 %v3933, %v4005
    %v4007 = vsub.f32 1.0, %v4006
    %v4008 = vmul.f32 %v4005, %v4007
    %v4009 = vadd.f32 %v4005, %v4008
    %vm4010 = vweird.f32 %v3933
    %vm4011 = vweird.f32 %v4005
    %vm4012 = vmor %vm4010, %vm4011
    %v4013 = vsel %vm4012, %v4005, %v4009
    %v4014 = vand.u32 2147483647, %v3933
    %vm4015 = vcmp.eq.f32.partialorder %v4014, 8.507059e+37
    %v4016 = vand.u32 %v3933, 2147483648
    %v4017 = vor.u32 1.1754944e-38, %v4016
    %v4018 = vsel %vm4015, %v4017, %v4013
    %v4019 = vmul.f32 1.0, %v4018
    %v4020 = vrcp.pop %v3934
    %v4021 = vmul.f32 %v3934, %v4020
    %v4022 = vsub.f32 1.0, %v4021
    %v4023 = vmul.f32 %v4020, %v4022
    %v4024 = vadd.f32 %v4020, %v4023
    %vm4025 = vweird.f32 %v3934
    %vm4026 = vweird.f32 %v4020
    %vm4027 = vmor %vm4025, %vm4026
    %v4028 = vsel %vm4027, %v4020, %v4024
    %v4029 = vand.u32 2147483647, %v3934
    %vm4030 = vcmp.eq.f32.partialorder %v4029, 8.507059e+37
    %v4031 = vand.u32 %v3934, 2147483648
    %v4032 = vor.u32 1.1754944e-38, %v4031
    %v4033 = vsel %vm4030, %v4032, %v4028
    %v4034 = vmul.f32 1.0, %v4033
    %v4035 = vrcp.pop %v3935
    %v4036 = vmul.f32 %v3935, %v4035
    %v4037 = vsub.f32 1.0, %v4036
    %v4038 = vmul.f32 %v4035, %v4037
    %v4039 = vadd.f32 %v4035, %v4038
    %vm4040 = vweird.f32 %v3935
    %vm4041 = vweird.f32 %v4035
    %vm4042 = vmor %vm4040, %vm4041
    %v4043 = vsel %vm4042, %v4035, %v4039
    %v4044 = vand.u32 2147483647, %v3935
    %vm4045 = vcmp.eq.f32.partialorder %v4044, 8.507059e+37
    %v4046 = vand.u32 %v3935, 2147483648
    %v4047 = vor.u32 1.1754944e-38, %v4046
    %v4048 = vsel %vm4045, %v4047, %v4043
    %v4049 = vmul.f32 1.0, %v4048
    %v4050 = vrcp.pop %v3936
    %v4051 = vmul.f32 %v3936, %v4050
    %v4052 = vsub.f32 1.0, %v4051
    %v4053 = vmul.f32 %v4050, %v4052
    %v4054 = vadd.f32 %v4050, %v4053
    %vm4055 = vweird.f32 %v3936
    %vm4056 = vweird.f32 %v4050
    %vm4057 = vmor %vm4055, %vm4056
    %v4058 = vsel %vm4057, %v4050, %v4054
    %v4059 = vand.u32 2147483647, %v3936
    %vm4060 = vcmp.eq.f32.partialorder %v4059, 8.507059e+37
    %v4061 = vand.u32 %v3936, 2147483648
    %v4062 = vor.u32 1.1754944e-38, %v4061
    %v4063 = vsel %vm4060, %v4062, %v4058
    %v4064 = vmul.f32 1.0, %v4063
    %v4065 = vrcp.pop %v3937
    %v4066 = vmul.f32 %v3937, %v4065
    %v4067 = vsub.f32 1.0, %v4066
    %v4068 = vmul.f32 %v4065, %v4067
    %v4069 = vadd.f32 %v4065, %v4068
    %vm4070 = vweird.f32 %v3937
    %vm4071 = vweird.f32 %v4065
    %vm4072 = vmor %vm4070, %vm4071
    %v4073 = vsel %vm4072, %v4065, %v4069
    %v4074 = vand.u32 2147483647, %v3937
    %vm4075 = vcmp.eq.f32.partialorder %v4074, 8.507059e+37
    %v4076 = vand.u32 %v3937, 2147483648
    %v4077 = vor.u32 1.1754944e-38, %v4076
    %v4078 = vsel %vm4075, %v4077, %v4073
    %v4079 = vmul.f32 1.0, %v4078
    %v4080 = vrcp.pop %v3938
    %v4081 = vmul.f32 %v3938, %v4080
    %v4082 = vsub.f32 1.0, %v4081
    %v4083 = vmul.f32 %v4080, %v4082
    %v4084 = vadd.f32 %v4080, %v4083
    %vm4085 = vweird.f32 %v3938
    %vm4086 = vweird.f32 %v4080
    %vm4087 = vmor %vm4085, %vm4086
    %v4088 = vsel %vm4087, %v4080, %v4084
    %v4089 = vand.u32 2147483647, %v3938
    %vm4090 = vcmp.eq.f32.partialorder %v4089, 8.507059e+37
    %v4091 = vand.u32 %v3938, 2147483648
    %v4092 = vor.u32 1.1754944e-38, %v4091
    %v4093 = vsel %vm4090, %v4092, %v4088
    %v4094 = vmul.f32 1.0, %v4093
    %v4095 = vrcp.pop %v3939
    %v4096 = vmul.f32 %v3939, %v4095
    %v4097 = vsub.f32 1.0, %v4096
    %v4098 = vmul.f32 %v4095, %v4097
    %v4099 = vadd.f32 %v4095, %v4098
    %vm4100 = vweird.f32 %v3939
    %vm4101 = vweird.f32 %v4095
    %vm4102 = vmor %vm4100, %vm4101
    %v4103 = vsel %vm4102, %v4095, %v4099
    %v4104 = vand.u32 2147483647, %v3939
    %vm4105 = vcmp.eq.f32.partialorder %v4104, 8.507059e+37
    %v4106 = vand.u32 %v3939, 2147483648
    %v4107 = vor.u32 1.1754944e-38, %v4106
    %v4108 = vsel %vm4105, %v4107, %v4103
    %v4109 = vmul.f32 1.0, %v4108
    %v4110 = vrcp.pop %v3940
    %v4111 = vmul.f32 %v3940, %v4110
    %v4112 = vsub.f32 1.0, %v4111
    %v4113 = vmul.f32 %v4110, %v4112
    %v4114 = vadd.f32 %v4110, %v4113
    %vm4115 = vweird.f32 %v3940
    %vm4116 = vweird.f32 %v4110
    %vm4117 = vmor %vm4115, %vm4116
    %v4118 = vsel %vm4117, %v4110, %v4114
    %v4119 = vand.u32 2147483647, %v3940
    %vm4120 = vcmp.eq.f32.partialorder %v4119, 8.507059e+37
    %v4121 = vand.u32 %v3940, 2147483648
    %v4122 = vor.u32 1.1754944e-38, %v4121
    %v4123 = vsel %vm4120, %v4122, %v4118
    %v4124 = vmul.f32 1.0, %v4123
    %v4125 = vrcp.pop %v3941
    %v4126 = vmul.f32 %v3941, %v4125
    %v4127 = vsub.f32 1.0, %v4126
    %v4128 = vmul.f32 %v4125, %v4127
    %v4129 = vadd.f32 %v4125, %v4128
    %vm4130 = vweird.f32 %v3941
    %vm4131 = vweird.f32 %v4125
    %vm4132 = vmor %vm4130, %vm4131
    %v4133 = vsel %vm4132, %v4125, %v4129
    %v4134 = vand.u32 2147483647, %v3941
    %vm4135 = vcmp.eq.f32.partialorder %v4134, 8.507059e+37
    %v4136 = vand.u32 %v3941, 2147483648
    %v4137 = vor.u32 1.1754944e-38, %v4136
    %v4138 = vsel %vm4135, %v4137, %v4133
    %v4139 = vmul.f32 1.0, %v4138
    %v4140 = vrcp.pop %v3942
    %v4141 = vmul.f32 %v3942, %v4140
    %v4142 = vsub.f32 1.0, %v4141
    %v4143 = vmul.f32 %v4140, %v4142
    %v4144 = vadd.f32 %v4140, %v4143
    %vm4145 = vweird.f32 %v3942
    %vm4146 = vweird.f32 %v4140
    %vm4147 = vmor %vm4145, %vm4146
    %v4148 = vsel %vm4147, %v4140, %v4144
    %v4149 = vand.u32 2147483647, %v3942
    %vm4150 = vcmp.eq.f32.partialorder %v4149, 8.507059e+37
    %v4151 = vand.u32 %v3942, 2147483648
    %v4152 = vor.u32 1.1754944e-38, %v4151
    %v4153 = vsel %vm4150, %v4152, %v4148
    %v4154 = vmul.f32 1.0, %v4153
    %v4155 = vrcp.pop %v3943
    %v4156 = vmul.f32 %v3943, %v4155
    %v4157 = vsub.f32 1.0, %v4156
    %v4158 = vmul.f32 %v4155, %v4157
    %v4159 = vadd.f32 %v4155, %v4158
    %vm4160 = vweird.f32 %v3943
    %vm4161 = vweird.f32 %v4155
    %vm4162 = vmor %vm4160, %vm4161
    %v4163 = vsel %vm4162, %v4155, %v4159
    %v4164 = vand.u32 2147483647, %v3943
    %vm4165 = vcmp.eq.f32.partialorder %v4164, 8.507059e+37
    %v4166 = vand.u32 %v3943, 2147483648
    %v4167 = vor.u32 1.1754944e-38, %v4166
    %v4168 = vsel %vm4165, %v4167, %v4163
    %v4169 = vmul.f32 1.0, %v4168
    %v4170 = vrcp.pop %v3944
    %v4171 = vmul.f32 %v3944, %v4170
    %v4172 = vsub.f32 1.0, %v4171
    %v4173 = vmul.f32 %v4170, %v4172
    %v4174 = vadd.f32 %v4170, %v4173
    %vm4175 = vweird.f32 %v3944
    %vm4176 = vweird.f32 %v4170
    %vm4177 = vmor %vm4175, %vm4176
    %v4178 = vsel %vm4177, %v4170, %v4174
    %v4179 = vand.u32 2147483647, %v3944
    %vm4180 = vcmp.eq.f32.partialorder %v4179, 8.507059e+37
    %v4181 = vand.u32 %v3944, 2147483648
    %v4182 = vor.u32 1.1754944e-38, %v4181
    %v4183 = vsel %vm4180, %v4182, %v4178
    %v4184 = vmul.f32 1.0, %v4183
    %v4185 = vtanh.pop %v3212
    %v4186 = vtanh.pop %v3216
    %v4187 = vtanh.pop %v3220
    %v4188 = vtanh.pop %v3224
    %v4189 = vtanh.pop %v3228
    %v4190 = vtanh.pop %v3232
    %v4191 = vtanh.pop %v3236
    %v4192 = vtanh.pop %v3240
    %v4193 = vtanh.pop %v3244
    %v4194 = vtanh.pop %v3248
    %v4195 = vtanh.pop %v3252
    %v4196 = vtanh.pop %v3256
    %v4197 = vtanh.pop %v3260
    %v4198 = vtanh.pop %v3264
    %v4199 = vtanh.pop %v3268
    %v4200 = vtanh.pop %v3272
    %v4201 = vld [vmem:[#allocation2] sm:$0xff]
    %v4202 = vld [vmem:[#allocation2 + $0x8] sm:$0xff]
    %v4203 = vld [vmem:[#allocation2 + $0x10] sm:$0xff]
    %v4204 = vld [vmem:[#allocation2 + $0x18] sm:$0xff]
    %v4205 = vld [vmem:[#allocation2 + $0x20] sm:$0xff]
    %v4206 = vld [vmem:[#allocation2 + $0x28] sm:$0xff]
    %v4207 = vld [vmem:[#allocation2 + $0x30] sm:$0xff]
    %v4208 = vld [vmem:[#allocation2 + $0x38] sm:$0xff]
    %v4209 = vld [vmem:[#allocation2 + $0x40] sm:$0xff]
    %v4210 = vld [vmem:[#allocation2 + $0x48] sm:$0xff]
    %v4211 = vld [vmem:[#allocation2 + $0x50] sm:$0xff]
    %v4212 = vld [vmem:[#allocation2 + $0x58] sm:$0xff]
    %v4213 = vld [vmem:[#allocation2 + $0x60] sm:$0xff]
    %v4214 = vld [vmem:[#allocation2 + $0x68] sm:$0xff]
    %v4215 = vld [vmem:[#allocation2 + $0x70] sm:$0xff]
    %v4216 = vld [vmem:[#allocation2 + $0x78] sm:$0xff]
    %v4217 = vmul.f32 %v4201, %v3655
    %v4218 = vmul.f32 %v4202, %v3670
    %v4219 = vmul.f32 %v4203, %v3685
    %v4220 = vmul.f32 %v4204, %v3700
    %v4221 = vmul.f32 %v4205, %v3715
    %v4222 = vmul.f32 %v4206, %v3730
    %v4223 = vmul.f32 %v4207, %v3745
    %v4224 = vmul.f32 %v4208, %v3760
    %v4225 = vmul.f32 %v4209, %v3775
    %v4226 = vmul.f32 %v4210, %v3790
    %v4227 = vmul.f32 %v4211, %v3805
    %v4228 = vmul.f32 %v4212, %v3820
    %v4229 = vmul.f32 %v4213, %v3835
    %v4230 = vmul.f32 %v4214, %v3850
    %v4231 = vmul.f32 %v4215, %v3865
    %v4232 = vmul.f32 %v4216, %v3880
    %v4233 = vmul.f32 %v3351, %v4185
    %v4234 = vmul.f32 %v3366, %v4186
    %v4235 = vmul.f32 %v3381, %v4187
    %v4236 = vmul.f32 %v3396, %v4188
    %v4237 = vmul.f32 %v3411, %v4189
    %v4238 = vmul.f32 %v3426, %v4190
    %v4239 = vmul.f32 %v3441, %v4191
    %v4240 = vmul.f32 %v3456, %v4192
    %v4241 = vmul.f32 %v3471, %v4193
    %v4242 = vmul.f32 %v3486, %v4194
    %v4243 = vmul.f32 %v3501, %v4195
    %v4244 = vmul.f32 %v3516, %v4196
    %v4245 = vmul.f32 %v3531, %v4197
    %v4246 = vmul.f32 %v3546, %v4198
    %v4247 = vmul.f32 %v3561, %v4199
    %v4248 = vmul.f32 %v3576, %v4200
    %v4249 = vadd.f32 %v4217, %v4233
    %v4250 = vadd.f32 %v4218, %v4234
    %v4251 = vadd.f32 %v4219, %v4235
    %v4252 = vadd.f32 %v4220, %v4236
    %v4253 = vadd.f32 %v4221, %v4237
    %v4254 = vadd.f32 %v4222, %v4238
    %v4255 = vadd.f32 %v4223, %v4239
    %v4256 = vadd.f32 %v4224, %v4240
    %v4257 = vadd.f32 %v4225, %v4241
    %v4258 = vadd.f32 %v4226, %v4242
    %v4259 = vadd.f32 %v4227, %v4243
    %v4260 = vadd.f32 %v4228, %v4244
    %v4261 = vadd.f32 %v4229, %v4245
    %v4262 = vadd.f32 %v4230, %v4246
    %v4263 = vadd.f32 %v4231, %v4247
    %v4264 = vadd.f32 %v4232, %v4248
    %v4265 = vtanh.pop %v4249
    %v4266 = vtanh.pop %v4250
    %v4267 = vtanh.pop %v4251
    %v4268 = vtanh.pop %v4252
    %v4269 = vtanh.pop %v4253
    %v4270 = vtanh.pop %v4254
    %v4271 = vtanh.pop %v4255
    %v4272 = vtanh.pop %v4256
    %v4273 = vtanh.pop %v4257
    %v4274 = vtanh.pop %v4258
    %v4275 = vtanh.pop %v4259
    %v4276 = vtanh.pop %v4260
    %v4277 = vtanh.pop %v4261
    %v4278 = vtanh.pop %v4262
    %v4279 = vtanh.pop %v4263
    %v4280 = vtanh.pop %v4264
    %v4281 = vmul.f32 %v3959, %v4265
    %v4282 = vmul.f32 %v3974, %v4266
    %v4283 = vmul.f32 %v3989, %v4267
    %v4284 = vmul.f32 %v4004, %v4268
    %v4285 = vmul.f32 %v4019, %v4269
    %v4286 = vmul.f32 %v4034, %v4270
    %v4287 = vmul.f32 %v4049, %v4271
    %v4288 = vmul.f32 %v4064, %v4272
    %v4289 = vmul.f32 %v4079, %v4273
    %v4290 = vmul.f32 %v4094, %v4274
    %v4291 = vmul.f32 %v4109, %v4275
    %v4292 = vmul.f32 %v4124, %v4276
    %v4293 = vmul.f32 %v4139, %v4277
    %v4294 = vmul.f32 %v4154, %v4278
    %v4295 = vmul.f32 %v4169, %v4279
    %v4296 = vmul.f32 %v4184, %v4280
    %4297 = vst [vmem:[#allocation8] sm:$0xff] %v4281
    %4298 = vst [vmem:[#allocation8 + $0x8] sm:$0xff] %v4282
    %4299 = vst [vmem:[#allocation8 + $0x10] sm:$0xff] %v4283
    %4300 = vst [vmem:[#allocation8 + $0x18] sm:$0xff] %v4284
    %4301 = vst [vmem:[#allocation8 + $0x20] sm:$0xff] %v4285
    %4302 = vst [vmem:[#allocation8 + $0x28] sm:$0xff] %v4286
    %4303 = vst [vmem:[#allocation8 + $0x30] sm:$0xff] %v4287
    %4304 = vst [vmem:[#allocation8 + $0x38] sm:$0xff] %v4288
    %4305 = vst [vmem:[#allocation8 + $0x40] sm:$0xff] %v4289
    %4306 = vst [vmem:[#allocation8 + $0x48] sm:$0xff] %v4290
    %4307 = vst [vmem:[#allocation8 + $0x50] sm:$0xff] %v4291
    %4308 = vst [vmem:[#allocation8 + $0x58] sm:$0xff] %v4292
    %4309 = vst [vmem:[#allocation8 + $0x60] sm:$0xff] %v4293
    %4310 = vst [vmem:[#allocation8 + $0x68] sm:$0xff] %v4294
    %4311 = vst [vmem:[#allocation8 + $0x70] sm:$0xff] %v4295
    %4312 = vst [vmem:[#allocation8 + $0x78] sm:$0xff] %v4296
    %4313 = vst [vmem:[#allocation9] sm:$0xff] %v4249
    %4314 = vst [vmem:[#allocation9 + $0x8] sm:$0xff] %v4250
    %4315 = vst [vmem:[#allocation9 + $0x10] sm:$0xff] %v4251
    %4316 = vst [vmem:[#allocation9 + $0x18] sm:$0xff] %v4252
    %4317 = vst [vmem:[#allocation9 + $0x20] sm:$0xff] %v4253
    %4318 = vst [vmem:[#allocation9 + $0x28] sm:$0xff] %v4254
    %4319 = vst [vmem:[#allocation9 + $0x30] sm:$0xff] %v4255
    %4320 = vst [vmem:[#allocation9 + $0x38] sm:$0xff] %v4256
    %4321 = vst [vmem:[#allocation9 + $0x40] sm:$0xff] %v4257
    %4322 = vst [vmem:[#allocation9 + $0x48] sm:$0xff] %v4258
    %4323 = vst [vmem:[#allocation9 + $0x50] sm:$0xff] %v4259
    %4324 = vst [vmem:[#allocation9 + $0x58] sm:$0xff] %v4260
    %4325 = vst [vmem:[#allocation9 + $0x60] sm:$0xff] %v4261
    %4326 = vst [vmem:[#allocation9 + $0x68] sm:$0xff] %v4262
    %4327 = vst [vmem:[#allocation9 + $0x70] sm:$0xff] %v4263
    %4328 = vst [vmem:[#allocation9 + $0x78] sm:$0xff] %v4264
    // Predicated region
    $region42: #{tpu_custom_call.1} parent=1 // pred_check
      _
    $region43: #{tpu_custom_call.1} parent=1 // pred_check_branch
      %4330 = sbr.rel (0) target = $region45
    $region44: #{tpu_custom_call.1} parent=1 // pred_region
      %4332 = vsyncadd [#allocation4], 0
      %s4333 = sshll.u32 [#allocation8], 4
      %s4334 = int_to_ptr.vmem [resolvable:$true] %s4333
      %s4335 = sshll.u32 %s7, 4
      %s4336 = int_to_ptr.hbm [resolvable:$true] %s4335
      %4341 = dma.vmem_to_hbm [thread:$0]  %s4334, 2048, %s4336, [#allocation4], 128, 128, 8
    $region45: #{tpu_custom_call.1} parent=1 // pred_fallthru
      _
    // Predicated region
    $region46: #{tpu_custom_call.1} parent=1 // pred_check
      _
    $region47: #{tpu_custom_call.1} parent=1 // pred_check_branch
      %4343 = sbr.rel (0) target = $region49
    $region48: #{tpu_custom_call.1} parent=1 // pred_region
      %4345 = vsyncadd [#allocation10], 0
      %s4346 = sshll.u32 [#allocation9], 4
      %s4347 = int_to_ptr.vmem [resolvable:$true] %s4346
      %s4348 = sshll.u32 %s8, 4
      %s4349 = int_to_ptr.hbm [resolvable:$true] %s4348
      %4354 = dma.vmem_to_hbm [thread:$0]  %s4347, 2048, %s4349, [#allocation10], 128, 128, 8
    $region49: #{tpu_custom_call.1} parent=1 // pred_fallthru
      _
    // Predicated region
    $region50: #{tpu_custom_call.1} parent=1 // pred_check
      _
    $region51: #{tpu_custom_call.1} parent=1 // pred_check_branch
      %4356 = sbr.rel (0) target = $region53
    $region52: #{tpu_custom_call.1} parent=1 // pred_region
      %4358 = dma.done [#allocation4], 2048
    $region53: #{tpu_custom_call.1} parent=1 // pred_fallthru
      _
    // Predicated region
    $region54: #{tpu_custom_call.1} parent=1 // pred_check
      _
    $region55: #{tpu_custom_call.1} parent=1 // pred_check_branch
      %4360 = sbr.rel (0) target = $region57
    $region56: #{tpu_custom_call.1} parent=1 // pred_region
      %4362 = dma.done [#allocation10], 2048
    $region57: #{tpu_custom_call.1} parent=1 // pred_fallthru
      _
    %4363 = vsyncpa [#allocation3], 1
    %4364 = vsyncpa [#allocation6], 1
    %4365 = vsyncpa [#allocation4], 1
    %4366 = vsyncpa [#allocation10], 1

</llo_original>
